<compile_context>
chip_gen: v7x
topology: tpu7x:2x2x1
jax: 0.10.0
libtpu: 0.0.40
codegen_flags: <defaults>
</compile_context>

<pallas_src>
import math
import functools

import jax
import jax.numpy as jnp
from jax.experimental import pallas as pl
from jax.experimental.pallas import tpu as pltpu

NUM_HEADS = 4
LN_EPS = 1e-6       # nn.LayerNorm eps used in the module
IN_EPS = 1e-5       # nn.InstanceNorm2d default eps

# MXU input dtype for all matmuls; accumulation is always f32 via
# preferred_element_type.  bf16 halves weight-slab DMA/VMEM and is the MXU's native
# input format on v5e/v6e/v7x.  Set to jnp.float32 for ~1e-5 parity with the f32
# reference (at the cost of extra MXU passes / DMA bytes).
MATMUL_DTYPE = jnp.bfloat16


# ----------------------------- small math helpers -----------------------------

def _layernorm(x, w, b, eps=LN_EPS):
    mu = jnp.mean(x, axis=-1, keepdims=True)
    var = jnp.mean((x - mu) ** 2, axis=-1, keepdims=True)
    return (x - mu) * jax.lax.rsqrt(var + eps) * w + b


def _mm(a, b):
    """(M,K)@(K,N) -> f32 (bf16/ f32 MXU inputs, f32 accumulation)."""
    return jax.lax.dot_general(
        a.astype(MATMUL_DTYPE), b.astype(MATMUL_DTYPE),
        (((1,), (0,)), ((), ())), preferred_element_type=jnp.float32)


def _mm_tn(a, b):
    """(N,K),(N,M) -> (K,M) = a^T @ b (contract over tokens, no explicit transpose)."""
    return jax.lax.dot_general(
        a.astype(MATMUL_DTYPE), b.astype(MATMUL_DTYPE),
        (((0,), (0,)), ((), ())), preferred_element_type=jnp.float32)


def _mm_nt(a, b):
    """(N,K),(M,K) -> (N,M) = a @ b^T (contract over last dims)."""
    return jax.lax.dot_general(
        a.astype(MATMUL_DTYPE), b.astype(MATMUL_DTYPE),
        (((1,), (1,)), ((), ())), preferred_element_type=jnp.float32)


def _erf(x):
    """Abramowitz-Stegun 7.1.26 erf, |err| < 1.5e-7; only exp/mul/add/select ops."""
    a1, a2, a3, a4, a5 = 0.254829592, -0.284496736, 1.421413741, -1.453152027, 1.061405429
    p = 0.3275911
    ax = jnp.abs(x)
    t = 1.0 / (1.0 + p * ax)
    poly = ((((a5 * t + a4) * t + a3) * t + a2) * t + a1) * t
    y = 1.0 - poly * jnp.exp(-ax * ax)
    return jnp.where(x >= 0, y, -y)


def _gelu_exact(x):
    """nn.GELU() default (erf-based), matching the torch module."""
    return x * 0.5 * (1.0 + _erf(x * (1.0 / math.sqrt(2.0))))


# ---------------------------------- kernel ------------------------------------

def encoder_kernel(x_ref, vecs_ref, qkv_ref, big_ref, out_ref, wts_ref, *, num_layers):
    """Fused Encoder_single forward for one batch element.

    x_ref    : (N, C)  token x channel activations for this batch element (f32)
    vecs_ref : (8*L + 2, C) f32 packed vectors, per layer rows:
               [attn_norm_w, attn_norm_b, attn_normx_w, attn_normx_b,
                ffn_norm_w, ffn_norm_b, mlp_b1, mlp_b2], then encoder_norm [w, b]
    qkv_ref  : (L, H+2, hd, hd) bf16: per layer [Wq_0..Wq_3, Wk(shared), Wv(shared)]
               in x@W orientation
    big_ref  : (L, 3, C, C) bf16: per layer [Wo_perm, W1, W2] in x@W orientation;
               torch's permute(0,3,2,1).view interleave folded into Wo_perm row order
    out_ref  : (N, C)  final encoder output for this batch element (f32)
    wts_ref  : (1, L, hd, hd) vis attention weights (probs.mean over heads)
    """
    N, C = x_ref.shape
    H = NUM_HEADS
    hd = C // H
    inv_sqrt_kv = 1.0 / math.sqrt(C)     # KV_size == C
    inv_h = 1.0 / H

    x = x_ref[...]                        # (N, C) f32 residual stream

    # Static unroll: num_layers is small (2).  Convert to lax.fori_loop with dynamic
    # qkv_ref[l]/vecs_ref[pl.ds(8*l, 8)] indexing if L or C grow (vreg pressure).
    for l in range(num_layers):
        pv = vecs_ref[pl.ds(8 * l, 8), :]          # (8, C) vector params of layer l
        wk = qkv_ref[l, H]                          # (hd, hd) shared key[0]
        wv = qkv_ref[l, H + 1]                      # (hd, hd) shared value[0]
        wo = big_ref[l, 0]                          # (C, C) permuted out-proj
        w1 = big_ref[l, 1]                          # (C, C) Mlp.fc1
        w2 = big_ref[l, 2]                          # (C, C) Mlp.fc2

        # ---- channel attention branch (residual) -----------------------------
        cx = _layernorm(x, pv[0:1], pv[1:2])        # attn_norm(emb1)
        xall = _layernorm(x, pv[2:3], pv[3:4])      # attn_normx(emb_all); emb_all==emb1

        o1 = jnp.zeros((N, C), jnp.float32)
        p_mean = jnp.zeros((hd, hd), jnp.float32)

        for h in range(H):                          # per-head 2-D lane slices
            lo = h * hd
            cx_h = cx[:, lo:lo + hd]                # (N, hd)
            xa_h = xall[:, lo:lo + hd]              # (N, hd)

            q_h = _mm(cx_h, qkv_ref[l, h])          # (N, hd)  query[h]
            k_h = _mm(xa_h, wk)                     # (N, hd)  key[0] shared (as in torch)
            v_h = _mm(xa_h, wv)                     # (N, hd)  value[0] shared

            # attention_scores = Q^T K over tokens -> (hd, hd)
            s = _mm_tn(q_h, k_h) * inv_sqrt_kv

            # psi = InstanceNorm2d over the (hd, hd) map, no affine
            mu = jnp.mean(s, keepdims=True)
            var = jnp.mean((s - mu) ** 2, keepdims=True)
            s = (s - mu) * jax.lax.rsqrt(var + IN_EPS)

            # Softmax(dim=-1), exact divide; logits are ~N(0,1) -> no max-subtract.
            e = jnp.exp(s)
            p = e / jnp.sum(e, axis=-1, keepdims=True)
            p_mean = p_mean + p * inv_h             # vis weights (mean over heads)

            # context[n, c] = sum_d p[c, d] * v[n, d]; attn_dropout = identity
            ctx_h = _mm_nt(v_h, p)                  # (N, hd)

            # out projection: accumulate against the permuted 8-aligned row slice of
            # Wo (this folds torch's (c*H+h) channel interleave; proj_dropout = id).
            o1 = o1 + _mm(ctx_h, wo[lo:lo + hd, :])

        wts_ref[0, l] = p_mean                      # (hd, hd) vis weights, layer l
        x = x + o1                                  # residual

        # ---- FFN branch (residual) --------------------------------------------
        xn = _layernorm(x, pv[4:5], pv[5:6])
        h1 = _gelu_exact(_mm(xn, w1) + pv[6:7])     # exact (erf) GELU; dropout = id
        x = x + _mm(h1, w2) + pv[7:8]

    # final encoder LayerNorm
    enc = vecs_ref[pl.ds(8 * num_layers, 2), :]     # (2, C): [w, b]
    out_ref[...] = _layernorm(x, enc[0:1], enc[1:2])


@functools.partial(jax.jit, static_argnames=("num_layers",))
def run_encoder(emb, vecs, qkv_mats, big_mats, *, num_layers):
    B, N, C = emb.shape
    H = NUM_HEADS
    hd = C // H
    L = num_layers
    x_flat = emb.reshape(B * N, C).astype(jnp.float32)

    # grid=(B,) "parallel": both TensorCores split the batch on v7x; on single-TC
    # chips this costs one extra ~0.35us grid step (negligible vs a single launch).
    # Weight slabs use constant index_maps, so they are DMA'd once and stay resident.
    out_flat, wts = pl.pallas_call(
        functools.partial(encoder_kernel, num_layers=L),
        grid=(B,),
        in_specs=[
            pl.BlockSpec((N, C), lambda b: (b, 0)),              # per-batch activations
            pl.BlockSpec((8 * L + 2, C), lambda b: (0, 0)),      # f32 vector slab
            pl.BlockSpec((L, H + 2, hd, hd), lambda b: (0, 0, 0, 0)),  # bf16 Q/K/V weights
            pl.BlockSpec((L, 3, C, C), lambda b: (0, 0, 0, 0)),  # bf16 Wo/W1/W2 slab
        ],
        out_specs=(
            pl.BlockSpec((N, C), lambda b: (b, 0)),
            pl.BlockSpec((1, L, hd, hd), lambda b: (b, 0, 0, 0)),
        ),
        out_shape=(
            jax.ShapeDtypeStruct((B * N, C), jnp.float32),
            jax.ShapeDtypeStruct((B, L, hd, hd), jnp.float32),
        ),
        compiler_params=pltpu.CompilerParams(
            dimension_semantics=("parallel",)),
    )(x_flat, vecs, qkv_mats, big_mats)

    out = out_flat.reshape(B, N, C)
    attn_weights = [wts[:, l] for l in range(L)]                  # (B, hd, hd) per layer
    return out, attn_weights


# ---------------------------- parameter handling ------------------------------

def pack_params(layers, enc_norm, C):
    """Pack per-layer params into one f32 vector slab and two bf16 matrix slabs."""
    H = NUM_HEADS
    hd = C // H
    # torch flat channel index (c*H + h) <- our head-major column block (h*hd + c)
    perm = jnp.array([c * H + h for h in range(H) for c in range(hd)], jnp.int32)

    vec_rows, qkv_stacks, big_stacks = [], [], []
    for p in layers:
        vec_rows += [p['attn_norm_w'], p['attn_norm_b'],
                     p['attn_normx_w'], p['attn_normx_b'],
                     p['ffn_norm_w'], p['ffn_norm_b'],
                     p['b1'], p['b2']]
        qkv_stacks.append(jnp.concatenate(
            [p['wq'], p['wk'][None], p['wv'][None]], axis=0))     # (H+2, hd, hd)
        big_stacks.append(jnp.stack([p['wo'][perm, :], p['w1'], p['w2']]))  # (3, C, C)
    vec_rows += [enc_norm['w'], enc_norm['b']]

    vecs = jnp.concatenate([v.reshape(1, C) for v in vec_rows], axis=0)   # (8L+2, C) f32
    qkv_mats = jnp.stack(qkv_stacks).astype(MATMUL_DTYPE)                 # (L, H+2, hd, hd)
    big_mats = jnp.stack(big_stacks).astype(MATMUL_DTYPE)                 # (L, 3, C, C)
    return vecs, qkv_mats, big_mats


def init_params(key, C, num_layers):
    """Deterministic synthetic parameters matching the module's shapes (x@W orientation)."""
    hd = C // NUM_HEADS
    layers = []
    for _ in range(num_layers):
        key, *ks = jax.random.split(key, 15)
        layers.append(dict(
            attn_norm_w=1.0 + 0.1 * jax.random.normal(ks[8], (1, C), jnp.float32),
            attn_norm_b=0.1 * jax.random.normal(ks[9], (1, C), jnp.float32),
            attn_normx_w=1.0 + 0.1 * jax.random.normal(ks[10], (1, C), jnp.float32),
            attn_normx_b=0.1 * jax.random.normal(ks[11], (1, C), jnp.float32),
            ffn_norm_w=1.0 + 0.1 * jax.random.normal(ks[12], (1, C), jnp.float32),
            ffn_norm_b=0.1 * jax.random.normal(ks[13], (1, C), jnp.float32),
            wq=jax.random.normal(ks[0], (NUM_HEADS, hd, hd), jnp.float32) * 0.05,  # query[h]
            wk=jax.random.normal(ks[1], (hd, hd), jnp.float32) * 0.05,             # key[0]
            wv=jax.random.normal(ks[2], (hd, hd), jnp.float32) * 0.05,             # value[0]
            wo=jax.random.normal(ks[3], (C, C), jnp.float32) * 0.05,               # out proj
            w1=jax.random.normal(ks[4], (C, C), jnp.float32) * 0.05,               # Mlp.fc1
            b1=jax.random.normal(ks[5], (1, C), jnp.float32) * 1e-6,
            w2=jax.random.normal(ks[6], (C, C), jnp.float32) * 0.05,               # Mlp.fc2
            b2=jax.random.normal(ks[7], (1, C), jnp.float32) * 1e-6,
        ))
    enc = dict(w=jnp.ones((1, C), jnp.float32), b=jnp.zeros((1, C), jnp.float32))
    return layers, enc


# ------------------------- pure-JAX reference (torch-faithful, f32) ------------

def reference_encoder(emb, layers, enc_norm):
    H = NUM_HEADS
    B, N, C = emb.shape
    hd = C // H
    with jax.default_matmul_precision("float32"):
        x = emb
        wts_all = []
        for p in layers:
            cx = _layernorm(x, p['attn_norm_w'], p['attn_norm_b'])
            xall = _layernorm(x, p['attn_normx_w'], p['attn_normx_b'])
            Q = jnp.stack([cx[:, :, h * hd:(h + 1) * hd] @ p['wq'][h] for h in range(H)], axis=1)
            K = jnp.stack([xall[:, :, h * hd:(h + 1) * hd] @ p['wk'] for h in range(H)], axis=1)
            V = jnp.stack([xall[:, :, h * hd:(h + 1) * hd] @ p['wv'] for h in range(H)], axis=1)
            S = jnp.einsum('bhnc,bhnd->bhcd', Q, K) / math.sqrt(C)
            mu = S.mean(axis=(2, 3), keepdims=True)
            var = ((S - mu) ** 2).mean(axis=(2, 3), keepdims=True)
            S = (S - mu) / jnp.sqrt(var + IN_EPS)
            P = jax.nn.softmax(S, axis=-1)
            wts_all.append(P.mean(axis=1))
            ctx = jnp.einsum('bhcd,bhnd->bnch', P, V).reshape(B, N, C)   # permute(0,3,2,1).view
            x = x + ctx @ p['wo']
            xn = _layernorm(x, p['ffn_norm_w'], p['ffn_norm_b'])
            h1 = jax.nn.gelu(xn @ p['w1'] + p['b1'], approximate=False)
            x = x + (h1 @ p['w2'] + p['b2'])
        return _layernorm(x, enc_norm['w'], enc_norm['b']), wts_all


if __name__ == "__main__":
    B, N, C = 2, 8, 32          # batch, tokens, channels (channel_num[4] = KV_sizec = 32)
    NUM_LAYERS = 2

    key = jax.random.PRNGKey(0)
    key, xk = jax.random.split(key)
    emb1 = jax.random.normal(xk, (B, N, C), jnp.float32)

    layer_params, enc_norm = init_params(key, C, NUM_LAYERS)
    vecs, qkv_mats, big_mats = pack_params(layer_params, enc_norm, C)

    out, attn_weights = run_encoder(emb1, vecs, qkv_mats, big_mats, num_layers=NUM_LAYERS)
    jax.block_until_ready(out)
    for w in attn_weights:
        jax.block_until_ready(w)

    # sanity check against a torch-faithful pure-f32 JAX reference; tolerance reflects
    # bf16 MXU inputs (weight slabs stored in bf16).  With MATMUL_DTYPE=float32 this
    # matches to ~1e-5.
    ref_out, ref_wts = reference_encoder(emb1, layer_params, enc_norm)
    assert bool(jnp.allclose(out, ref_out, rtol=2e-2, atol=2e-2)), "output mismatch"
    for l in range(NUM_LAYERS):
        assert bool(jnp.allclose(attn_weights[l], ref_wts[l], rtol=2e-2, atol=2e-2)), \
            f"attn weights mismatch at layer {l}"

    print("KERNEL_OK")
</pallas_src>

<mosaic_0001>
module attributes {stable_mosaic.version = 11 : i64} {
  func.func @encoder_kernel(%arg0: i32, %arg1: memref<8x32xf32, #tpu.memory_space<vmem>>, %arg2: memref<18x32xf32, #tpu.memory_space<vmem>>, %arg3: memref<2x6x8x8xbf16, #tpu.memory_space<vmem>>, %arg4: memref<2x3x32x32xbf16, #tpu.memory_space<vmem>>, %arg5: memref<8x32xf32, #tpu.memory_space<vmem>>, %arg6: memref<1x2x8x8xf32, #tpu.memory_space<vmem>>) attributes {dimension_semantics = [#tpu.dimension_semantics<parallel>], iteration_bounds = array<i64: 2>, scalar_prefetch = 0 : i64, scratch_operands = 0 : i64, tpu.core_type = #tpu.core_type<tc>, window_params = [{transform_indices = @transform_0, window_bounds = array<i64: 8, 32>}, {pipeline_mode = #tpu.pipeline_mode<synchronous>, transform_indices = @transform_1, window_bounds = array<i64: 18, 32>}, {pipeline_mode = #tpu.pipeline_mode<synchronous>, transform_indices = @transform_2, window_bounds = array<i64: 2, 6, 8, 8>}, {pipeline_mode = #tpu.pipeline_mode<synchronous>, transform_indices = @transform_3, window_bounds = array<i64: 2, 3, 32, 32>}, {transform_indices = @transform_4, window_bounds = array<i64: 8, 32>}, {transform_indices = @transform_5, window_bounds = array<i64: 1, 2, 8, 8>}]} {
    %c0 = arith.constant 0 : index
    %c0_0 = arith.constant 0 : index
    %0 = vector.load %arg1[%c0, %c0_0] : memref<8x32xf32, #tpu.memory_space<vmem>>, vector<8x32xf32>
    %c0_1 = arith.constant 0 : index
    %c0_2 = arith.constant 0 : index
    %1 = vector.load %arg2[%c0_1, %c0_2] : memref<18x32xf32, #tpu.memory_space<vmem>>, vector<8x32xf32>
    %c0_3 = arith.constant 0 : index
    %c4 = arith.constant 4 : index
    %c0_4 = arith.constant 0 : index
    %c0_5 = arith.constant 0 : index
    %2 = vector.load %arg3[%c0_3, %c4, %c0_4, %c0_5] : memref<2x6x8x8xbf16, #tpu.memory_space<vmem>>, vector<1x1x8x8xbf16>
    %3 = vector.shape_cast %2 : vector<1x1x8x8xbf16> to vector<8x8xbf16>
    %c0_6 = arith.constant 0 : index
    %c5 = arith.constant 5 : index
    %c0_7 = arith.constant 0 : index
    %c0_8 = arith.constant 0 : index
    %4 = vector.load %arg3[%c0_6, %c5, %c0_7, %c0_8] : memref<2x6x8x8xbf16, #tpu.memory_space<vmem>>, vector<1x1x8x8xbf16>
    %5 = vector.shape_cast %4 : vector<1x1x8x8xbf16> to vector<8x8xbf16>
    %c0_9 = arith.constant 0 : index
    %c0_10 = arith.constant 0 : index
    %c0_11 = arith.constant 0 : index
    %c0_12 = arith.constant 0 : index
    %6 = vector.load %arg4[%c0_9, %c0_10, %c0_11, %c0_12] : memref<2x3x32x32xbf16, #tpu.memory_space<vmem>>, vector<1x1x32x32xbf16>
    %7 = vector.shape_cast %6 : vector<1x1x32x32xbf16> to vector<32x32xbf16>
    %c0_13 = arith.constant 0 : index
    %c1 = arith.constant 1 : index
    %c0_14 = arith.constant 0 : index
    %c0_15 = arith.constant 0 : index
    %8 = vector.load %arg4[%c0_13, %c1, %c0_14, %c0_15] : memref<2x3x32x32xbf16, #tpu.memory_space<vmem>>, vector<1x1x32x32xbf16>
    %9 = vector.shape_cast %8 : vector<1x1x32x32xbf16> to vector<32x32xbf16>
    %c0_16 = arith.constant 0 : index
    %c2 = arith.constant 2 : index
    %c0_17 = arith.constant 0 : index
    %c0_18 = arith.constant 0 : index
    %10 = vector.load %arg4[%c0_16, %c2, %c0_17, %c0_18] : memref<2x3x32x32xbf16, #tpu.memory_space<vmem>>, vector<1x1x32x32xbf16>
    %11 = vector.shape_cast %10 : vector<1x1x32x32xbf16> to vector<32x32xbf16>
    %12 = vector.extract_strided_slice %1 {offsets = [0, 0], sizes = [1, 32], strides = [1, 1]} : vector<8x32xf32> to vector<1x32xf32>
    %13 = vector.extract_strided_slice %1 {offsets = [1, 0], sizes = [1, 32], strides = [1, 1]} : vector<8x32xf32> to vector<1x32xf32>
    %cst = arith.constant dense<0.000000e+00> : vector<8xf32>
    %14 = vector.multi_reduction <add>, %0, %cst [1] : vector<8x32xf32> to vector<8xf32>
    %15 = vector.shape_cast %14 : vector<8xf32> to vector<8x1xf32>
    %cst_19 = arith.constant 3.200000e+01 : f32
    %16 = vector.broadcast %cst_19 : f32 to vector<8x1xf32>
    %17 = arith.divf %15, %16 : vector<8x1xf32>
    %18 = vector.broadcast %17 : vector<8x1xf32> to vector<8x32xf32>
    %19 = arith.subf %0, %18 : vector<8x32xf32>
    %20 = arith.mulf %19, %19 : vector<8x32xf32>
    %cst_20 = arith.constant dense<0.000000e+00> : vector<8xf32>
    %21 = vector.multi_reduction <add>, %20, %cst_20 [1] : vector<8x32xf32> to vector<8xf32>
    %22 = vector.shape_cast %21 : vector<8xf32> to vector<8x1xf32>
    %cst_21 = arith.constant 3.200000e+01 : f32
    %23 = vector.broadcast %cst_21 : f32 to vector<8x1xf32>
    %24 = arith.divf %22, %23 : vector<8x1xf32>
    %25 = vector.broadcast %17 : vector<8x1xf32> to vector<8x32xf32>
    %26 = arith.subf %0, %25 : vector<8x32xf32>
    %cst_22 = arith.constant 9.99999997E-7 : f32
    %27 = vector.broadcast %cst_22 : f32 to vector<8x1xf32>
    %28 = arith.addf %24, %27 : vector<8x1xf32>
    %29 = math.rsqrt %28 : vector<8x1xf32>
    %30 = vector.broadcast %29 : vector<8x1xf32> to vector<8x32xf32>
    %31 = arith.mulf %26, %30 : vector<8x32xf32>
    %32 = vector.broadcast %12 : vector<1x32xf32> to vector<8x32xf32>
    %33 = arith.mulf %31, %32 : vector<8x32xf32>
    %34 = vector.broadcast %13 : vector<1x32xf32> to vector<8x32xf32>
    %35 = arith.addf %33, %34 : vector<8x32xf32>
    %36 = vector.extract_strided_slice %1 {offsets = [2, 0], sizes = [1, 32], strides = [1, 1]} : vector<8x32xf32> to vector<1x32xf32>
    %37 = vector.extract_strided_slice %1 {offsets = [3, 0], sizes = [1, 32], strides = [1, 1]} : vector<8x32xf32> to vector<1x32xf32>
    %cst_23 = arith.constant dense<0.000000e+00> : vector<8xf32>
    %38 = vector.multi_reduction <add>, %0, %cst_23 [1] : vector<8x32xf32> to vector<8xf32>
    %39 = vector.shape_cast %38 : vector<8xf32> to vector<8x1xf32>
    %cst_24 = arith.constant 3.200000e+01 : f32
    %40 = vector.broadcast %cst_24 : f32 to vector<8x1xf32>
    %41 = arith.divf %39, %40 : vector<8x1xf32>
    %42 = vector.broadcast %41 : vector<8x1xf32> to vector<8x32xf32>
    %43 = arith.subf %0, %42 : vector<8x32xf32>
    %44 = arith.mulf %43, %43 : vector<8x32xf32>
    %cst_25 = arith.constant dense<0.000000e+00> : vector<8xf32>
    %45 = vector.multi_reduction <add>, %44, %cst_25 [1] : vector<8x32xf32> to vector<8xf32>
    %46 = vector.shape_cast %45 : vector<8xf32> to vector<8x1xf32>
    %cst_26 = arith.constant 3.200000e+01 : f32
    %47 = vector.broadcast %cst_26 : f32 to vector<8x1xf32>
    %48 = arith.divf %46, %47 : vector<8x1xf32>
    %49 = vector.broadcast %41 : vector<8x1xf32> to vector<8x32xf32>
    %50 = arith.subf %0, %49 : vector<8x32xf32>
    %cst_27 = arith.constant 9.99999997E-7 : f32
    %51 = vector.broadcast %cst_27 : f32 to vector<8x1xf32>
    %52 = arith.addf %48, %51 : vector<8x1xf32>
    %53 = math.rsqrt %52 : vector<8x1xf32>
    %54 = vector.broadcast %53 : vector<8x1xf32> to vector<8x32xf32>
    %55 = arith.mulf %50, %54 : vector<8x32xf32>
    %56 = vector.broadcast %36 : vector<1x32xf32> to vector<8x32xf32>
    %57 = arith.mulf %55, %56 : vector<8x32xf32>
    %58 = vector.broadcast %37 : vector<1x32xf32> to vector<8x32xf32>
    %59 = arith.addf %57, %58 : vector<8x32xf32>
    %cst_28 = arith.constant 0.000000e+00 : f32
    %60 = vector.broadcast %cst_28 : f32 to vector<8x32xf32>
    %cst_29 = arith.constant 0.000000e+00 : f32
    %61 = vector.broadcast %cst_29 : f32 to vector<8x8xf32>
    %62 = vector.extract_strided_slice %35 {offsets = [0, 0], sizes = [8, 8], strides = [1, 1]} : vector<8x32xf32> to vector<8x8xf32>
    %63 = vector.extract_strided_slice %59 {offsets = [0, 0], sizes = [8, 8], strides = [1, 1]} : vector<8x32xf32> to vector<8x8xf32>
    %c0_30 = arith.constant 0 : index
    %c0_31 = arith.constant 0 : index
    %c0_32 = arith.constant 0 : index
    %c0_33 = arith.constant 0 : index
    %64 = vector.load %arg3[%c0_30, %c0_31, %c0_32, %c0_33] : memref<2x6x8x8xbf16, #tpu.memory_space<vmem>>, vector<1x1x8x8xbf16>
    %65 = vector.shape_cast %64 : vector<1x1x8x8xbf16> to vector<8x8xbf16>
    %66 = arith.truncf %62 : vector<8x8xf32> to vector<8x8xbf16>
    %cst_34 = arith.constant dense<0.000000e+00> : vector<8x8xf32>
    %67 = tpu.matmul %66, %65, %cst_34 {dimension_numbers = #tpu.dot_dimension_numbers<[1], [0], [0], [1], [0, 0, 1, 1], [], []>} : vector<8x8xbf16>, vector<8x8xbf16>, vector<8x8xf32> -> vector<8x8xf32>
    %68 = arith.truncf %63 : vector<8x8xf32> to vector<8x8xbf16>
    %cst_35 = arith.constant dense<0.000000e+00> : vector<8x8xf32>
    %69 = tpu.matmul %68, %3, %cst_35 {dimension_numbers = #tpu.dot_dimension_numbers<[1], [0], [0], [1], [0, 0, 1, 1], [], []>} : vector<8x8xbf16>, vector<8x8xbf16>, vector<8x8xf32> -> vector<8x8xf32>
    %70 = arith.truncf %63 : vector<8x8xf32> to vector<8x8xbf16>
    %cst_36 = arith.constant dense<0.000000e+00> : vector<8x8xf32>
    %71 = tpu.matmul %70, %5, %cst_36 {dimension_numbers = #tpu.dot_dimension_numbers<[1], [0], [0], [1], [0, 0, 1, 1], [], []>} : vector<8x8xbf16>, vector<8x8xbf16>, vector<8x8xf32> -> vector<8x8xf32>
    %72 = arith.truncf %67 : vector<8x8xf32> to vector<8x8xbf16>
    %73 = arith.truncf %69 : vector<8x8xf32> to vector<8x8xbf16>
    %cst_37 = arith.constant dense<0.000000e+00> : vector<8x8xf32>
    %74 = tpu.matmul %72, %73, %cst_37 {dimension_numbers = #tpu.dot_dimension_numbers<[0], [0], [1], [1], [0, 1, 1, 1], [], []>} : vector<8x8xbf16>, vector<8x8xbf16>, vector<8x8xf32> -> vector<8x8xf32>
    %cst_38 = arith.constant 0.176776692 : f32
    %75 = vector.broadcast %cst_38 : f32 to vector<8x8xf32>
    %76 = arith.mulf %74, %75 : vector<8x8xf32>
    %77 = vector.shape_cast %76 : vector<8x8xf32> to vector<1x8x8xf32>
    %cst_39 = arith.constant dense<0.000000e+00> : vector<1xf32>
    %78 = vector.multi_reduction <add>, %77, %cst_39 [1, 2] : vector<1x8x8xf32> to vector<1xf32>
    %79 = vector.shape_cast %78 : vector<1xf32> to vector<1x1x1xf32>
    %80 = vector.extract %79[0, 0, 0] : f32 from vector<1x1x1xf32>
    %81 = vector.broadcast %80 : f32 to vector<1x1xf32>
    %cst_40 = arith.constant 6.400000e+01 : f32
    %82 = vector.broadcast %cst_40 : f32 to vector<1x1xf32>
    %83 = arith.divf %81, %82 : vector<1x1xf32>
    %84 = vector.broadcast %83 : vector<1x1xf32> to vector<8x8xf32>
    %85 = arith.subf %76, %84 : vector<8x8xf32>
    %86 = arith.mulf %85, %85 : vector<8x8xf32>
    %87 = vector.shape_cast %86 : vector<8x8xf32> to vector<1x8x8xf32>
    %cst_41 = arith.constant dense<0.000000e+00> : vector<1xf32>
    %88 = vector.multi_reduction <add>, %87, %cst_41 [1, 2] : vector<1x8x8xf32> to vector<1xf32>
    %89 = vector.shape_cast %88 : vector<1xf32> to vector<1x1x1xf32>
    %90 = vector.extract %89[0, 0, 0] : f32 from vector<1x1x1xf32>
    %91 = vector.broadcast %90 : f32 to vector<1x1xf32>
    %cst_42 = arith.constant 6.400000e+01 : f32
    %92 = vector.broadcast %cst_42 : f32 to vector<1x1xf32>
    %93 = arith.divf %91, %92 : vector<1x1xf32>
    %94 = vector.broadcast %83 : vector<1x1xf32> to vector<8x8xf32>
    %95 = arith.subf %76, %94 : vector<8x8xf32>
    %cst_43 = arith.constant 9.99999974E-6 : f32
    %96 = vector.broadcast %cst_43 : f32 to vector<1x1xf32>
    %97 = arith.addf %93, %96 : vector<1x1xf32>
    %98 = math.rsqrt %97 : vector<1x1xf32>
    %99 = vector.broadcast %98 : vector<1x1xf32> to vector<8x8xf32>
    %100 = arith.mulf %95, %99 : vector<8x8xf32>
    %101 = math.exp %100 : vector<8x8xf32>
    %cst_44 = arith.constant dense<0.000000e+00> : vector<8xf32>
    %102 = vector.multi_reduction <add>, %101, %cst_44 [1] : vector<8x8xf32> to vector<8xf32>
    %103 = vector.shape_cast %102 : vector<8xf32> to vector<8x1xf32>
    %104 = vector.broadcast %103 : vector<8x1xf32> to vector<8x8xf32>
    %105 = arith.divf %101, %104 : vector<8x8xf32>
    %cst_45 = arith.constant 2.500000e-01 : f32
    %106 = vector.broadcast %cst_45 : f32 to vector<8x8xf32>
    %107 = arith.mulf %105, %106 : vector<8x8xf32>
    %108 = arith.addf %61, %107 : vector<8x8xf32>
    %109 = arith.truncf %71 : vector<8x8xf32> to vector<8x8xbf16>
    %110 = arith.truncf %105 : vector<8x8xf32> to vector<8x8xbf16>
    %cst_46 = arith.constant dense<0.000000e+00> : vector<8x8xf32>
    %111 = tpu.matmul %109, %110, %cst_46 {dimension_numbers = #tpu.dot_dimension_numbers<[1], [1], [0], [0], [0, 0, 1, 0], [], []>} : vector<8x8xbf16>, vector<8x8xbf16>, vector<8x8xf32> -> vector<8x8xf32>
    %112 = vector.extract_strided_slice %7 {offsets = [0, 0], sizes = [8, 32], strides = [1, 1]} : vector<32x32xbf16> to vector<8x32xbf16>
    %113 = arith.truncf %111 : vector<8x8xf32> to vector<8x8xbf16>
    %cst_47 = arith.constant dense<0.000000e+00> : vector<8x32xf32>
    %114 = tpu.matmul %113, %112, %cst_47 {dimension_numbers = #tpu.dot_dimension_numbers<[1], [0], [0], [1], [0, 0, 1, 1], [], []>} : vector<8x8xbf16>, vector<8x32xbf16>, vector<8x32xf32> -> vector<8x32xf32>
    %115 = arith.addf %60, %114 : vector<8x32xf32>
    %116 = vector.extract_strided_slice %35 {offsets = [0, 8], sizes = [8, 8], strides = [1, 1]} : vector<8x32xf32> to vector<8x8xf32>
    %117 = vector.extract_strided_slice %59 {offsets = [0, 8], sizes = [8, 8], strides = [1, 1]} : vector<8x32xf32> to vector<8x8xf32>
    %c0_48 = arith.constant 0 : index
    %c1_49 = arith.constant 1 : index
    %c0_50 = arith.constant 0 : index
    %c0_51 = arith.constant 0 : index
    %118 = vector.load %arg3[%c0_48, %c1_49, %c0_50, %c0_51] : memref<2x6x8x8xbf16, #tpu.memory_space<vmem>>, vector<1x1x8x8xbf16>
    %119 = vector.shape_cast %118 : vector<1x1x8x8xbf16> to vector<8x8xbf16>
    %120 = arith.truncf %116 : vector<8x8xf32> to vector<8x8xbf16>
    %cst_52 = arith.constant dense<0.000000e+00> : vector<8x8xf32>
    %121 = tpu.matmul %120, %119, %cst_52 {dimension_numbers = #tpu.dot_dimension_numbers<[1], [0], [0], [1], [0, 0, 1, 1], [], []>} : vector<8x8xbf16>, vector<8x8xbf16>, vector<8x8xf32> -> vector<8x8xf32>
    %122 = arith.truncf %117 : vector<8x8xf32> to vector<8x8xbf16>
    %cst_53 = arith.constant dense<0.000000e+00> : vector<8x8xf32>
    %123 = tpu.matmul %122, %3, %cst_53 {dimension_numbers = #tpu.dot_dimension_numbers<[1], [0], [0], [1], [0, 0, 1, 1], [], []>} : vector<8x8xbf16>, vector<8x8xbf16>, vector<8x8xf32> -> vector<8x8xf32>
    %124 = arith.truncf %117 : vector<8x8xf32> to vector<8x8xbf16>
    %cst_54 = arith.constant dense<0.000000e+00> : vector<8x8xf32>
    %125 = tpu.matmul %124, %5, %cst_54 {dimension_numbers = #tpu.dot_dimension_numbers<[1], [0], [0], [1], [0, 0, 1, 1], [], []>} : vector<8x8xbf16>, vector<8x8xbf16>, vector<8x8xf32> -> vector<8x8xf32>
    %126 = arith.truncf %121 : vector<8x8xf32> to vector<8x8xbf16>
    %127 = arith.truncf %123 : vector<8x8xf32> to vector<8x8xbf16>
    %cst_55 = arith.constant dense<0.000000e+00> : vector<8x8xf32>
    %128 = tpu.matmul %126, %127, %cst_55 {dimension_numbers = #tpu.dot_dimension_numbers<[0], [0], [1], [1], [0, 1, 1, 1], [], []>} : vector<8x8xbf16>, vector<8x8xbf16>, vector<8x8xf32> -> vector<8x8xf32>
    %cst_56 = arith.constant 0.176776692 : f32
    %129 = vector.broadcast %cst_56 : f32 to vector<8x8xf32>
    %130 = arith.mulf %128, %129 : vector<8x8xf32>
    %131 = vector.shape_cast %130 : vector<8x8xf32> to vector<1x8x8xf32>
    %cst_57 = arith.constant dense<0.000000e+00> : vector<1xf32>
    %132 = vector.multi_reduction <add>, %131, %cst_57 [1, 2] : vector<1x8x8xf32> to vector<1xf32>
    %133 = vector.shape_cast %132 : vector<1xf32> to vector<1x1x1xf32>
    %134 = vector.extract %133[0, 0, 0] : f32 from vector<1x1x1xf32>
    %135 = vector.broadcast %134 : f32 to vector<1x1xf32>
    %cst_58 = arith.constant 6.400000e+01 : f32
    %136 = vector.broadcast %cst_58 : f32 to vector<1x1xf32>
    %137 = arith.divf %135, %136 : vector<1x1xf32>
    %138 = vector.broadcast %137 : vector<1x1xf32> to vector<8x8xf32>
    %139 = arith.subf %130, %138 : vector<8x8xf32>
    %140 = arith.mulf %139, %139 : vector<8x8xf32>
    %141 = vector.shape_cast %140 : vector<8x8xf32> to vector<1x8x8xf32>
    %cst_59 = arith.constant dense<0.000000e+00> : vector<1xf32>
    %142 = vector.multi_reduction <add>, %141, %cst_59 [1, 2] : vector<1x8x8xf32> to vector<1xf32>
    %143 = vector.shape_cast %142 : vector<1xf32> to vector<1x1x1xf32>
    %144 = vector.extract %143[0, 0, 0] : f32 from vector<1x1x1xf32>
    %145 = vector.broadcast %144 : f32 to vector<1x1xf32>
    %cst_60 = arith.constant 6.400000e+01 : f32
    %146 = vector.broadcast %cst_60 : f32 to vector<1x1xf32>
    %147 = arith.divf %145, %146 : vector<1x1xf32>
    %148 = vector.broadcast %137 : vector<1x1xf32> to vector<8x8xf32>
    %149 = arith.subf %130, %148 : vector<8x8xf32>
    %cst_61 = arith.constant 9.99999974E-6 : f32
    %150 = vector.broadcast %cst_61 : f32 to vector<1x1xf32>
    %151 = arith.addf %147, %150 : vector<1x1xf32>
    %152 = math.rsqrt %151 : vector<1x1xf32>
    %153 = vector.broadcast %152 : vector<1x1xf32> to vector<8x8xf32>
    %154 = arith.mulf %149, %153 : vector<8x8xf32>
    %155 = math.exp %154 : vector<8x8xf32>
    %cst_62 = arith.constant dense<0.000000e+00> : vector<8xf32>
    %156 = vector.multi_reduction <add>, %155, %cst_62 [1] : vector<8x8xf32> to vector<8xf32>
    %157 = vector.shape_cast %156 : vector<8xf32> to vector<8x1xf32>
    %158 = vector.broadcast %157 : vector<8x1xf32> to vector<8x8xf32>
    %159 = arith.divf %155, %158 : vector<8x8xf32>
    %cst_63 = arith.constant 2.500000e-01 : f32
    %160 = vector.broadcast %cst_63 : f32 to vector<8x8xf32>
    %161 = arith.mulf %159, %160 : vector<8x8xf32>
    %162 = arith.addf %108, %161 : vector<8x8xf32>
    %163 = arith.truncf %125 : vector<8x8xf32> to vector<8x8xbf16>
    %164 = arith.truncf %159 : vector<8x8xf32> to vector<8x8xbf16>
    %cst_64 = arith.constant dense<0.000000e+00> : vector<8x8xf32>
    %165 = tpu.matmul %163, %164, %cst_64 {dimension_numbers = #tpu.dot_dimension_numbers<[1], [1], [0], [0], [0, 0, 1, 0], [], []>} : vector<8x8xbf16>, vector<8x8xbf16>, vector<8x8xf32> -> vector<8x8xf32>
    %166 = vector.extract_strided_slice %7 {offsets = [8, 0], sizes = [8, 32], strides = [1, 1]} : vector<32x32xbf16> to vector<8x32xbf16>
    %167 = arith.truncf %165 : vector<8x8xf32> to vector<8x8xbf16>
    %cst_65 = arith.constant dense<0.000000e+00> : vector<8x32xf32>
    %168 = tpu.matmul %167, %166, %cst_65 {dimension_numbers = #tpu.dot_dimension_numbers<[1], [0], [0], [1], [0, 0, 1, 1], [], []>} : vector<8x8xbf16>, vector<8x32xbf16>, vector<8x32xf32> -> vector<8x32xf32>
    %169 = arith.addf %115, %168 : vector<8x32xf32>
    %170 = vector.extract_strided_slice %35 {offsets = [0, 16], sizes = [8, 8], strides = [1, 1]} : vector<8x32xf32> to vector<8x8xf32>
    %171 = vector.extract_strided_slice %59 {offsets = [0, 16], sizes = [8, 8], strides = [1, 1]} : vector<8x32xf32> to vector<8x8xf32>
    %c0_66 = arith.constant 0 : index
    %c2_67 = arith.constant 2 : index
    %c0_68 = arith.constant 0 : index
    %c0_69 = arith.constant 0 : index
    %172 = vector.load %arg3[%c0_66, %c2_67, %c0_68, %c0_69] : memref<2x6x8x8xbf16, #tpu.memory_space<vmem>>, vector<1x1x8x8xbf16>
    %173 = vector.shape_cast %172 : vector<1x1x8x8xbf16> to vector<8x8xbf16>
    %174 = arith.truncf %170 : vector<8x8xf32> to vector<8x8xbf16>
    %cst_70 = arith.constant dense<0.000000e+00> : vector<8x8xf32>
    %175 = tpu.matmul %174, %173, %cst_70 {dimension_numbers = #tpu.dot_dimension_numbers<[1], [0], [0], [1], [0, 0, 1, 1], [], []>} : vector<8x8xbf16>, vector<8x8xbf16>, vector<8x8xf32> -> vector<8x8xf32>
    %176 = arith.truncf %171 : vector<8x8xf32> to vector<8x8xbf16>
    %cst_71 = arith.constant dense<0.000000e+00> : vector<8x8xf32>
    %177 = tpu.matmul %176, %3, %cst_71 {dimension_numbers = #tpu.dot_dimension_numbers<[1], [0], [0], [1], [0, 0, 1, 1], [], []>} : vector<8x8xbf16>, vector<8x8xbf16>, vector<8x8xf32> -> vector<8x8xf32>
    %178 = arith.truncf %171 : vector<8x8xf32> to vector<8x8xbf16>
    %cst_72 = arith.constant dense<0.000000e+00> : vector<8x8xf32>
    %179 = tpu.matmul %178, %5, %cst_72 {dimension_numbers = #tpu.dot_dimension_numbers<[1], [0], [0], [1], [0, 0, 1, 1], [], []>} : vector<8x8xbf16>, vector<8x8xbf16>, vector<8x8xf32> -> vector<8x8xf32>
    %180 = arith.truncf %175 : vector<8x8xf32> to vector<8x8xbf16>
    %181 = arith.truncf %177 : vector<8x8xf32> to vector<8x8xbf16>
    %cst_73 = arith.constant dense<0.000000e+00> : vector<8x8xf32>
    %182 = tpu.matmul %180, %181, %cst_73 {dimension_numbers = #tpu.dot_dimension_numbers<[0], [0], [1], [1], [0, 1, 1, 1], [], []>} : vector<8x8xbf16>, vector<8x8xbf16>, vector<8x8xf32> -> vector<8x8xf32>
    %cst_74 = arith.constant 0.176776692 : f32
    %183 = vector.broadcast %cst_74 : f32 to vector<8x8xf32>
    %184 = arith.mulf %182, %183 : vector<8x8xf32>
    %185 = vector.shape_cast %184 : vector<8x8xf32> to vector<1x8x8xf32>
    %cst_75 = arith.constant dense<0.000000e+00> : vector<1xf32>
    %186 = vector.multi_reduction <add>, %185, %cst_75 [1, 2] : vector<1x8x8xf32> to vector<1xf32>
    %187 = vector.shape_cast %186 : vector<1xf32> to vector<1x1x1xf32>
    %188 = vector.extract %187[0, 0, 0] : f32 from vector<1x1x1xf32>
    %189 = vector.broadcast %188 : f32 to vector<1x1xf32>
    %cst_76 = arith.constant 6.400000e+01 : f32
    %190 = vector.broadcast %cst_76 : f32 to vector<1x1xf32>
    %191 = arith.divf %189, %190 : vector<1x1xf32>
    %192 = vector.broadcast %191 : vector<1x1xf32> to vector<8x8xf32>
    %193 = arith.subf %184, %192 : vector<8x8xf32>
    %194 = arith.mulf %193, %193 : vector<8x8xf32>
    %195 = vector.shape_cast %194 : vector<8x8xf32> to vector<1x8x8xf32>
    %cst_77 = arith.constant dense<0.000000e+00> : vector<1xf32>
    %196 = vector.multi_reduction <add>, %195, %cst_77 [1, 2] : vector<1x8x8xf32> to vector<1xf32>
    %197 = vector.shape_cast %196 : vector<1xf32> to vector<1x1x1xf32>
    %198 = vector.extract %197[0, 0, 0] : f32 from vector<1x1x1xf32>
    %199 = vector.broadcast %198 : f32 to vector<1x1xf32>
    %cst_78 = arith.constant 6.400000e+01 : f32
    %200 = vector.broadcast %cst_78 : f32 to vector<1x1xf32>
    %201 = arith.divf %199, %200 : vector<1x1xf32>
    %202 = vector.broadcast %191 : vector<1x1xf32> to vector<8x8xf32>
    %203 = arith.subf %184, %202 : vector<8x8xf32>
    %cst_79 = arith.constant 9.99999974E-6 : f32
    %204 = vector.broadcast %cst_79 : f32 to vector<1x1xf32>
    %205 = arith.addf %201, %204 : vector<1x1xf32>
    %206 = math.rsqrt %205 : vector<1x1xf32>
    %207 = vector.broadcast %206 : vector<1x1xf32> to vector<8x8xf32>
    %208 = arith.mulf %203, %207 : vector<8x8xf32>
    %209 = math.exp %208 : vector<8x8xf32>
    %cst_80 = arith.constant dense<0.000000e+00> : vector<8xf32>
    %210 = vector.multi_reduction <add>, %209, %cst_80 [1] : vector<8x8xf32> to vector<8xf32>
    %211 = vector.shape_cast %210 : vector<8xf32> to vector<8x1xf32>
    %212 = vector.broadcast %211 : vector<8x1xf32> to vector<8x8xf32>
    %213 = arith.divf %209, %212 : vector<8x8xf32>
    %cst_81 = arith.constant 2.500000e-01 : f32
    %214 = vector.broadcast %cst_81 : f32 to vector<8x8xf32>
    %215 = arith.mulf %213, %214 : vector<8x8xf32>
    %216 = arith.addf %162, %215 : vector<8x8xf32>
    %217 = arith.truncf %179 : vector<8x8xf32> to vector<8x8xbf16>
    %218 = arith.truncf %213 : vector<8x8xf32> to vector<8x8xbf16>
    %cst_82 = arith.constant dense<0.000000e+00> : vector<8x8xf32>
    %219 = tpu.matmul %217, %218, %cst_82 {dimension_numbers = #tpu.dot_dimension_numbers<[1], [1], [0], [0], [0, 0, 1, 0], [], []>} : vector<8x8xbf16>, vector<8x8xbf16>, vector<8x8xf32> -> vector<8x8xf32>
    %220 = vector.extract_strided_slice %7 {offsets = [16, 0], sizes = [8, 32], strides = [1, 1]} : vector<32x32xbf16> to vector<8x32xbf16>
    %221 = arith.truncf %219 : vector<8x8xf32> to vector<8x8xbf16>
    %cst_83 = arith.constant dense<0.000000e+00> : vector<8x32xf32>
    %222 = tpu.matmul %221, %220, %cst_83 {dimension_numbers = #tpu.dot_dimension_numbers<[1], [0], [0], [1], [0, 0, 1, 1], [], []>} : vector<8x8xbf16>, vector<8x32xbf16>, vector<8x32xf32> -> vector<8x32xf32>
    %223 = arith.addf %169, %222 : vector<8x32xf32>
    %224 = vector.extract_strided_slice %35 {offsets = [0, 24], sizes = [8, 8], strides = [1, 1]} : vector<8x32xf32> to vector<8x8xf32>
    %225 = vector.extract_strided_slice %59 {offsets = [0, 24], sizes = [8, 8], strides = [1, 1]} : vector<8x32xf32> to vector<8x8xf32>
    %c0_84 = arith.constant 0 : index
    %c3 = arith.constant 3 : index
    %c0_85 = arith.constant 0 : index
    %c0_86 = arith.constant 0 : index
    %226 = vector.load %arg3[%c0_84, %c3, %c0_85, %c0_86] : memref<2x6x8x8xbf16, #tpu.memory_space<vmem>>, vector<1x1x8x8xbf16>
    %227 = vector.shape_cast %226 : vector<1x1x8x8xbf16> to vector<8x8xbf16>
    %228 = arith.truncf %224 : vector<8x8xf32> to vector<8x8xbf16>
    %cst_87 = arith.constant dense<0.000000e+00> : vector<8x8xf32>
    %229 = tpu.matmul %228, %227, %cst_87 {dimension_numbers = #tpu.dot_dimension_numbers<[1], [0], [0], [1], [0, 0, 1, 1], [], []>} : vector<8x8xbf16>, vector<8x8xbf16>, vector<8x8xf32> -> vector<8x8xf32>
    %230 = arith.truncf %225 : vector<8x8xf32> to vector<8x8xbf16>
    %cst_88 = arith.constant dense<0.000000e+00> : vector<8x8xf32>
    %231 = tpu.matmul %230, %3, %cst_88 {dimension_numbers = #tpu.dot_dimension_numbers<[1], [0], [0], [1], [0, 0, 1, 1], [], []>} : vector<8x8xbf16>, vector<8x8xbf16>, vector<8x8xf32> -> vector<8x8xf32>
    %232 = arith.truncf %225 : vector<8x8xf32> to vector<8x8xbf16>
    %cst_89 = arith.constant dense<0.000000e+00> : vector<8x8xf32>
    %233 = tpu.matmul %232, %5, %cst_89 {dimension_numbers = #tpu.dot_dimension_numbers<[1], [0], [0], [1], [0, 0, 1, 1], [], []>} : vector<8x8xbf16>, vector<8x8xbf16>, vector<8x8xf32> -> vector<8x8xf32>
    %234 = arith.truncf %229 : vector<8x8xf32> to vector<8x8xbf16>
    %235 = arith.truncf %231 : vector<8x8xf32> to vector<8x8xbf16>
    %cst_90 = arith.constant dense<0.000000e+00> : vector<8x8xf32>
    %236 = tpu.matmul %234, %235, %cst_90 {dimension_numbers = #tpu.dot_dimension_numbers<[0], [0], [1], [1], [0, 1, 1, 1], [], []>} : vector<8x8xbf16>, vector<8x8xbf16>, vector<8x8xf32> -> vector<8x8xf32>
    %cst_91 = arith.constant 0.176776692 : f32
    %237 = vector.broadcast %cst_91 : f32 to vector<8x8xf32>
    %238 = arith.mulf %236, %237 : vector<8x8xf32>
    %239 = vector.shape_cast %238 : vector<8x8xf32> to vector<1x8x8xf32>
    %cst_92 = arith.constant dense<0.000000e+00> : vector<1xf32>
    %240 = vector.multi_reduction <add>, %239, %cst_92 [1, 2] : vector<1x8x8xf32> to vector<1xf32>
    %241 = vector.shape_cast %240 : vector<1xf32> to vector<1x1x1xf32>
    %242 = vector.extract %241[0, 0, 0] : f32 from vector<1x1x1xf32>
    %243 = vector.broadcast %242 : f32 to vector<1x1xf32>
    %cst_93 = arith.constant 6.400000e+01 : f32
    %244 = vector.broadcast %cst_93 : f32 to vector<1x1xf32>
    %245 = arith.divf %243, %244 : vector<1x1xf32>
    %246 = vector.broadcast %245 : vector<1x1xf32> to vector<8x8xf32>
    %247 = arith.subf %238, %246 : vector<8x8xf32>
    %248 = arith.mulf %247, %247 : vector<8x8xf32>
    %249 = vector.shape_cast %248 : vector<8x8xf32> to vector<1x8x8xf32>
    %cst_94 = arith.constant dense<0.000000e+00> : vector<1xf32>
    %250 = vector.multi_reduction <add>, %249, %cst_94 [1, 2] : vector<1x8x8xf32> to vector<1xf32>
    %251 = vector.shape_cast %250 : vector<1xf32> to vector<1x1x1xf32>
    %252 = vector.extract %251[0, 0, 0] : f32 from vector<1x1x1xf32>
    %253 = vector.broadcast %252 : f32 to vector<1x1xf32>
    %cst_95 = arith.constant 6.400000e+01 : f32
    %254 = vector.broadcast %cst_95 : f32 to vector<1x1xf32>
    %255 = arith.divf %253, %254 : vector<1x1xf32>
    %256 = vector.broadcast %245 : vector<1x1xf32> to vector<8x8xf32>
    %257 = arith.subf %238, %256 : vector<8x8xf32>
    %cst_96 = arith.constant 9.99999974E-6 : f32
    %258 = vector.broadcast %cst_96 : f32 to vector<1x1xf32>
    %259 = arith.addf %255, %258 : vector<1x1xf32>
    %260 = math.rsqrt %259 : vector<1x1xf32>
    %261 = vector.broadcast %260 : vector<1x1xf32> to vector<8x8xf32>
    %262 = arith.mulf %257, %261 : vector<8x8xf32>
    %263 = math.exp %262 : vector<8x8xf32>
    %cst_97 = arith.constant dense<0.000000e+00> : vector<8xf32>
    %264 = vector.multi_reduction <add>, %263, %cst_97 [1] : vector<8x8xf32> to vector<8xf32>
    %265 = vector.shape_cast %264 : vector<8xf32> to vector<8x1xf32>
    %266 = vector.broadcast %265 : vector<8x1xf32> to vector<8x8xf32>
    %267 = arith.divf %263, %266 : vector<8x8xf32>
    %cst_98 = arith.constant 2.500000e-01 : f32
    %268 = vector.broadcast %cst_98 : f32 to vector<8x8xf32>
    %269 = arith.mulf %267, %268 : vector<8x8xf32>
    %270 = arith.addf %216, %269 : vector<8x8xf32>
    %271 = arith.truncf %233 : vector<8x8xf32> to vector<8x8xbf16>
    %272 = arith.truncf %267 : vector<8x8xf32> to vector<8x8xbf16>
    %cst_99 = arith.constant dense<0.000000e+00> : vector<8x8xf32>
    %273 = tpu.matmul %271, %272, %cst_99 {dimension_numbers = #tpu.dot_dimension_numbers<[1], [1], [0], [0], [0, 0, 1, 0], [], []>} : vector<8x8xbf16>, vector<8x8xbf16>, vector<8x8xf32> -> vector<8x8xf32>
    %274 = vector.extract_strided_slice %7 {offsets = [24, 0], sizes = [8, 32], strides = [1, 1]} : vector<32x32xbf16> to vector<8x32xbf16>
    %275 = arith.truncf %273 : vector<8x8xf32> to vector<8x8xbf16>
    %cst_100 = arith.constant dense<0.000000e+00> : vector<8x32xf32>
    %276 = tpu.matmul %275, %274, %cst_100 {dimension_numbers = #tpu.dot_dimension_numbers<[1], [0], [0], [1], [0, 0, 1, 1], [], []>} : vector<8x8xbf16>, vector<8x32xbf16>, vector<8x32xf32> -> vector<8x32xf32>
    %277 = arith.addf %223, %276 : vector<8x32xf32>
    %c0_101 = arith.constant 0 : index
    %c0_102 = arith.constant 0 : index
    %c0_103 = arith.constant 0 : index
    %c0_104 = arith.constant 0 : index
    %278 = vector.load %arg6[%c0_101, %c0_102, %c0_103, %c0_104] : memref<1x2x8x8xf32, #tpu.memory_space<vmem>>, vector<1x1x8x8xf32>
    %279 = vector.shape_cast %278 : vector<1x1x8x8xf32> to vector<8x8xf32>
    %280 = vector.shape_cast %270 : vector<8x8xf32> to vector<1x1x8x8xf32>
    tpu.vector_store %arg6[%c0_101, %c0_102, %c0_103, %c0_104], %280 {strides = array<i32>} : memref<1x2x8x8xf32, #tpu.memory_space<vmem>>, vector<1x1x8x8xf32>,
    %281 = arith.addf %0, %277 : vector<8x32xf32>
    %282 = vector.extract_strided_slice %1 {offsets = [4, 0], sizes = [1, 32], strides = [1, 1]} : vector<8x32xf32> to vector<1x32xf32>
    %283 = vector.extract_strided_slice %1 {offsets = [5, 0], sizes = [1, 32], strides = [1, 1]} : vector<8x32xf32> to vector<1x32xf32>
    %cst_105 = arith.constant dense<0.000000e+00> : vector<8xf32>
    %284 = vector.multi_reduction <add>, %281, %cst_105 [1] : vector<8x32xf32> to vector<8xf32>
    %285 = vector.shape_cast %284 : vector<8xf32> to vector<8x1xf32>
    %cst_106 = arith.constant 3.200000e+01 : f32
    %286 = vector.broadcast %cst_106 : f32 to vector<8x1xf32>
    %287 = arith.divf %285, %286 : vector<8x1xf32>
    %288 = vector.broadcast %287 : vector<8x1xf32> to vector<8x32xf32>
    %289 = arith.subf %281, %288 : vector<8x32xf32>
    %290 = arith.mulf %289, %289 : vector<8x32xf32>
    %cst_107 = arith.constant dense<0.000000e+00> : vector<8xf32>
    %291 = vector.multi_reduction <add>, %290, %cst_107 [1] : vector<8x32xf32> to vector<8xf32>
    %292 = vector.shape_cast %291 : vector<8xf32> to vector<8x1xf32>
    %cst_108 = arith.constant 3.200000e+01 : f32
    %293 = vector.broadcast %cst_108 : f32 to vector<8x1xf32>
    %294 = arith.divf %292, %293 : vector<8x1xf32>
    %295 = vector.broadcast %287 : vector<8x1xf32> to vector<8x32xf32>
    %296 = arith.subf %281, %295 : vector<8x32xf32>
    %cst_109 = arith.constant 9.99999997E-7 : f32
    %297 = vector.broadcast %cst_109 : f32 to vector<8x1xf32>
    %298 = arith.addf %294, %297 : vector<8x1xf32>
    %299 = math.rsqrt %298 : vector<8x1xf32>
    %300 = vector.broadcast %299 : vector<8x1xf32> to vector<8x32xf32>
    %301 = arith.mulf %296, %300 : vector<8x32xf32>
    %302 = vector.broadcast %282 : vector<1x32xf32> to vector<8x32xf32>
    %303 = arith.mulf %301, %302 : vector<8x32xf32>
    %304 = vector.broadcast %283 : vector<1x32xf32> to vector<8x32xf32>
    %305 = arith.addf %303, %304 : vector<8x32xf32>
    %306 = arith.truncf %305 : vector<8x32xf32> to vector<8x32xbf16>
    %cst_110 = arith.constant dense<0.000000e+00> : vector<8x32xf32>
    %307 = tpu.matmul %306, %9, %cst_110 {dimension_numbers = #tpu.dot_dimension_numbers<[1], [0], [0], [1], [0, 0, 1, 1], [], []>} : vector<8x32xbf16>, vector<32x32xbf16>, vector<8x32xf32> -> vector<8x32xf32>
    %308 = vector.extract_strided_slice %1 {offsets = [6, 0], sizes = [1, 32], strides = [1, 1]} : vector<8x32xf32> to vector<1x32xf32>
    %309 = vector.broadcast %308 : vector<1x32xf32> to vector<8x32xf32>
    %310 = arith.addf %307, %309 : vector<8x32xf32>
    %cst_111 = arith.constant 5.000000e-01 : f32
    %311 = vector.broadcast %cst_111 : f32 to vector<8x32xf32>
    %312 = arith.mulf %310, %311 : vector<8x32xf32>
    %cst_112 = arith.constant 0.707106769 : f32
    %313 = vector.broadcast %cst_112 : f32 to vector<8x32xf32>
    %314 = arith.mulf %310, %313 : vector<8x32xf32>
    %315 = math.absf %314 : vector<8x32xf32>
    %cst_113 = arith.constant 0.327591091 : f32
    %316 = vector.broadcast %cst_113 : f32 to vector<8x32xf32>
    %317 = arith.mulf %316, %315 : vector<8x32xf32>
    %cst_114 = arith.constant 1.000000e+00 : f32
    %318 = vector.broadcast %cst_114 : f32 to vector<8x32xf32>
    %319 = arith.addf %318, %317 : vector<8x32xf32>
    %cst_115 = arith.constant 1.000000e+00 : f32
    %320 = vector.broadcast %cst_115 : f32 to vector<8x32xf32>
    %321 = arith.divf %320, %319 : vector<8x32xf32>
    %cst_116 = arith.constant 1.06140542 : f32
    %322 = vector.broadcast %cst_116 : f32 to vector<8x32xf32>
    %323 = arith.mulf %322, %321 : vector<8x32xf32>
    %cst_117 = arith.constant -1.45315206 : f32
    %324 = vector.broadcast %cst_117 : f32 to vector<8x32xf32>
    %325 = arith.addf %323, %324 : vector<8x32xf32>
    %326 = arith.mulf %325, %321 : vector<8x32xf32>
    %cst_118 = arith.constant 1.42141378 : f32
    %327 = vector.broadcast %cst_118 : f32 to vector<8x32xf32>
    %328 = arith.addf %326, %327 : vector<8x32xf32>
    %329 = arith.mulf %328, %321 : vector<8x32xf32>
    %cst_119 = arith.constant -0.284496725 : f32
    %330 = vector.broadcast %cst_119 : f32 to vector<8x32xf32>
    %331 = arith.addf %329, %330 : vector<8x32xf32>
    %332 = arith.mulf %331, %321 : vector<8x32xf32>
    %cst_120 = arith.constant 0.254829586 : f32
    %333 = vector.broadcast %cst_120 : f32 to vector<8x32xf32>
    %334 = arith.addf %332, %333 : vector<8x32xf32>
    %335 = arith.mulf %334, %321 : vector<8x32xf32>
    %cst_121 = arith.constant 0.000000e+00 : f32
    %336 = vector.broadcast %cst_121 : f32 to vector<8x32xf32>
    %337 = arith.subf %336, %315 : vector<8x32xf32>
    %338 = arith.mulf %337, %315 : vector<8x32xf32>
    %339 = math.exp %338 : vector<8x32xf32>
    %340 = arith.mulf %335, %339 : vector<8x32xf32>
    %cst_122 = arith.constant 1.000000e+00 : f32
    %341 = vector.broadcast %cst_122 : f32 to vector<8x32xf32>
    %342 = arith.subf %341, %340 : vector<8x32xf32>
    %cst_123 = arith.constant 0.000000e+00 : f32
    %343 = vector.broadcast %cst_123 : f32 to vector<8x32xf32>
    %344 = arith.cmpf oge, %314, %343 : vector<8x32xf32>
    %cst_124 = arith.constant 0.000000e+00 : f32
    %345 = vector.broadcast %cst_124 : f32 to vector<8x32xf32>
    %346 = arith.subf %345, %342 : vector<8x32xf32>
    %347 = arith.select %344, %342, %346 : vector<8x32xi1>, vector<8x32xf32>
    %cst_125 = arith.constant 1.000000e+00 : f32
    %348 = vector.broadcast %cst_125 : f32 to vector<8x32xf32>
    %349 = arith.addf %348, %347 : vector<8x32xf32>
    %350 = arith.mulf %312, %349 : vector<8x32xf32>
    %351 = arith.truncf %350 : vector<8x32xf32> to vector<8x32xbf16>
    %cst_126 = arith.constant dense<0.000000e+00> : vector<8x32xf32>
    %352 = tpu.matmul %351, %11, %cst_126 {dimension_numbers = #tpu.dot_dimension_numbers<[1], [0], [0], [1], [0, 0, 1, 1], [], []>} : vector<8x32xbf16>, vector<32x32xbf16>, vector<8x32xf32> -> vector<8x32xf32>
    %353 = arith.addf %281, %352 : vector<8x32xf32>
    %354 = vector.extract_strided_slice %1 {offsets = [7, 0], sizes = [1, 32], strides = [1, 1]} : vector<8x32xf32> to vector<1x32xf32>
    %355 = vector.broadcast %354 : vector<1x32xf32> to vector<8x32xf32>
    %356 = arith.addf %353, %355 : vector<8x32xf32>
    %c8 = arith.constant 8 : index
    %c0_127 = arith.constant 0 : index
    %357 = vector.load %arg2[%c8, %c0_127] : memref<18x32xf32, #tpu.memory_space<vmem>>, vector<8x32xf32>
    %c1_128 = arith.constant 1 : index
    %c4_129 = arith.constant 4 : index
    %c0_130 = arith.constant 0 : index
    %c0_131 = arith.constant 0 : index
    %358 = vector.load %arg3[%c1_128, %c4_129, %c0_130, %c0_131] : memref<2x6x8x8xbf16, #tpu.memory_space<vmem>>, vector<1x1x8x8xbf16>
    %359 = vector.shape_cast %358 : vector<1x1x8x8xbf16> to vector<8x8xbf16>
    %c1_132 = arith.constant 1 : index
    %c5_133 = arith.constant 5 : index
    %c0_134 = arith.constant 0 : index
    %c0_135 = arith.constant 0 : index
    %360 = vector.load %arg3[%c1_132, %c5_133, %c0_134, %c0_135] : memref<2x6x8x8xbf16, #tpu.memory_space<vmem>>, vector<1x1x8x8xbf16>
    %361 = vector.shape_cast %360 : vector<1x1x8x8xbf16> to vector<8x8xbf16>
    %c1_136 = arith.constant 1 : index
    %c0_137 = arith.constant 0 : index
    %c0_138 = arith.constant 0 : index
    %c0_139 = arith.constant 0 : index
    %362 = vector.load %arg4[%c1_136, %c0_137, %c0_138, %c0_139] : memref<2x3x32x32xbf16, #tpu.memory_space<vmem>>, vector<1x1x32x32xbf16>
    %363 = vector.shape_cast %362 : vector<1x1x32x32xbf16> to vector<32x32xbf16>
    %c1_140 = arith.constant 1 : index
    %c1_141 = arith.constant 1 : index
    %c0_142 = arith.constant 0 : index
    %c0_143 = arith.constant 0 : index
    %364 = vector.load %arg4[%c1_140, %c1_141, %c0_142, %c0_143] : memref<2x3x32x32xbf16, #tpu.memory_space<vmem>>, vector<1x1x32x32xbf16>
    %365 = vector.shape_cast %364 : vector<1x1x32x32xbf16> to vector<32x32xbf16>
    %c1_144 = arith.constant 1 : index
    %c2_145 = arith.constant 2 : index
    %c0_146 = arith.constant 0 : index
    %c0_147 = arith.constant 0 : index
    %366 = vector.load %arg4[%c1_144, %c2_145, %c0_146, %c0_147] : memref<2x3x32x32xbf16, #tpu.memory_space<vmem>>, vector<1x1x32x32xbf16>
    %367 = vector.shape_cast %366 : vector<1x1x32x32xbf16> to vector<32x32xbf16>
    %368 = vector.extract_strided_slice %357 {offsets = [0, 0], sizes = [1, 32], strides = [1, 1]} : vector<8x32xf32> to vector<1x32xf32>
    %369 = vector.extract_strided_slice %357 {offsets = [1, 0], sizes = [1, 32], strides = [1, 1]} : vector<8x32xf32> to vector<1x32xf32>
    %cst_148 = arith.constant dense<0.000000e+00> : vector<8xf32>
    %370 = vector.multi_reduction <add>, %356, %cst_148 [1] : vector<8x32xf32> to vector<8xf32>
    %371 = vector.shape_cast %370 : vector<8xf32> to vector<8x1xf32>
    %cst_149 = arith.constant 3.200000e+01 : f32
    %372 = vector.broadcast %cst_149 : f32 to vector<8x1xf32>
    %373 = arith.divf %371, %372 : vector<8x1xf32>
    %374 = vector.broadcast %373 : vector<8x1xf32> to vector<8x32xf32>
    %375 = arith.subf %356, %374 : vector<8x32xf32>
    %376 = arith.mulf %375, %375 : vector<8x32xf32>
    %cst_150 = arith.constant dense<0.000000e+00> : vector<8xf32>
    %377 = vector.multi_reduction <add>, %376, %cst_150 [1] : vector<8x32xf32> to vector<8xf32>
    %378 = vector.shape_cast %377 : vector<8xf32> to vector<8x1xf32>
    %cst_151 = arith.constant 3.200000e+01 : f32
    %379 = vector.broadcast %cst_151 : f32 to vector<8x1xf32>
    %380 = arith.divf %378, %379 : vector<8x1xf32>
    %381 = vector.broadcast %373 : vector<8x1xf32> to vector<8x32xf32>
    %382 = arith.subf %356, %381 : vector<8x32xf32>
    %cst_152 = arith.constant 9.99999997E-7 : f32
    %383 = vector.broadcast %cst_152 : f32 to vector<8x1xf32>
    %384 = arith.addf %380, %383 : vector<8x1xf32>
    %385 = math.rsqrt %384 : vector<8x1xf32>
    %386 = vector.broadcast %385 : vector<8x1xf32> to vector<8x32xf32>
    %387 = arith.mulf %382, %386 : vector<8x32xf32>
    %388 = vector.broadcast %368 : vector<1x32xf32> to vector<8x32xf32>
    %389 = arith.mulf %387, %388 : vector<8x32xf32>
    %390 = vector.broadcast %369 : vector<1x32xf32> to vector<8x32xf32>
    %391 = arith.addf %389, %390 : vector<8x32xf32>
    %392 = vector.extract_strided_slice %357 {offsets = [2, 0], sizes = [1, 32], strides = [1, 1]} : vector<8x32xf32> to vector<1x32xf32>
    %393 = vector.extract_strided_slice %357 {offsets = [3, 0], sizes = [1, 32], strides = [1, 1]} : vector<8x32xf32> to vector<1x32xf32>
    %cst_153 = arith.constant dense<0.000000e+00> : vector<8xf32>
    %394 = vector.multi_reduction <add>, %356, %cst_153 [1] : vector<8x32xf32> to vector<8xf32>
    %395 = vector.shape_cast %394 : vector<8xf32> to vector<8x1xf32>
    %cst_154 = arith.constant 3.200000e+01 : f32
    %396 = vector.broadcast %cst_154 : f32 to vector<8x1xf32>
    %397 = arith.divf %395, %396 : vector<8x1xf32>
    %398 = vector.broadcast %397 : vector<8x1xf32> to vector<8x32xf32>
    %399 = arith.subf %356, %398 : vector<8x32xf32>
    %400 = arith.mulf %399, %399 : vector<8x32xf32>
    %cst_155 = arith.constant dense<0.000000e+00> : vector<8xf32>
    %401 = vector.multi_reduction <add>, %400, %cst_155 [1] : vector<8x32xf32> to vector<8xf32>
    %402 = vector.shape_cast %401 : vector<8xf32> to vector<8x1xf32>
    %cst_156 = arith.constant 3.200000e+01 : f32
    %403 = vector.broadcast %cst_156 : f32 to vector<8x1xf32>
    %404 = arith.divf %402, %403 : vector<8x1xf32>
    %405 = vector.broadcast %397 : vector<8x1xf32> to vector<8x32xf32>
    %406 = arith.subf %356, %405 : vector<8x32xf32>
    %cst_157 = arith.constant 9.99999997E-7 : f32
    %407 = vector.broadcast %cst_157 : f32 to vector<8x1xf32>
    %408 = arith.addf %404, %407 : vector<8x1xf32>
    %409 = math.rsqrt %408 : vector<8x1xf32>
    %410 = vector.broadcast %409 : vector<8x1xf32> to vector<8x32xf32>
    %411 = arith.mulf %406, %410 : vector<8x32xf32>
    %412 = vector.broadcast %392 : vector<1x32xf32> to vector<8x32xf32>
    %413 = arith.mulf %411, %412 : vector<8x32xf32>
    %414 = vector.broadcast %393 : vector<1x32xf32> to vector<8x32xf32>
    %415 = arith.addf %413, %414 : vector<8x32xf32>
    %cst_158 = arith.constant 0.000000e+00 : f32
    %416 = vector.broadcast %cst_158 : f32 to vector<8x32xf32>
    %cst_159 = arith.constant 0.000000e+00 : f32
    %417 = vector.broadcast %cst_159 : f32 to vector<8x8xf32>
    %418 = vector.extract_strided_slice %391 {offsets = [0, 0], sizes = [8, 8], strides = [1, 1]} : vector<8x32xf32> to vector<8x8xf32>
    %419 = vector.extract_strided_slice %415 {offsets = [0, 0], sizes = [8, 8], strides = [1, 1]} : vector<8x32xf32> to vector<8x8xf32>
    %c1_160 = arith.constant 1 : index
    %c0_161 = arith.constant 0 : index
    %c0_162 = arith.constant 0 : index
    %c0_163 = arith.constant 0 : index
    %420 = vector.load %arg3[%c1_160, %c0_161, %c0_162, %c0_163] : memref<2x6x8x8xbf16, #tpu.memory_space<vmem>>, vector<1x1x8x8xbf16>
    %421 = vector.shape_cast %420 : vector<1x1x8x8xbf16> to vector<8x8xbf16>
    %422 = arith.truncf %418 : vector<8x8xf32> to vector<8x8xbf16>
    %cst_164 = arith.constant dense<0.000000e+00> : vector<8x8xf32>
    %423 = tpu.matmul %422, %421, %cst_164 {dimension_numbers = #tpu.dot_dimension_numbers<[1], [0], [0], [1], [0, 0, 1, 1], [], []>} : vector<8x8xbf16>, vector<8x8xbf16>, vector<8x8xf32> -> vector<8x8xf32>
    %424 = arith.truncf %419 : vector<8x8xf32> to vector<8x8xbf16>
    %cst_165 = arith.constant dense<0.000000e+00> : vector<8x8xf32>
    %425 = tpu.matmul %424, %359, %cst_165 {dimension_numbers = #tpu.dot_dimension_numbers<[1], [0], [0], [1], [0, 0, 1, 1], [], []>} : vector<8x8xbf16>, vector<8x8xbf16>, vector<8x8xf32> -> vector<8x8xf32>
    %426 = arith.truncf %419 : vector<8x8xf32> to vector<8x8xbf16>
    %cst_166 = arith.constant dense<0.000000e+00> : vector<8x8xf32>
    %427 = tpu.matmul %426, %361, %cst_166 {dimension_numbers = #tpu.dot_dimension_numbers<[1], [0], [0], [1], [0, 0, 1, 1], [], []>} : vector<8x8xbf16>, vector<8x8xbf16>, vector<8x8xf32> -> vector<8x8xf32>
    %428 = arith.truncf %423 : vector<8x8xf32> to vector<8x8xbf16>
    %429 = arith.truncf %425 : vector<8x8xf32> to vector<8x8xbf16>
    %cst_167 = arith.constant dense<0.000000e+00> : vector<8x8xf32>
    %430 = tpu.matmul %428, %429, %cst_167 {dimension_numbers = #tpu.dot_dimension_numbers<[0], [0], [1], [1], [0, 1, 1, 1], [], []>} : vector<8x8xbf16>, vector<8x8xbf16>, vector<8x8xf32> -> vector<8x8xf32>
    %cst_168 = arith.constant 0.176776692 : f32
    %431 = vector.broadcast %cst_168 : f32 to vector<8x8xf32>
    %432 = arith.mulf %430, %431 : vector<8x8xf32>
    %433 = vector.shape_cast %432 : vector<8x8xf32> to vector<1x8x8xf32>
    %cst_169 = arith.constant dense<0.000000e+00> : vector<1xf32>
    %434 = vector.multi_reduction <add>, %433, %cst_169 [1, 2] : vector<1x8x8xf32> to vector<1xf32>
    %435 = vector.shape_cast %434 : vector<1xf32> to vector<1x1x1xf32>
    %436 = vector.extract %435[0, 0, 0] : f32 from vector<1x1x1xf32>
    %437 = vector.broadcast %436 : f32 to vector<1x1xf32>
    %cst_170 = arith.constant 6.400000e+01 : f32
    %438 = vector.broadcast %cst_170 : f32 to vector<1x1xf32>
    %439 = arith.divf %437, %438 : vector<1x1xf32>
    %440 = vector.broadcast %439 : vector<1x1xf32> to vector<8x8xf32>
    %441 = arith.subf %432, %440 : vector<8x8xf32>
    %442 = arith.mulf %441, %441 : vector<8x8xf32>
    %443 = vector.shape_cast %442 : vector<8x8xf32> to vector<1x8x8xf32>
    %cst_171 = arith.constant dense<0.000000e+00> : vector<1xf32>
    %444 = vector.multi_reduction <add>, %443, %cst_171 [1, 2] : vector<1x8x8xf32> to vector<1xf32>
    %445 = vector.shape_cast %444 : vector<1xf32> to vector<1x1x1xf32>
    %446 = vector.extract %445[0, 0, 0] : f32 from vector<1x1x1xf32>
    %447 = vector.broadcast %446 : f32 to vector<1x1xf32>
    %cst_172 = arith.constant 6.400000e+01 : f32
    %448 = vector.broadcast %cst_172 : f32 to vector<1x1xf32>
    %449 = arith.divf %447, %448 : vector<1x1xf32>
    %450 = vector.broadcast %439 : vector<1x1xf32> to vector<8x8xf32>
    %451 = arith.subf %432, %450 : vector<8x8xf32>
    %cst_173 = arith.constant 9.99999974E-6 : f32
    %452 = vector.broadcast %cst_173 : f32 to vector<1x1xf32>
    %453 = arith.addf %449, %452 : vector<1x1xf32>
    %454 = math.rsqrt %453 : vector<1x1xf32>
    %455 = vector.broadcast %454 : vector<1x1xf32> to vector<8x8xf32>
    %456 = arith.mulf %451, %455 : vector<8x8xf32>
    %457 = math.exp %456 : vector<8x8xf32>
    %cst_174 = arith.constant dense<0.000000e+00> : vector<8xf32>
    %458 = vector.multi_reduction <add>, %457, %cst_174 [1] : vector<8x8xf32> to vector<8xf32>
    %459 = vector.shape_cast %458 : vector<8xf32> to vector<8x1xf32>
    %460 = vector.broadcast %459 : vector<8x1xf32> to vector<8x8xf32>
    %461 = arith.divf %457, %460 : vector<8x8xf32>
    %cst_175 = arith.constant 2.500000e-01 : f32
    %462 = vector.broadcast %cst_175 : f32 to vector<8x8xf32>
    %463 = arith.mulf %461, %462 : vector<8x8xf32>
    %464 = arith.addf %417, %463 : vector<8x8xf32>
    %465 = arith.truncf %427 : vector<8x8xf32> to vector<8x8xbf16>
    %466 = arith.truncf %461 : vector<8x8xf32> to vector<8x8xbf16>
    %cst_176 = arith.constant dense<0.000000e+00> : vector<8x8xf32>
    %467 = tpu.matmul %465, %466, %cst_176 {dimension_numbers = #tpu.dot_dimension_numbers<[1], [1], [0], [0], [0, 0, 1, 0], [], []>} : vector<8x8xbf16>, vector<8x8xbf16>, vector<8x8xf32> -> vector<8x8xf32>
    %468 = vector.extract_strided_slice %363 {offsets = [0, 0], sizes = [8, 32], strides = [1, 1]} : vector<32x32xbf16> to vector<8x32xbf16>
    %469 = arith.truncf %467 : vector<8x8xf32> to vector<8x8xbf16>
    %cst_177 = arith.constant dense<0.000000e+00> : vector<8x32xf32>
    %470 = tpu.matmul %469, %468, %cst_177 {dimension_numbers = #tpu.dot_dimension_numbers<[1], [0], [0], [1], [0, 0, 1, 1], [], []>} : vector<8x8xbf16>, vector<8x32xbf16>, vector<8x32xf32> -> vector<8x32xf32>
    %471 = arith.addf %416, %470 : vector<8x32xf32>
    %472 = vector.extract_strided_slice %391 {offsets = [0, 8], sizes = [8, 8], strides = [1, 1]} : vector<8x32xf32> to vector<8x8xf32>
    %473 = vector.extract_strided_slice %415 {offsets = [0, 8], sizes = [8, 8], strides = [1, 1]} : vector<8x32xf32> to vector<8x8xf32>
    %c1_178 = arith.constant 1 : index
    %c1_179 = arith.constant 1 : index
    %c0_180 = arith.constant 0 : index
    %c0_181 = arith.constant 0 : index
    %474 = vector.load %arg3[%c1_178, %c1_179, %c0_180, %c0_181] : memref<2x6x8x8xbf16, #tpu.memory_space<vmem>>, vector<1x1x8x8xbf16>
    %475 = vector.shape_cast %474 : vector<1x1x8x8xbf16> to vector<8x8xbf16>
    %476 = arith.truncf %472 : vector<8x8xf32> to vector<8x8xbf16>
    %cst_182 = arith.constant dense<0.000000e+00> : vector<8x8xf32>
    %477 = tpu.matmul %476, %475, %cst_182 {dimension_numbers = #tpu.dot_dimension_numbers<[1], [0], [0], [1], [0, 0, 1, 1], [], []>} : vector<8x8xbf16>, vector<8x8xbf16>, vector<8x8xf32> -> vector<8x8xf32>
    %478 = arith.truncf %473 : vector<8x8xf32> to vector<8x8xbf16>
    %cst_183 = arith.constant dense<0.000000e+00> : vector<8x8xf32>
    %479 = tpu.matmul %478, %359, %cst_183 {dimension_numbers = #tpu.dot_dimension_numbers<[1], [0], [0], [1], [0, 0, 1, 1], [], []>} : vector<8x8xbf16>, vector<8x8xbf16>, vector<8x8xf32> -> vector<8x8xf32>
    %480 = arith.truncf %473 : vector<8x8xf32> to vector<8x8xbf16>
    %cst_184 = arith.constant dense<0.000000e+00> : vector<8x8xf32>
    %481 = tpu.matmul %480, %361, %cst_184 {dimension_numbers = #tpu.dot_dimension_numbers<[1], [0], [0], [1], [0, 0, 1, 1], [], []>} : vector<8x8xbf16>, vector<8x8xbf16>, vector<8x8xf32> -> vector<8x8xf32>
    %482 = arith.truncf %477 : vector<8x8xf32> to vector<8x8xbf16>
    %483 = arith.truncf %479 : vector<8x8xf32> to vector<8x8xbf16>
    %cst_185 = arith.constant dense<0.000000e+00> : vector<8x8xf32>
    %484 = tpu.matmul %482, %483, %cst_185 {dimension_numbers = #tpu.dot_dimension_numbers<[0], [0], [1], [1], [0, 1, 1, 1], [], []>} : vector<8x8xbf16>, vector<8x8xbf16>, vector<8x8xf32> -> vector<8x8xf32>
    %cst_186 = arith.constant 0.176776692 : f32
    %485 = vector.broadcast %cst_186 : f32 to vector<8x8xf32>
    %486 = arith.mulf %484, %485 : vector<8x8xf32>
    %487 = vector.shape_cast %486 : vector<8x8xf32> to vector<1x8x8xf32>
    %cst_187 = arith.constant dense<0.000000e+00> : vector<1xf32>
    %488 = vector.multi_reduction <add>, %487, %cst_187 [1, 2] : vector<1x8x8xf32> to vector<1xf32>
    %489 = vector.shape_cast %488 : vector<1xf32> to vector<1x1x1xf32>
    %490 = vector.extract %489[0, 0, 0] : f32 from vector<1x1x1xf32>
    %491 = vector.broadcast %490 : f32 to vector<1x1xf32>
    %cst_188 = arith.constant 6.400000e+01 : f32
    %492 = vector.broadcast %cst_188 : f32 to vector<1x1xf32>
    %493 = arith.divf %491, %492 : vector<1x1xf32>
    %494 = vector.broadcast %493 : vector<1x1xf32> to vector<8x8xf32>
    %495 = arith.subf %486, %494 : vector<8x8xf32>
    %496 = arith.mulf %495, %495 : vector<8x8xf32>
    %497 = vector.shape_cast %496 : vector<8x8xf32> to vector<1x8x8xf32>
    %cst_189 = arith.constant dense<0.000000e+00> : vector<1xf32>
    %498 = vector.multi_reduction <add>, %497, %cst_189 [1, 2] : vector<1x8x8xf32> to vector<1xf32>
    %499 = vector.shape_cast %498 : vector<1xf32> to vector<1x1x1xf32>
    %500 = vector.extract %499[0, 0, 0] : f32 from vector<1x1x1xf32>
    %501 = vector.broadcast %500 : f32 to vector<1x1xf32>
    %cst_190 = arith.constant 6.400000e+01 : f32
    %502 = vector.broadcast %cst_190 : f32 to vector<1x1xf32>
    %503 = arith.divf %501, %502 : vector<1x1xf32>
    %504 = vector.broadcast %493 : vector<1x1xf32> to vector<8x8xf32>
    %505 = arith.subf %486, %504 : vector<8x8xf32>
    %cst_191 = arith.constant 9.99999974E-6 : f32
    %506 = vector.broadcast %cst_191 : f32 to vector<1x1xf32>
    %507 = arith.addf %503, %506 : vector<1x1xf32>
    %508 = math.rsqrt %507 : vector<1x1xf32>
    %509 = vector.broadcast %508 : vector<1x1xf32> to vector<8x8xf32>
    %510 = arith.mulf %505, %509 : vector<8x8xf32>
    %511 = math.exp %510 : vector<8x8xf32>
    %cst_192 = arith.constant dense<0.000000e+00> : vector<8xf32>
    %512 = vector.multi_reduction <add>, %511, %cst_192 [1] : vector<8x8xf32> to vector<8xf32>
    %513 = vector.shape_cast %512 : vector<8xf32> to vector<8x1xf32>
    %514 = vector.broadcast %513 : vector<8x1xf32> to vector<8x8xf32>
    %515 = arith.divf %511, %514 : vector<8x8xf32>
    %cst_193 = arith.constant 2.500000e-01 : f32
    %516 = vector.broadcast %cst_193 : f32 to vector<8x8xf32>
    %517 = arith.mulf %515, %516 : vector<8x8xf32>
    %518 = arith.addf %464, %517 : vector<8x8xf32>
    %519 = arith.truncf %481 : vector<8x8xf32> to vector<8x8xbf16>
    %520 = arith.truncf %515 : vector<8x8xf32> to vector<8x8xbf16>
    %cst_194 = arith.constant dense<0.000000e+00> : vector<8x8xf32>
    %521 = tpu.matmul %519, %520, %cst_194 {dimension_numbers = #tpu.dot_dimension_numbers<[1], [1], [0], [0], [0, 0, 1, 0], [], []>} : vector<8x8xbf16>, vector<8x8xbf16>, vector<8x8xf32> -> vector<8x8xf32>
    %522 = vector.extract_strided_slice %363 {offsets = [8, 0], sizes = [8, 32], strides = [1, 1]} : vector<32x32xbf16> to vector<8x32xbf16>
    %523 = arith.truncf %521 : vector<8x8xf32> to vector<8x8xbf16>
    %cst_195 = arith.constant dense<0.000000e+00> : vector<8x32xf32>
    %524 = tpu.matmul %523, %522, %cst_195 {dimension_numbers = #tpu.dot_dimension_numbers<[1], [0], [0], [1], [0, 0, 1, 1], [], []>} : vector<8x8xbf16>, vector<8x32xbf16>, vector<8x32xf32> -> vector<8x32xf32>
    %525 = arith.addf %471, %524 : vector<8x32xf32>
    %526 = vector.extract_strided_slice %391 {offsets = [0, 16], sizes = [8, 8], strides = [1, 1]} : vector<8x32xf32> to vector<8x8xf32>
    %527 = vector.extract_strided_slice %415 {offsets = [0, 16], sizes = [8, 8], strides = [1, 1]} : vector<8x32xf32> to vector<8x8xf32>
    %c1_196 = arith.constant 1 : index
    %c2_197 = arith.constant 2 : index
    %c0_198 = arith.constant 0 : index
    %c0_199 = arith.constant 0 : index
    %528 = vector.load %arg3[%c1_196, %c2_197, %c0_198, %c0_199] : memref<2x6x8x8xbf16, #tpu.memory_space<vmem>>, vector<1x1x8x8xbf16>
    %529 = vector.shape_cast %528 : vector<1x1x8x8xbf16> to vector<8x8xbf16>
    %530 = arith.truncf %526 : vector<8x8xf32> to vector<8x8xbf16>
    %cst_200 = arith.constant dense<0.000000e+00> : vector<8x8xf32>
    %531 = tpu.matmul %530, %529, %cst_200 {dimension_numbers = #tpu.dot_dimension_numbers<[1], [0], [0], [1], [0, 0, 1, 1], [], []>} : vector<8x8xbf16>, vector<8x8xbf16>, vector<8x8xf32> -> vector<8x8xf32>
    %532 = arith.truncf %527 : vector<8x8xf32> to vector<8x8xbf16>
    %cst_201 = arith.constant dense<0.000000e+00> : vector<8x8xf32>
    %533 = tpu.matmul %532, %359, %cst_201 {dimension_numbers = #tpu.dot_dimension_numbers<[1], [0], [0], [1], [0, 0, 1, 1], [], []>} : vector<8x8xbf16>, vector<8x8xbf16>, vector<8x8xf32> -> vector<8x8xf32>
    %534 = arith.truncf %527 : vector<8x8xf32> to vector<8x8xbf16>
    %cst_202 = arith.constant dense<0.000000e+00> : vector<8x8xf32>
    %535 = tpu.matmul %534, %361, %cst_202 {dimension_numbers = #tpu.dot_dimension_numbers<[1], [0], [0], [1], [0, 0, 1, 1], [], []>} : vector<8x8xbf16>, vector<8x8xbf16>, vector<8x8xf32> -> vector<8x8xf32>
    %536 = arith.truncf %531 : vector<8x8xf32> to vector<8x8xbf16>
    %537 = arith.truncf %533 : vector<8x8xf32> to vector<8x8xbf16>
    %cst_203 = arith.constant dense<0.000000e+00> : vector<8x8xf32>
    %538 = tpu.matmul %536, %537, %cst_203 {dimension_numbers = #tpu.dot_dimension_numbers<[0], [0], [1], [1], [0, 1, 1, 1], [], []>} : vector<8x8xbf16>, vector<8x8xbf16>, vector<8x8xf32> -> vector<8x8xf32>
    %cst_204 = arith.constant 0.176776692 : f32
    %539 = vector.broadcast %cst_204 : f32 to vector<8x8xf32>
    %540 = arith.mulf %538, %539 : vector<8x8xf32>
    %541 = vector.shape_cast %540 : vector<8x8xf32> to vector<1x8x8xf32>
    %cst_205 = arith.constant dense<0.000000e+00> : vector<1xf32>
    %542 = vector.multi_reduction <add>, %541, %cst_205 [1, 2] : vector<1x8x8xf32> to vector<1xf32>
    %543 = vector.shape_cast %542 : vector<1xf32> to vector<1x1x1xf32>
    %544 = vector.extract %543[0, 0, 0] : f32 from vector<1x1x1xf32>
    %545 = vector.broadcast %544 : f32 to vector<1x1xf32>
    %cst_206 = arith.constant 6.400000e+01 : f32
    %546 = vector.broadcast %cst_206 : f32 to vector<1x1xf32>
    %547 = arith.divf %545, %546 : vector<1x1xf32>
    %548 = vector.broadcast %547 : vector<1x1xf32> to vector<8x8xf32>
    %549 = arith.subf %540, %548 : vector<8x8xf32>
    %550 = arith.mulf %549, %549 : vector<8x8xf32>
    %551 = vector.shape_cast %550 : vector<8x8xf32> to vector<1x8x8xf32>
    %cst_207 = arith.constant dense<0.000000e+00> : vector<1xf32>
    %552 = vector.multi_reduction <add>, %551, %cst_207 [1, 2] : vector<1x8x8xf32> to vector<1xf32>
    %553 = vector.shape_cast %552 : vector<1xf32> to vector<1x1x1xf32>
    %554 = vector.extract %553[0, 0, 0] : f32 from vector<1x1x1xf32>
    %555 = vector.broadcast %554 : f32 to vector<1x1xf32>
    %cst_208 = arith.constant 6.400000e+01 : f32
    %556 = vector.broadcast %cst_208 : f32 to vector<1x1xf32>
    %557 = arith.divf %555, %556 : vector<1x1xf32>
    %558 = vector.broadcast %547 : vector<1x1xf32> to vector<8x8xf32>
    %559 = arith.subf %540, %558 : vector<8x8xf32>
    %cst_209 = arith.constant 9.99999974E-6 : f32
    %560 = vector.broadcast %cst_209 : f32 to vector<1x1xf32>
    %561 = arith.addf %557, %560 : vector<1x1xf32>
    %562 = math.rsqrt %561 : vector<1x1xf32>
    %563 = vector.broadcast %562 : vector<1x1xf32> to vector<8x8xf32>
    %564 = arith.mulf %559, %563 : vector<8x8xf32>
    %565 = math.exp %564 : vector<8x8xf32>
    %cst_210 = arith.constant dense<0.000000e+00> : vector<8xf32>
    %566 = vector.multi_reduction <add>, %565, %cst_210 [1] : vector<8x8xf32> to vector<8xf32>
    %567 = vector.shape_cast %566 : vector<8xf32> to vector<8x1xf32>
    %568 = vector.broadcast %567 : vector<8x1xf32> to vector<8x8xf32>
    %569 = arith.divf %565, %568 : vector<8x8xf32>
    %cst_211 = arith.constant 2.500000e-01 : f32
    %570 = vector.broadcast %cst_211 : f32 to vector<8x8xf32>
    %571 = arith.mulf %569, %570 : vector<8x8xf32>
    %572 = arith.addf %518, %571 : vector<8x8xf32>
    %573 = arith.truncf %535 : vector<8x8xf32> to vector<8x8xbf16>
    %574 = arith.truncf %569 : vector<8x8xf32> to vector<8x8xbf16>
    %cst_212 = arith.constant dense<0.000000e+00> : vector<8x8xf32>
    %575 = tpu.matmul %573, %574, %cst_212 {dimension_numbers = #tpu.dot_dimension_numbers<[1], [1], [0], [0], [0, 0, 1, 0], [], []>} : vector<8x8xbf16>, vector<8x8xbf16>, vector<8x8xf32> -> vector<8x8xf32>
    %576 = vector.extract_strided_slice %363 {offsets = [16, 0], sizes = [8, 32], strides = [1, 1]} : vector<32x32xbf16> to vector<8x32xbf16>
    %577 = arith.truncf %575 : vector<8x8xf32> to vector<8x8xbf16>
    %cst_213 = arith.constant dense<0.000000e+00> : vector<8x32xf32>
    %578 = tpu.matmul %577, %576, %cst_213 {dimension_numbers = #tpu.dot_dimension_numbers<[1], [0], [0], [1], [0, 0, 1, 1], [], []>} : vector<8x8xbf16>, vector<8x32xbf16>, vector<8x32xf32> -> vector<8x32xf32>
    %579 = arith.addf %525, %578 : vector<8x32xf32>
    %580 = vector.extract_strided_slice %391 {offsets = [0, 24], sizes = [8, 8], strides = [1, 1]} : vector<8x32xf32> to vector<8x8xf32>
    %581 = vector.extract_strided_slice %415 {offsets = [0, 24], sizes = [8, 8], strides = [1, 1]} : vector<8x32xf32> to vector<8x8xf32>
    %c1_214 = arith.constant 1 : index
    %c3_215 = arith.constant 3 : index
    %c0_216 = arith.constant 0 : index
    %c0_217 = arith.constant 0 : index
    %582 = vector.load %arg3[%c1_214, %c3_215, %c0_216, %c0_217] : memref<2x6x8x8xbf16, #tpu.memory_space<vmem>>, vector<1x1x8x8xbf16>
    %583 = vector.shape_cast %582 : vector<1x1x8x8xbf16> to vector<8x8xbf16>
    %584 = arith.truncf %580 : vector<8x8xf32> to vector<8x8xbf16>
    %cst_218 = arith.constant dense<0.000000e+00> : vector<8x8xf32>
    %585 = tpu.matmul %584, %583, %cst_218 {dimension_numbers = #tpu.dot_dimension_numbers<[1], [0], [0], [1], [0, 0, 1, 1], [], []>} : vector<8x8xbf16>, vector<8x8xbf16>, vector<8x8xf32> -> vector<8x8xf32>
    %586 = arith.truncf %581 : vector<8x8xf32> to vector<8x8xbf16>
    %cst_219 = arith.constant dense<0.000000e+00> : vector<8x8xf32>
    %587 = tpu.matmul %586, %359, %cst_219 {dimension_numbers = #tpu.dot_dimension_numbers<[1], [0], [0], [1], [0, 0, 1, 1], [], []>} : vector<8x8xbf16>, vector<8x8xbf16>, vector<8x8xf32> -> vector<8x8xf32>
    %588 = arith.truncf %581 : vector<8x8xf32> to vector<8x8xbf16>
    %cst_220 = arith.constant dense<0.000000e+00> : vector<8x8xf32>
    %589 = tpu.matmul %588, %361, %cst_220 {dimension_numbers = #tpu.dot_dimension_numbers<[1], [0], [0], [1], [0, 0, 1, 1], [], []>} : vector<8x8xbf16>, vector<8x8xbf16>, vector<8x8xf32> -> vector<8x8xf32>
    %590 = arith.truncf %585 : vector<8x8xf32> to vector<8x8xbf16>
    %591 = arith.truncf %587 : vector<8x8xf32> to vector<8x8xbf16>
    %cst_221 = arith.constant dense<0.000000e+00> : vector<8x8xf32>
    %592 = tpu.matmul %590, %591, %cst_221 {dimension_numbers = #tpu.dot_dimension_numbers<[0], [0], [1], [1], [0, 1, 1, 1], [], []>} : vector<8x8xbf16>, vector<8x8xbf16>, vector<8x8xf32> -> vector<8x8xf32>
    %cst_222 = arith.constant 0.176776692 : f32
    %593 = vector.broadcast %cst_222 : f32 to vector<8x8xf32>
    %594 = arith.mulf %592, %593 : vector<8x8xf32>
    %595 = vector.shape_cast %594 : vector<8x8xf32> to vector<1x8x8xf32>
    %cst_223 = arith.constant dense<0.000000e+00> : vector<1xf32>
    %596 = vector.multi_reduction <add>, %595, %cst_223 [1, 2] : vector<1x8x8xf32> to vector<1xf32>
    %597 = vector.shape_cast %596 : vector<1xf32> to vector<1x1x1xf32>
    %598 = vector.extract %597[0, 0, 0] : f32 from vector<1x1x1xf32>
    %599 = vector.broadcast %598 : f32 to vector<1x1xf32>
    %cst_224 = arith.constant 6.400000e+01 : f32
    %600 = vector.broadcast %cst_224 : f32 to vector<1x1xf32>
    %601 = arith.divf %599, %600 : vector<1x1xf32>
    %602 = vector.broadcast %601 : vector<1x1xf32> to vector<8x8xf32>
    %603 = arith.subf %594, %602 : vector<8x8xf32>
    %604 = arith.mulf %603, %603 : vector<8x8xf32>
    %605 = vector.shape_cast %604 : vector<8x8xf32> to vector<1x8x8xf32>
    %cst_225 = arith.constant dense<0.000000e+00> : vector<1xf32>
    %606 = vector.multi_reduction <add>, %605, %cst_225 [1, 2] : vector<1x8x8xf32> to vector<1xf32>
    %607 = vector.shape_cast %606 : vector<1xf32> to vector<1x1x1xf32>
    %608 = vector.extract %607[0, 0, 0] : f32 from vector<1x1x1xf32>
    %609 = vector.broadcast %608 : f32 to vector<1x1xf32>
    %cst_226 = arith.constant 6.400000e+01 : f32
    %610 = vector.broadcast %cst_226 : f32 to vector<1x1xf32>
    %611 = arith.divf %609, %610 : vector<1x1xf32>
    %612 = vector.broadcast %601 : vector<1x1xf32> to vector<8x8xf32>
    %613 = arith.subf %594, %612 : vector<8x8xf32>
    %cst_227 = arith.constant 9.99999974E-6 : f32
    %614 = vector.broadcast %cst_227 : f32 to vector<1x1xf32>
    %615 = arith.addf %611, %614 : vector<1x1xf32>
    %616 = math.rsqrt %615 : vector<1x1xf32>
    %617 = vector.broadcast %616 : vector<1x1xf32> to vector<8x8xf32>
    %618 = arith.mulf %613, %617 : vector<8x8xf32>
    %619 = math.exp %618 : vector<8x8xf32>
    %cst_228 = arith.constant dense<0.000000e+00> : vector<8xf32>
    %620 = vector.multi_reduction <add>, %619, %cst_228 [1] : vector<8x8xf32> to vector<8xf32>
    %621 = vector.shape_cast %620 : vector<8xf32> to vector<8x1xf32>
    %622 = vector.broadcast %621 : vector<8x1xf32> to vector<8x8xf32>
    %623 = arith.divf %619, %622 : vector<8x8xf32>
    %cst_229 = arith.constant 2.500000e-01 : f32
    %624 = vector.broadcast %cst_229 : f32 to vector<8x8xf32>
    %625 = arith.mulf %623, %624 : vector<8x8xf32>
    %626 = arith.addf %572, %625 : vector<8x8xf32>
    %627 = arith.truncf %589 : vector<8x8xf32> to vector<8x8xbf16>
    %628 = arith.truncf %623 : vector<8x8xf32> to vector<8x8xbf16>
    %cst_230 = arith.constant dense<0.000000e+00> : vector<8x8xf32>
    %629 = tpu.matmul %627, %628, %cst_230 {dimension_numbers = #tpu.dot_dimension_numbers<[1], [1], [0], [0], [0, 0, 1, 0], [], []>} : vector<8x8xbf16>, vector<8x8xbf16>, vector<8x8xf32> -> vector<8x8xf32>
    %630 = vector.extract_strided_slice %363 {offsets = [24, 0], sizes = [8, 32], strides = [1, 1]} : vector<32x32xbf16> to vector<8x32xbf16>
    %631 = arith.truncf %629 : vector<8x8xf32> to vector<8x8xbf16>
    %cst_231 = arith.constant dense<0.000000e+00> : vector<8x32xf32>
    %632 = tpu.matmul %631, %630, %cst_231 {dimension_numbers = #tpu.dot_dimension_numbers<[1], [0], [0], [1], [0, 0, 1, 1], [], []>} : vector<8x8xbf16>, vector<8x32xbf16>, vector<8x32xf32> -> vector<8x32xf32>
    %633 = arith.addf %579, %632 : vector<8x32xf32>
    %c0_232 = arith.constant 0 : index
    %c1_233 = arith.constant 1 : index
    %c0_234 = arith.constant 0 : index
    %c0_235 = arith.constant 0 : index
    %634 = vector.load %arg6[%c0_232, %c1_233, %c0_234, %c0_235] : memref<1x2x8x8xf32, #tpu.memory_space<vmem>>, vector<1x1x8x8xf32>
    %635 = vector.shape_cast %634 : vector<1x1x8x8xf32> to vector<8x8xf32>
    %636 = vector.shape_cast %626 : vector<8x8xf32> to vector<1x1x8x8xf32>
    tpu.vector_store %arg6[%c0_232, %c1_233, %c0_234, %c0_235], %636 {strides = array<i32>} : memref<1x2x8x8xf32, #tpu.memory_space<vmem>>, vector<1x1x8x8xf32>,
    %637 = arith.addf %356, %633 : vector<8x32xf32>
    %638 = vector.extract_strided_slice %357 {offsets = [4, 0], sizes = [1, 32], strides = [1, 1]} : vector<8x32xf32> to vector<1x32xf32>
    %639 = vector.extract_strided_slice %357 {offsets = [5, 0], sizes = [1, 32], strides = [1, 1]} : vector<8x32xf32> to vector<1x32xf32>
    %cst_236 = arith.constant dense<0.000000e+00> : vector<8xf32>
    %640 = vector.multi_reduction <add>, %637, %cst_236 [1] : vector<8x32xf32> to vector<8xf32>
    %641 = vector.shape_cast %640 : vector<8xf32> to vector<8x1xf32>
    %cst_237 = arith.constant 3.200000e+01 : f32
    %642 = vector.broadcast %cst_237 : f32 to vector<8x1xf32>
    %643 = arith.divf %641, %642 : vector<8x1xf32>
    %644 = vector.broadcast %643 : vector<8x1xf32> to vector<8x32xf32>
    %645 = arith.subf %637, %644 : vector<8x32xf32>
    %646 = arith.mulf %645, %645 : vector<8x32xf32>
    %cst_238 = arith.constant dense<0.000000e+00> : vector<8xf32>
    %647 = vector.multi_reduction <add>, %646, %cst_238 [1] : vector<8x32xf32> to vector<8xf32>
    %648 = vector.shape_cast %647 : vector<8xf32> to vector<8x1xf32>
    %cst_239 = arith.constant 3.200000e+01 : f32
    %649 = vector.broadcast %cst_239 : f32 to vector<8x1xf32>
    %650 = arith.divf %648, %649 : vector<8x1xf32>
    %651 = vector.broadcast %643 : vector<8x1xf32> to vector<8x32xf32>
    %652 = arith.subf %637, %651 : vector<8x32xf32>
    %cst_240 = arith.constant 9.99999997E-7 : f32
    %653 = vector.broadcast %cst_240 : f32 to vector<8x1xf32>
    %654 = arith.addf %650, %653 : vector<8x1xf32>
    %655 = math.rsqrt %654 : vector<8x1xf32>
    %656 = vector.broadcast %655 : vector<8x1xf32> to vector<8x32xf32>
    %657 = arith.mulf %652, %656 : vector<8x32xf32>
    %658 = vector.broadcast %638 : vector<1x32xf32> to vector<8x32xf32>
    %659 = arith.mulf %657, %658 : vector<8x32xf32>
    %660 = vector.broadcast %639 : vector<1x32xf32> to vector<8x32xf32>
    %661 = arith.addf %659, %660 : vector<8x32xf32>
    %662 = arith.truncf %661 : vector<8x32xf32> to vector<8x32xbf16>
    %cst_241 = arith.constant dense<0.000000e+00> : vector<8x32xf32>
    %663 = tpu.matmul %662, %365, %cst_241 {dimension_numbers = #tpu.dot_dimension_numbers<[1], [0], [0], [1], [0, 0, 1, 1], [], []>} : vector<8x32xbf16>, vector<32x32xbf16>, vector<8x32xf32> -> vector<8x32xf32>
    %664 = vector.extract_strided_slice %357 {offsets = [6, 0], sizes = [1, 32], strides = [1, 1]} : vector<8x32xf32> to vector<1x32xf32>
    %665 = vector.broadcast %664 : vector<1x32xf32> to vector<8x32xf32>
    %666 = arith.addf %663, %665 : vector<8x32xf32>
    %cst_242 = arith.constant 5.000000e-01 : f32
    %667 = vector.broadcast %cst_242 : f32 to vector<8x32xf32>
    %668 = arith.mulf %666, %667 : vector<8x32xf32>
    %cst_243 = arith.constant 0.707106769 : f32
    %669 = vector.broadcast %cst_243 : f32 to vector<8x32xf32>
    %670 = arith.mulf %666, %669 : vector<8x32xf32>
    %671 = math.absf %670 : vector<8x32xf32>
    %cst_244 = arith.constant 0.327591091 : f32
    %672 = vector.broadcast %cst_244 : f32 to vector<8x32xf32>
    %673 = arith.mulf %672, %671 : vector<8x32xf32>
    %cst_245 = arith.constant 1.000000e+00 : f32
    %674 = vector.broadcast %cst_245 : f32 to vector<8x32xf32>
    %675 = arith.addf %674, %673 : vector<8x32xf32>
    %cst_246 = arith.constant 1.000000e+00 : f32
    %676 = vector.broadcast %cst_246 : f32 to vector<8x32xf32>
    %677 = arith.divf %676, %675 : vector<8x32xf32>
    %cst_247 = arith.constant 1.06140542 : f32
    %678 = vector.broadcast %cst_247 : f32 to vector<8x32xf32>
    %679 = arith.mulf %678, %677 : vector<8x32xf32>
    %cst_248 = arith.constant -1.45315206 : f32
    %680 = vector.broadcast %cst_248 : f32 to vector<8x32xf32>
    %681 = arith.addf %679, %680 : vector<8x32xf32>
    %682 = arith.mulf %681, %677 : vector<8x32xf32>
    %cst_249 = arith.constant 1.42141378 : f32
    %683 = vector.broadcast %cst_249 : f32 to vector<8x32xf32>
    %684 = arith.addf %682, %683 : vector<8x32xf32>
    %685 = arith.mulf %684, %677 : vector<8x32xf32>
    %cst_250 = arith.constant -0.284496725 : f32
    %686 = vector.broadcast %cst_250 : f32 to vector<8x32xf32>
    %687 = arith.addf %685, %686 : vector<8x32xf32>
    %688 = arith.mulf %687, %677 : vector<8x32xf32>
    %cst_251 = arith.constant 0.254829586 : f32
    %689 = vector.broadcast %cst_251 : f32 to vector<8x32xf32>
    %690 = arith.addf %688, %689 : vector<8x32xf32>
    %691 = arith.mulf %690, %677 : vector<8x32xf32>
    %cst_252 = arith.constant 0.000000e+00 : f32
    %692 = vector.broadcast %cst_252 : f32 to vector<8x32xf32>
    %693 = arith.subf %692, %671 : vector<8x32xf32>
    %694 = arith.mulf %693, %671 : vector<8x32xf32>
    %695 = math.exp %694 : vector<8x32xf32>
    %696 = arith.mulf %691, %695 : vector<8x32xf32>
    %cst_253 = arith.constant 1.000000e+00 : f32
    %697 = vector.broadcast %cst_253 : f32 to vector<8x32xf32>
    %698 = arith.subf %697, %696 : vector<8x32xf32>
    %cst_254 = arith.constant 0.000000e+00 : f32
    %699 = vector.broadcast %cst_254 : f32 to vector<8x32xf32>
    %700 = arith.cmpf oge, %670, %699 : vector<8x32xf32>
    %cst_255 = arith.constant 0.000000e+00 : f32
    %701 = vector.broadcast %cst_255 : f32 to vector<8x32xf32>
    %702 = arith.subf %701, %698 : vector<8x32xf32>
    %703 = arith.select %700, %698, %702 : vector<8x32xi1>, vector<8x32xf32>
    %cst_256 = arith.constant 1.000000e+00 : f32
    %704 = vector.broadcast %cst_256 : f32 to vector<8x32xf32>
    %705 = arith.addf %704, %703 : vector<8x32xf32>
    %706 = arith.mulf %668, %705 : vector<8x32xf32>
    %707 = arith.truncf %706 : vector<8x32xf32> to vector<8x32xbf16>
    %cst_257 = arith.constant dense<0.000000e+00> : vector<8x32xf32>
    %708 = tpu.matmul %707, %367, %cst_257 {dimension_numbers = #tpu.dot_dimension_numbers<[1], [0], [0], [1], [0, 0, 1, 1], [], []>} : vector<8x32xbf16>, vector<32x32xbf16>, vector<8x32xf32> -> vector<8x32xf32>
    %709 = arith.addf %637, %708 : vector<8x32xf32>
    %710 = vector.extract_strided_slice %357 {offsets = [7, 0], sizes = [1, 32], strides = [1, 1]} : vector<8x32xf32> to vector<1x32xf32>
    %711 = vector.broadcast %710 : vector<1x32xf32> to vector<8x32xf32>
    %712 = arith.addf %709, %711 : vector<8x32xf32>
    %c16 = arith.constant 16 : index
    %c0_258 = arith.constant 0 : index
    %713 = vector.load %arg2[%c16, %c0_258] : memref<18x32xf32, #tpu.memory_space<vmem>>, vector<2x32xf32>
    %714 = vector.extract_strided_slice %713 {offsets = [0, 0], sizes = [1, 32], strides = [1, 1]} : vector<2x32xf32> to vector<1x32xf32>
    %715 = vector.extract_strided_slice %713 {offsets = [1, 0], sizes = [1, 32], strides = [1, 1]} : vector<2x32xf32> to vector<1x32xf32>
    %cst_259 = arith.constant dense<0.000000e+00> : vector<8xf32>
    %716 = vector.multi_reduction <add>, %712, %cst_259 [1] : vector<8x32xf32> to vector<8xf32>
    %717 = vector.shape_cast %716 : vector<8xf32> to vector<8x1xf32>
    %cst_260 = arith.constant 3.200000e+01 : f32
    %718 = vector.broadcast %cst_260 : f32 to vector<8x1xf32>
    %719 = arith.divf %717, %718 : vector<8x1xf32>
    %720 = vector.broadcast %719 : vector<8x1xf32> to vector<8x32xf32>
    %721 = arith.subf %712, %720 : vector<8x32xf32>
    %722 = arith.mulf %721, %721 : vector<8x32xf32>
    %cst_261 = arith.constant dense<0.000000e+00> : vector<8xf32>
    %723 = vector.multi_reduction <add>, %722, %cst_261 [1] : vector<8x32xf32> to vector<8xf32>
    %724 = vector.shape_cast %723 : vector<8xf32> to vector<8x1xf32>
    %cst_262 = arith.constant 3.200000e+01 : f32
    %725 = vector.broadcast %cst_262 : f32 to vector<8x1xf32>
    %726 = arith.divf %724, %725 : vector<8x1xf32>
    %727 = vector.broadcast %719 : vector<8x1xf32> to vector<8x32xf32>
    %728 = arith.subf %712, %727 : vector<8x32xf32>
    %cst_263 = arith.constant 9.99999997E-7 : f32
    %729 = vector.broadcast %cst_263 : f32 to vector<8x1xf32>
    %730 = arith.addf %726, %729 : vector<8x1xf32>
    %731 = math.rsqrt %730 : vector<8x1xf32>
    %732 = vector.broadcast %731 : vector<8x1xf32> to vector<8x32xf32>
    %733 = arith.mulf %728, %732 : vector<8x32xf32>
    %734 = vector.broadcast %714 : vector<1x32xf32> to vector<8x32xf32>
    %735 = arith.mulf %733, %734 : vector<8x32xf32>
    %736 = vector.broadcast %715 : vector<1x32xf32> to vector<8x32xf32>
    %737 = arith.addf %735, %736 : vector<8x32xf32>
    %c0_264 = arith.constant 0 : index
    %c0_265 = arith.constant 0 : index
    %738 = vector.load %arg5[%c0_264, %c0_265] : memref<8x32xf32, #tpu.memory_space<vmem>>, vector<8x32xf32>
    tpu.vector_store %arg5[%c0_264, %c0_265], %737 {strides = array<i32>} : memref<8x32xf32, #tpu.memory_space<vmem>>, vector<8x32xf32>,
    return
  }
  func.func @transform_0(%arg0: i32) -> (i32, i32) {
    %c0_i32 = arith.constant 0 : i32
    %c0_i32_0 = arith.constant 0 : i32
    return %arg0, %c0_i32 : i32, i32
  }
  func.func @transform_1(%arg0: i32) -> (i32, i32) {
    %c0_i32 = arith.constant 0 : i32
    %c0_i32_0 = arith.constant 0 : i32
    %c0_i32_1 = arith.constant 0 : i32
    return %c0_i32, %c0_i32_0 : i32, i32
  }
  func.func @transform_2(%arg0: i32) -> (i32, i32, i32, i32) {
    %c0_i32 = arith.constant 0 : i32
    %c0_i32_0 = arith.constant 0 : i32
    %c0_i32_1 = arith.constant 0 : i32
    %c0_i32_2 = arith.constant 0 : i32
    %c0_i32_3 = arith.constant 0 : i32
    return %c0_i32, %c0_i32_0, %c0_i32_1, %c0_i32_2 : i32, i32, i32, i32
  }
  func.func @transform_3(%arg0: i32) -> (i32, i32, i32, i32) {
    %c0_i32 = arith.constant 0 : i32
    %c0_i32_0 = arith.constant 0 : i32
    %c0_i32_1 = arith.constant 0 : i32
    %c0_i32_2 = arith.constant 0 : i32
    %c0_i32_3 = arith.constant 0 : i32
    return %c0_i32, %c0_i32_0, %c0_i32_1, %c0_i32_2 : i32, i32, i32, i32
  }
  func.func @transform_4(%arg0: i32) -> (i32, i32) {
    %c0_i32 = arith.constant 0 : i32
    %c0_i32_0 = arith.constant 0 : i32
    return %arg0, %c0_i32 : i32, i32
  }
  func.func @transform_5(%arg0: i32) -> (i32, i32, i32, i32) {
    %c0_i32 = arith.constant 0 : i32
    %c0_i32_0 = arith.constant 0 : i32
    %c0_i32_1 = arith.constant 0 : i32
    %c0_i32_2 = arith.constant 0 : i32
    return %arg0, %c0_i32, %c0_i32_0, %c0_i32_1 : i32, i32, i32, i32
  }
}

</mosaic_0001>

<llo_original>
// kernel: run_encoder.1
$region0: #{run_encoder.1}
  #allocation0 [shape = 'u32[]', space=smem, size = 0x4, offset = 0x4, fixed_abs, tag = 'smem constant byte address 0x4 - core index']
  #allocation1 [shape = 'u32[144,128]{1,0:T(1,128)}', space=vmem, size = 0x12000, scoped, tag = 'internal scratch']
  %s0 = inlined_call_operand.hbm [shape: f32[16,32], index: 0, kind: input, shape index: {}]
  %s1 = inlined_call_operand.hbm [shape: f32[18,32], index: 1, kind: input, shape index: {}]
  %s2 = inlined_call_operand.hbm [shape: bf16[2,6,8,8], index: 2, kind: input, shape index: {}]
  %s3 = inlined_call_operand.hbm [shape: bf16[2,3,32,32], index: 3, kind: input, shape index: {}]
  %s4 = inlined_call_operand.hbm [shape: f32[16,32], index: 4, kind: output, shape index: {0}]
  %s5 = inlined_call_operand.vmem [shape: f32[2,2,8,8], index: 5, kind: output, shape index: {1}]
  %6 = xla_tuple %s4, %s5
  %s7 = sld [smem:[#allocation0]]
  $region73: #{run_encoder.1} parent=0
    _
  %s9 = ssub.s32 1, %s7
  %s10 = scalar_select 0, %s9, %s7
  $region1: #{run_encoder.1} parent=0
    #allocation2 [shape = 'u8[8192]{0}', space=vmem, size = 0x2000, scoped, tag = 'input window, operand 0']
    #allocation3 [shape = 's32[2]{0}', space=sflag, size = 0x8, scoped, tag = 'scoped memory for run_encoder.1']
    #allocation4 [shape = 's32[2]{0}', space=sflag, size = 0x8, scoped, tag = 'scoped memory for run_encoder.1']
    #allocation5 [shape = 'u8[12288]{0}', space=vmem, size = 0x3000, scoped, tag = 'input window, operand 1, single buffered']
    #allocation6 [shape = 's32[1]{0}', space=sflag, size = 0x4, scoped, tag = 'scoped memory for run_encoder.1']
    #allocation7 [shape = 'u8[24576]{0}', space=vmem, size = 0x6000, scoped, tag = 'input window, operand 2, single buffered']
    #allocation8 [shape = 'u8[49152]{0}', space=vmem, size = 0xc000, scoped, tag = 'input window, operand 3, single buffered']
    #allocation9 [shape = 's32[1]{0}', space=sflag, size = 0x4, scoped, tag = 'scoped memory for run_encoder.1']
    #allocation10 [shape = 'u8[8192]{0}', space=vmem, size = 0x2000, scoped, tag = 'output window, operand 0']
    %11 = vsyncpa [#allocation3], 0
    %s12 = scalar_lea.sflag [#allocation3], 1
    %13 = vsyncpa %s12, 0
    %14 = vsyncpa [#allocation6], 0
    %15 = vsyncpa [#allocation9], 0
    %16 = vsyncpa [#allocation4], 0
    %s17 = scalar_lea.sflag [#allocation4], 1
    %18 = vsyncpa %s17, 0
    loop: start=0, step=1, limit=4
    $region2: #{run_encoder.1} parent=1 // loop_pre_header
      _
    $region3: #{run_encoder.1} parent=1 // loop_header
      %s20 = sphi 0, %s24
      %p21 = scmp.ge.s32.totalorder %s20, 4
      %s30 = sphi 0, %s32
      %s33 = sphi 0, %s30
      %s34 = sphi 0, %s33
      %s50 = sphi 0, %s34
      %s54 = sphi 0, %s54
      %s56 = sphi 0, %s54
      %s57 = sphi 0, %s56
      %s71 = sphi 0, %s57
      %s75 = sphi 0, %s75
      %s77 = sphi 0, %s75
      %s78 = sphi 0, %s77
      %s92 = sphi 0, %s78
      %s96 = sphi 0, %s96
      %s98 = sphi 0, %s96
      %s99 = sphi 0, %s98
      %s113 = sphi 0, %s99
      %s119 = sphi 0, %s121
      %s122 = sphi 0, %s119
      %s123 = sphi 0, %s122
      %s139 = sphi 0, %s123
      %s145 = sphi 0, %s147
      %s148 = sphi 0, %s145
      %s149 = sphi 0, %s148
      %s165 = sphi 0, %s149
    $region4: #{run_encoder.1} parent=1 // loop_header_branch
      %23 = sbr.rel (%p21) target = $region8
    $region5: #{run_encoder.1} parent=1 // loop_body
      %s25 = ssub.s32 %s20, 1
      %s26 = ssub.s32 %s20, 2
      %s27 = sadd.s32 %s20, 1
      %s28 = ssub.s32 %s20, %s27
      %p29 = scmp.eq.s32.totalorder %s28, 0
      %s31 = sadd.s32 %s30, 1
      %s32 = scalar_select %p29, %s30, %s31
      %p35 = pneg %p29
      %p36 = scmp.eq.s32.totalorder %s20, 1
      %p37 = por %p35, %p36
      %p38 = scmp.ne.s32.totalorder %s30, %s33
      %p39 = scmp.eq.s32.totalorder %s20, 0
      %p40 = por %p38, %p39
      %p41 = scmp.ne.s32.totalorder %s30, %s33
      %p42 = scmp.eq.s32.totalorder %s25, 1
      %p43 = por %p41, %p42
      %p44 = scmp.ne.s32.totalorder %s33, %s34
      %p45 = scmp.eq.s32.totalorder %s25, 0
      %p46 = por %p44, %p45
      %p47 = scmp.ne.s32.totalorder %s33, %s34
      %p48 = scmp.eq.s32.totalorder %s26, 1
      %p49 = por %p47, %p48
      %p51 = scmp.ne.s32.totalorder %s34, %s50
      %p52 = scmp.eq.s32.totalorder %s26, 0
      %p53 = por %p51, %p52
      %s55 = sadd.s32 %s54, 1
      %p58 = scmp.eq.s32.totalorder %s20, 1
      %p59 = scmp.ne.s32.totalorder %s54, %s56
      %p60 = scmp.eq.s32.totalorder %s20, 0
      %p61 = por %p59, %p60
      %p62 = scmp.ne.s32.totalorder %s54, %s56
      %p63 = scmp.eq.s32.totalorder %s25, 1
      %p64 = por %p62, %p63
      %p65 = scmp.ne.s32.totalorder %s56, %s57
      %p66 = scmp.eq.s32.totalorder %s25, 0
      %p67 = por %p65, %p66
      %p68 = scmp.ne.s32.totalorder %s56, %s57
      %p69 = scmp.eq.s32.totalorder %s26, 1
      %p70 = por %p68, %p69
      %p72 = scmp.ne.s32.totalorder %s57, %s71
      %p73 = scmp.eq.s32.totalorder %s26, 0
      %p74 = por %p72, %p73
      %s76 = sadd.s32 %s75, 1
      %p79 = scmp.eq.s32.totalorder %s20, 1
      %p80 = scmp.ne.s32.totalorder %s75, %s77
      %p81 = scmp.eq.s32.totalorder %s20, 0
      %p82 = por %p80, %p81
      %p83 = scmp.ne.s32.totalorder %s75, %s77
      %p84 = scmp.eq.s32.totalorder %s25, 1
      %p85 = por %p83, %p84
      %p86 = scmp.ne.s32.totalorder %s77, %s78
      %p87 = scmp.eq.s32.totalorder %s25, 0
      %p88 = por %p86, %p87
      %p89 = scmp.ne.s32.totalorder %s77, %s78
      %p90 = scmp.eq.s32.totalorder %s26, 1
      %p91 = por %p89, %p90
      %p93 = scmp.ne.s32.totalorder %s78, %s92
      %p94 = scmp.eq.s32.totalorder %s26, 0
      %p95 = por %p93, %p94
      %s97 = sadd.s32 %s96, 1
      %p100 = scmp.eq.s32.totalorder %s20, 1
      %p101 = scmp.ne.s32.totalorder %s96, %s98
      %p102 = scmp.eq.s32.totalorder %s20, 0
      %p103 = por %p101, %p102
      %p104 = scmp.ne.s32.totalorder %s96, %s98
      %p105 = scmp.eq.s32.totalorder %s25, 1
      %p106 = por %p104, %p105
      %p107 = scmp.ne.s32.totalorder %s98, %s99
      %p108 = scmp.eq.s32.totalorder %s25, 0
      %p109 = por %p107, %p108
      %p110 = scmp.ne.s32.totalorder %s98, %s99
      %p111 = scmp.eq.s32.totalorder %s26, 1
      %p112 = por %p110, %p111
      %p114 = scmp.ne.s32.totalorder %s99, %s113
      %p115 = scmp.eq.s32.totalorder %s26, 0
      %p116 = por %p114, %p115
      %s117 = ssub.s32 %s20, %s27
      %p118 = scmp.eq.s32.totalorder %s117, 0
      %s120 = sadd.s32 %s119, 1
      %s121 = scalar_select %p118, %s119, %s120
      %p124 = pneg %p118
      %p125 = scmp.eq.s32.totalorder %s20, 1
      %p126 = por %p124, %p125
      %p127 = scmp.ne.s32.totalorder %s119, %s122
      %p128 = scmp.eq.s32.totalorder %s20, 0
      %p129 = por %p127, %p128
      %p130 = scmp.ne.s32.totalorder %s119, %s122
      %p131 = scmp.eq.s32.totalorder %s25, 1
      %p132 = por %p130, %p131
      %p133 = scmp.ne.s32.totalorder %s122, %s123
      %p134 = scmp.eq.s32.totalorder %s25, 0
      %p135 = por %p133, %p134
      %p136 = scmp.ne.s32.totalorder %s122, %s123
      %p137 = scmp.eq.s32.totalorder %s26, 1
      %p138 = por %p136, %p137
      %p140 = scmp.ne.s32.totalorder %s123, %s139
      %p141 = scmp.eq.s32.totalorder %s26, 0
      %p142 = por %p140, %p141
      %s143 = ssub.s32 %s20, %s27
      %p144 = scmp.eq.s32.totalorder %s143, 0
      %s146 = sadd.s32 %s145, 1
      %s147 = scalar_select %p144, %s145, %s146
      %p150 = pneg %p144
      %p151 = scmp.eq.s32.totalorder %s20, 1
      %p152 = por %p150, %p151
      %p153 = scmp.ne.s32.totalorder %s145, %s148
      %p154 = scmp.eq.s32.totalorder %s20, 0
      %p155 = por %p153, %p154
      %p156 = scmp.ne.s32.totalorder %s145, %s148
      %p157 = scmp.eq.s32.totalorder %s25, 1
      %p158 = por %p156, %p157
      %p159 = scmp.ne.s32.totalorder %s148, %s149
      %p160 = scmp.eq.s32.totalorder %s25, 0
      %p161 = por %p159, %p160
      %p162 = scmp.ne.s32.totalorder %s148, %s149
      %p163 = scmp.eq.s32.totalorder %s26, 1
      %p164 = por %p162, %p163
      %p166 = scmp.ne.s32.totalorder %s149, %s165
      %p167 = scmp.eq.s32.totalorder %s26, 0
      %p168 = por %p166, %p167
      %p169 = scmp.le.s32.totalorder 1, %s20
      %p170 = scmp.lt.s32.totalorder %s20, 3
      %p171 = pnand %p169, %p170
      %p172 = pneg %p171
      // Predicated region
      $region9: #{run_encoder.1} parent=5 // pred_check
        _
      $region10: #{run_encoder.1} parent=5 // pred_check_branch
        %174 = sbr.rel (%p171) target = $region12
      $region11: #{run_encoder.1} parent=5 // pred_region
        %s175 = ssub.s32 %s20, 1
        // Predicated region
        $region13: #{run_encoder.1} parent=11 // pred_check
          %p176 = pneg %p67
        $region14: #{run_encoder.1} parent=11 // pred_check_branch
          %178 = sbr.rel (%p176) target = $region16
        $region15: #{run_encoder.1} parent=11 // pred_region
          %s180 = ssub.s32 384, 384
          %181 = vsyncadd [#allocation6], %s180
          %s182 = sshll.u32 [#allocation5], 4
          %s183 = int_to_ptr.vmem [resolvable:$true] %s182
          %188 = dma.hbm_to_vmem [thread:$0]  %s1, 384, %s183, [#allocation6], 128, 128, 8
        $region16: #{run_encoder.1} parent=11 // pred_fallthru
          _
        // Predicated region
        $region17: #{run_encoder.1} parent=11 // pred_check
          %p189 = pneg %p88
        $region18: #{run_encoder.1} parent=11 // pred_check_branch
          %191 = sbr.rel (%p189) target = $region20
        $region19: #{run_encoder.1} parent=11 // pred_region
          %s193 = ssub.s32 768, 768
          %194 = vsyncadd [#allocation6], %s193
          %s195 = sshll.u32 [#allocation7], 4
          %s196 = int_to_ptr.vmem [resolvable:$true] %s195
          %201 = dma.hbm_to_vmem [thread:$0]  %s2, 768, %s196, [#allocation6], 64, 64, 4
        $region20: #{run_encoder.1} parent=11 // pred_fallthru
          _
        // Predicated region
        $region21: #{run_encoder.1} parent=11 // pred_check
          %p202 = pneg %p109
        $region22: #{run_encoder.1} parent=11 // pred_check_branch
          %204 = sbr.rel (%p202) target = $region24
        $region23: #{run_encoder.1} parent=11 // pred_region
          %s206 = ssub.s32 1536, 1536
          %207 = vsyncadd [#allocation9], %s206
          %s208 = sshll.u32 [#allocation8], 4
          %s209 = int_to_ptr.vmem [resolvable:$true] %s208
          %214 = dma.hbm_to_vmem [thread:$0]  %s3, 1536, %s209, [#allocation9], 64, 64, 4
        $region24: #{run_encoder.1} parent=11 // pred_fallthru
          _
      $region12: #{run_encoder.1} parent=5 // pred_fallthru
        _
      %p215 = scmp.lt.s32.totalorder %s20, 2
      // Predicated region
      $region25: #{run_encoder.1} parent=5 // pred_check
        %p216 = pneg %p215
      $region26: #{run_encoder.1} parent=5 // pred_check_branch
        %218 = sbr.rel (%p216) target = $region28
      $region27: #{run_encoder.1} parent=5 // pred_region
        // Predicated region
        $region29: #{run_encoder.1} parent=27 // pred_check
          %p219 = pneg %p40
        $region30: #{run_encoder.1} parent=27 // pred_check_branch
          %221 = sbr.rel (%p219) target = $region32
        $region31: #{run_encoder.1} parent=27 // pred_region
          %s222 = sand.u32 %s30, 1
          %s223 = scalar_lea.sflag [#allocation3], %s222
          %s224 = sand.u32 %s30, 1
          %s225 = smul.addr %s224, 8
          %s226 = scalar_lea.vmem [#allocation2], %s225
          %s228 = ssub.s32 128, 128
          %229 = vsyncadd %s223, %s228
          %s230 = smul.addr %s20, 128
          %s231 = scalar_lea.hbm %s0, %s230
          %s233 = sshll.u32 %s226, 4
          %s234 = int_to_ptr.vmem [resolvable:$true] %s233
          %236 = dma.hbm_to_vmem [thread:$0]  %s231, 128, %s234, %s223
        $region32: #{run_encoder.1} parent=27 // pred_fallthru
          _
      $region28: #{run_encoder.1} parent=5 // pred_fallthru
        _
      %p237 = scmp.le.s32.totalorder 1, %s20
      %p238 = scmp.lt.s32.totalorder %s20, 3
      %p239 = pnand %p237, %p238
      %p240 = pneg %p239
      // Predicated region
      $region33: #{run_encoder.1} parent=5 // pred_check
        _
      $region34: #{run_encoder.1} parent=5 // pred_check_branch
        %242 = sbr.rel (%p239) target = $region36
      $region35: #{run_encoder.1} parent=5 // pred_region
        %s243 = ssub.s32 %s20, 1
        %s244 = sand.u32 %s33, 1
        %s245 = scalar_lea.sflag [#allocation3], %s244
        %s246 = sand.u32 %s33, 1
        %s247 = smul.addr %s246, 8
        %s248 = scalar_lea.vmem [#allocation2], %s247
        // Predicated region
        $region37: #{run_encoder.1} parent=35 // pred_check
          %p249 = pneg %p46
        $region38: #{run_encoder.1} parent=35 // pred_check_branch
          %251 = sbr.rel (%p249) target = $region40
        $region39: #{run_encoder.1} parent=35 // pred_region
          %252 = dma.done %s245, 128
        $region40: #{run_encoder.1} parent=35 // pred_fallthru
          _
        // Predicated region
        $region41: #{run_encoder.1} parent=35 // pred_check
          %p253 = pneg %p67
        $region42: #{run_encoder.1} parent=35 // pred_check_branch
          %255 = sbr.rel (%p253) target = $region44
        $region43: #{run_encoder.1} parent=35 // pred_region
          %256 = dma.done [#allocation6], 384
        $region44: #{run_encoder.1} parent=35 // pred_fallthru
          _
        // Predicated region
        $region45: #{run_encoder.1} parent=35 // pred_check
          %p257 = pneg %p88
        $region46: #{run_encoder.1} parent=35 // pred_check_branch
          %259 = sbr.rel (%p257) target = $region48
        $region47: #{run_encoder.1} parent=35 // pred_region
          %260 = dma.done [#allocation6], 768
        $region48: #{run_encoder.1} parent=35 // pred_fallthru
          _
        // Predicated region
        $region49: #{run_encoder.1} parent=35 // pred_check
          %p261 = pneg %p109
        $region50: #{run_encoder.1} parent=35 // pred_check_branch
          %263 = sbr.rel (%p261) target = $region52
        $region51: #{run_encoder.1} parent=35 // pred_region
          %264 = dma.done [#allocation9], 1536
        $region52: #{run_encoder.1} parent=35 // pred_fallthru
          _
        %s265 = sand.u32 %s33, 1
        %s266 = scalar_lea.sflag [#allocation3], %s265
        %s267 = sand.u32 %s33, 1
        %s268 = smul.addr %s267, 8
        %s269 = scalar_lea.vmem [#allocation2], %s268
        %p270 = pneg %p46
        %p271 = pneg %p43
        %p272 = pneg %p67
        %p273 = pneg %p64
        %p274 = pneg %p88
        %p275 = pneg %p85
        %p276 = pneg %p109
        %p277 = pneg %p106
        %p278 = pneg %p135
        %p279 = pneg %p132
        %s280 = sand.u32 %s122, 1
        %s281 = scalar_lea.sflag [#allocation4], %s280
        %s282 = sand.u32 %s122, 1
        %s283 = smul.addr %s282, 8
        %s284 = scalar_lea.vmem [#allocation10], %s283
        %p285 = pneg %p161
        %p286 = pneg %p158
        %p287 = scmp.lt.s32.totalorder %s25, 1
        %s288 = scalar_select %p287, %s25, 1
        %s289 = smul.addr %s288, 2
        %s290 = smul.addr %s289, 8
        %s291 = scalar_lea.vmem %s5, %s290
        %p292 = scmp.lt.s32.totalorder %s25, 1
        %s293 = scalar_select %p292, %s25, 1
        %s294 = smul.addr %s293, 2
        %s295 = smul.addr %s294, 8
        %s296 = scalar_lea.vmem %s5, %s295
        %v298 = vld [vmem:[%s248] sm:$0xff]
        %v299 = vld [vmem:[#allocation5] sm:$0xff]
        %s300 = scalar_lea.vmem [#allocation7], 16
        %v301 = vld [vmem:[%s300] sm:$0xf]
        %s302 = scalar_lea.vmem [#allocation7], 20
        %v303 = vld [vmem:[%s302] sm:$0xf]
        %v304 = vld [vmem:[#allocation8] sm:$0xf]
        %v305 = vld [vmem:[#allocation8 + $0x4] sm:$0xf]
        %v306 = vld [vmem:[#allocation8 + $0x8] sm:$0xf]
        %v307 = vld [vmem:[#allocation8 + $0xc] sm:$0xf]
        %s308 = scalar_lea.vmem [#allocation8], 16
        %v309 = vld [vmem:[%s308] sm:$0xf]
        %v310 = vld [vmem:[%s308 + $0x4] sm:$0xf]
        %v311 = vld [vmem:[%s308 + $0x8] sm:$0xf]
        %v312 = vld [vmem:[%s308 + $0xc] sm:$0xf]
        %s313 = scalar_lea.vmem [#allocation8], 32
        %v314 = vld [vmem:[%s313] sm:$0xf]
        %v315 = vld [vmem:[%s313 + $0x4] sm:$0xf]
        %v316 = vld [vmem:[%s313 + $0x8] sm:$0xf]
        %v317 = vld [vmem:[%s313 + $0xc] sm:$0xf]
        %vm318 = vcmask 261120
        %v319 = vsel %vm318, %v298, 0.0
        %320 = vadd.xlane.f32.xlu0 %v319
        %v321 = vpop.xlane.xlu0 %320
        %v322 = vrcp.pop 32.0
        %v323 = vmul.f32 %v321, %v322
        %v324 = vsub.f32 %v298, %v323
        %v325 = vmul.f32 %v324, %v324
        %v326 = vsel %vm318, %v325, 0.0
        %327 = vadd.xlane.f32.xlu0 %v326
        %v328 = vpop.xlane.xlu0 %327
        %v329 = vmul.f32 %v328, %v322
        %v330 = vadd.f32 %v329, 1e-06
        %v331 = vrsqrt.pop %v330
        %v332 = vmul.f32 %v324, %v331
        %v333 = vlaneseq
        %v334 = vshrl.u32 %v333, 7
        %v335 = vsub.s32 0, %v334
        %v336 = vrot.slane %v299, %v335
        %v337 = vmul.f32 %v332, %v336
        %v338 = vlaneseq
        %v339 = vshrl.u32 %v338, 7
        %v340 = vsub.s32 1, %v339
        %v341 = vrot.slane %v299, %v340
        %v342 = vadd.f32 %v337, %v341
        %v343 = vlaneseq
        %v344 = vshrl.u32 %v343, 7
        %v345 = vsub.s32 2, %v344
        %v346 = vrot.slane %v299, %v345
        %v347 = vmul.f32 %v332, %v346
        %v348 = vlaneseq
        %v349 = vshrl.u32 %v348, 7
        %v350 = vsub.s32 3, %v349
        %v351 = vrot.slane %v299, %v350
        %v352 = vadd.f32 %v347, %v351
        %v353 = vld [vmem:[#allocation7] sm:$0xf]
        %v354 = vpack.c.bf16 %v342, %v342
        %vm355 = vcmask 64512
        %v357 = vsel %vm355, %v354, 0
        %vm359 = vcmask 1043456
        %v361 = vsel %vm359, %v353, 0
        %363 = vmatprep.subr.bf16.mxu0 0
        %364 = vmatpush1.bf16.msra.mxu0 %v361
        %365 = vmatprep.subr.bf16.mxu0 0
        %366 = vmatpush1.bf16.msra.mxu0 0
        %367 = vmatprep.subr.bf16.mxu0 0
        %368 = vmatpush1.bf16.msra.mxu0 0
        %369 = vmatprep.subr.bf16.mxu0 0
        %370 = vmatpush1.bf16.msra.mxu0 0
        %371 = vmatprep.subr.bf16.mxu0 0
        %372 = vmatpush1.bf16.msra.mxu0 0
        %373 = vmatprep.subr.bf16.mxu0 0
        %374 = vmatpush1.bf16.msra.mxu0 0
        %375 = vmatprep.subr.bf16.mxu0 0
        %376 = vmatpush1.bf16.msra.mxu0 0
        %377 = vmatprep.subr.bf16.mxu0 0
        %378 = vmatpush1.bf16.msra.mxu0 0
        %379 = vmatprep.subr.bf16.mxu0 0
        %380 = vmatpush1.bf16.msra.mxu0 0
        %381 = vmatprep.subr.bf16.mxu0 0
        %382 = vmatpush1.bf16.msra.mxu0 0
        %383 = vmatprep.subr.bf16.mxu0 0
        %384 = vmatpush1.bf16.msra.mxu0 0
        %385 = vmatprep.subr.bf16.mxu0 0
        %386 = vmatpush1.bf16.msra.mxu0 0
        %387 = vmatprep.subr.bf16.mxu0 0
        %388 = vmatpush1.bf16.msra.mxu0 0
        %389 = vmatprep.subr.bf16.mxu0 0
        %390 = vmatpush1.bf16.msra.mxu0 0
        %391 = vmatprep.subr.bf16.mxu0 0
        %392 = vmatpush1.bf16.msra.mxu0 0
        %393 = vmatprep.subr.bf16.mxu0 0
        %394 = vmatpush1.bf16.msra.mxu0 0
        %395 = vmatprep.mubr.bf16.mxu0 0
        %396 = vmatmul.mubr.bf16.gmra.mrb[0].mxu0 %v357
        %v397 = vpop.f32.mrb[0].mxu0
        %v398 = vadd.f32 0.0, %v397
        %v399 = vpop.f32.mrb[0].mxu0
        %v400 = vpop.f32.mrb[0].mxu0
        %v401 = vpop.f32.mrb[0].mxu0
        %402 = vdwg.mxu0
        %v403 = vpack.c.bf16 %v352, %v352
        %v405 = vsel %vm355, %v403, 0
        %v408 = vsel %vm359, %v301, 0
        %410 = vmatprep.subr.bf16.mxu0 0
        %411 = vmatpush1.bf16.msra.mxu0 %v408
        %412 = vmatprep.subr.bf16.mxu0 0
        %413 = vmatpush1.bf16.msra.mxu0 0
        %414 = vmatprep.subr.bf16.mxu0 0
        %415 = vmatpush1.bf16.msra.mxu0 0
        %416 = vmatprep.subr.bf16.mxu0 0
        %417 = vmatpush1.bf16.msra.mxu0 0
        %418 = vmatprep.subr.bf16.mxu0 0
        %419 = vmatpush1.bf16.msra.mxu0 0
        %420 = vmatprep.subr.bf16.mxu0 0
        %421 = vmatpush1.bf16.msra.mxu0 0
        %422 = vmatprep.subr.bf16.mxu0 0
        %423 = vmatpush1.bf16.msra.mxu0 0
        %424 = vmatprep.subr.bf16.mxu0 0
        %425 = vmatpush1.bf16.msra.mxu0 0
        %426 = vmatprep.subr.bf16.mxu0 0
        %427 = vmatpush1.bf16.msra.mxu0 0
        %428 = vmatprep.subr.bf16.mxu0 0
        %429 = vmatpush1.bf16.msra.mxu0 0
        %430 = vmatprep.subr.bf16.mxu0 0
        %431 = vmatpush1.bf16.msra.mxu0 0
        %432 = vmatprep.subr.bf16.mxu0 0
        %433 = vmatpush1.bf16.msra.mxu0 0
        %434 = vmatprep.subr.bf16.mxu0 0
        %435 = vmatpush1.bf16.msra.mxu0 0
        %436 = vmatprep.subr.bf16.mxu0 0
        %437 = vmatpush1.bf16.msra.mxu0 0
        %438 = vmatprep.subr.bf16.mxu0 0
        %439 = vmatpush1.bf16.msra.mxu0 0
        %440 = vmatprep.subr.bf16.mxu0 0
        %441 = vmatpush1.bf16.msra.mxu0 0
        %442 = vmatprep.mubr.bf16.mxu0 0
        %443 = vmatmul.mubr.bf16.gmra.mrb[0].mxu0 %v405
        %v444 = vpop.f32.mrb[0].mxu0
        %v445 = vadd.f32 0.0, %v444
        %v446 = vpop.f32.mrb[0].mxu0
        %v447 = vpop.f32.mrb[0].mxu0
        %v448 = vpop.f32.mrb[0].mxu0
        %449 = vdwg.mxu0
        %v451 = vsel %vm359, %v303, 0
        %453 = vmatprep.subr.bf16.mxu0 0
        %454 = vmatpush1.bf16.msra.mxu0 %v451
        %455 = vmatprep.subr.bf16.mxu0 0
        %456 = vmatpush1.bf16.msra.mxu0 0
        %457 = vmatprep.subr.bf16.mxu0 0
        %458 = vmatpush1.bf16.msra.mxu0 0
        %459 = vmatprep.subr.bf16.mxu0 0
        %460 = vmatpush1.bf16.msra.mxu0 0
        %461 = vmatprep.subr.bf16.mxu0 0
        %462 = vmatpush1.bf16.msra.mxu0 0
        %463 = vmatprep.subr.bf16.mxu0 0
        %464 = vmatpush1.bf16.msra.mxu0 0
        %465 = vmatprep.subr.bf16.mxu0 0
        %466 = vmatpush1.bf16.msra.mxu0 0
        %467 = vmatprep.subr.bf16.mxu0 0
        %468 = vmatpush1.bf16.msra.mxu0 0
        %469 = vmatprep.subr.bf16.mxu0 0
        %470 = vmatpush1.bf16.msra.mxu0 0
        %471 = vmatprep.subr.bf16.mxu0 0
        %472 = vmatpush1.bf16.msra.mxu0 0
        %473 = vmatprep.subr.bf16.mxu0 0
        %474 = vmatpush1.bf16.msra.mxu0 0
        %475 = vmatprep.subr.bf16.mxu0 0
        %476 = vmatpush1.bf16.msra.mxu0 0
        %477 = vmatprep.subr.bf16.mxu0 0
        %478 = vmatpush1.bf16.msra.mxu0 0
        %479 = vmatprep.subr.bf16.mxu0 0
        %480 = vmatpush1.bf16.msra.mxu0 0
        %481 = vmatprep.subr.bf16.mxu0 0
        %482 = vmatpush1.bf16.msra.mxu0 0
        %483 = vmatprep.subr.bf16.mxu0 0
        %484 = vmatpush1.bf16.msra.mxu0 0
        %485 = vmatprep.mubr.bf16.mxu0 0
        %486 = vmatmul.mubr.bf16.gmra.mrb[0].mxu0 %v405
        %v487 = vpop.f32.mrb[0].mxu0
        %v488 = vadd.f32 0.0, %v487
        %v489 = vpop.f32.mrb[0].mxu0
        %v490 = vpop.f32.mrb[0].mxu0
        %v491 = vpop.f32.mrb[0].mxu0
        %492 = vdwg.mxu0
        %v493 = vpack.c.bf16 %v398, %v398
        %v494 = vpack.c.bf16 %v445, %v445
        %495 = vxpose.xlu0.c.b16.start [1/8] %v493, 128
        %496 = vxpose.xlu0.c.b16.cont [2/8] 0, 128
        %497 = vxpose.xlu0.c.b16.cont [3/8] 0, 128
        %498 = vxpose.xlu0.c.b16.cont [4/8] 0, 128
        %499 = vxpose.xlu0.c.b16.cont [5/8] 0, 128
        %500 = vxpose.xlu0.c.b16.cont [6/8] 0, 128
        %501 = vxpose.xlu0.c.b16.cont [7/8] 0, 128
        %502 = vxpose.xlu0.c.b16.end [8/8] 0, 128
        %v503 = vpop.trf.xlu0
        %v504 = vpop.trf.xlu0
        %v505 = vpop.trf.xlu0
        %v506 = vpop.trf.xlu0
        %v507 = vpop.trf.xlu0
        %v508 = vpop.trf.xlu0
        %v509 = vpop.trf.xlu0
        %v510 = vpop.trf.xlu0
        %v512 = vsel %vm355, %v503, 0
        %v515 = vsel %vm359, %v494, 0
        %517 = vmatprep.subr.bf16.mxu0 0
        %518 = vmatpush1.bf16.msra.mxu0 %v515
        %519 = vmatprep.subr.bf16.mxu0 0
        %520 = vmatpush1.bf16.msra.mxu0 0
        %521 = vmatprep.subr.bf16.mxu0 0
        %522 = vmatpush1.bf16.msra.mxu0 0
        %523 = vmatprep.subr.bf16.mxu0 0
        %524 = vmatpush1.bf16.msra.mxu0 0
        %525 = vmatprep.subr.bf16.mxu0 0
        %526 = vmatpush1.bf16.msra.mxu0 0
        %527 = vmatprep.subr.bf16.mxu0 0
        %528 = vmatpush1.bf16.msra.mxu0 0
        %529 = vmatprep.subr.bf16.mxu0 0
        %530 = vmatpush1.bf16.msra.mxu0 0
        %531 = vmatprep.subr.bf16.mxu0 0
        %532 = vmatpush1.bf16.msra.mxu0 0
        %533 = vmatprep.subr.bf16.mxu0 0
        %534 = vmatpush1.bf16.msra.mxu0 0
        %535 = vmatprep.subr.bf16.mxu0 0
        %536 = vmatpush1.bf16.msra.mxu0 0
        %537 = vmatprep.subr.bf16.mxu0 0
        %538 = vmatpush1.bf16.msra.mxu0 0
        %539 = vmatprep.subr.bf16.mxu0 0
        %540 = vmatpush1.bf16.msra.mxu0 0
        %541 = vmatprep.subr.bf16.mxu0 0
        %542 = vmatpush1.bf16.msra.mxu0 0
        %543 = vmatprep.subr.bf16.mxu0 0
        %544 = vmatpush1.bf16.msra.mxu0 0
        %545 = vmatprep.subr.bf16.mxu0 0
        %546 = vmatpush1.bf16.msra.mxu0 0
        %547 = vmatprep.subr.bf16.mxu0 0
        %548 = vmatpush1.bf16.msra.mxu0 0
        %549 = vmatprep.mubr.bf16.mxu0 0
        %550 = vmatmul.mubr.bf16.gmra.mrb[0].mxu0 %v512
        %v551 = vpop.f32.mrb[0].mxu0
        %v552 = vadd.f32 0.0, %v551
        %v553 = vpop.f32.mrb[0].mxu0
        %v554 = vpop.f32.mrb[0].mxu0
        %v555 = vpop.f32.mrb[0].mxu0
        %556 = vdwg.mxu0
        %v557 = vmul.f32 %v552, 0.17677669
        %v558 = vsel %vm355, %v557, 0.0
        %559 = vadd.xlane.f32.xlu0 %v558
        %v560 = vpop.xlane.xlu0 %559
        %v561 = vrot.slane %v560, 4
        %v562 = vadd.f32 %v560, %v561
        %v563 = vrot.slane %v562, 2
        %v564 = vadd.f32 %v562, %v563
        %v565 = vrot.slane %v564, 1
        %v566 = vadd.f32 %v564, %v565
        %s567 = vtos %v566
        %v568 = vstv %s567
        %v569 = vrcp.pop 64.0
        %v570 = vmul.f32 %v568, %v569
        %v571 = vsub.f32 %v557, %v570
        %v572 = vmul.f32 %v571, %v571
        %v573 = vsel %vm355, %v572, 0.0
        %574 = vadd.xlane.f32.xlu0 %v573
        %v575 = vpop.xlane.xlu0 %574
        %v576 = vrot.slane %v575, 4
        %v577 = vadd.f32 %v575, %v576
        %v578 = vrot.slane %v577, 2
        %v579 = vadd.f32 %v577, %v578
        %v580 = vrot.slane %v579, 1
        %v581 = vadd.f32 %v579, %v580
        %s582 = vtos %v581
        %v583 = vstv %s582
        %v584 = vmul.f32 %v583, %v569
        %v585 = vadd.f32 %v584, 1e-05
        %v586 = vrsqrt.pop %v585
        %v587 = vmul.f32 %v571, %v586
        %v588 = vmul.f32 %v587, 1.442695
        %v589 = vpow.pop %v588
        %v590 = vsel %vm355, %v589, 0.0
        %591 = vadd.xlane.f32.xlu0 %v590
        %v592 = vpop.xlane.xlu0 %591
        %v593 = vrcp.pop %v592
        %v594 = vmul.f32 %v589, %v593
        %v595 = vmul.f32 %v594, 0.25
        %v596 = vadd.f32 %v595, 0.0
        %v597 = vpack.c.bf16 %v488, %v488
        %v598 = vpack.c.bf16 %v594, %v594
        %v600 = vsel %vm355, %v597, 0
        %v603 = vsel %vm355, %v598, 0
        %605 = vmatprep.subr.bf16.mxu0 0
        %606 = vmatpush1.bf16.xpose.msra.mxu0 %v603
        %607 = vmatprep.subr.bf16.mxu0 0
        %608 = vmatpush1.bf16.xpose.msra.mxu0 0
        %609 = vmatprep.subr.bf16.mxu0 0
        %610 = vmatpush1.bf16.xpose.msra.mxu0 0
        %611 = vmatprep.subr.bf16.mxu0 0
        %612 = vmatpush1.bf16.xpose.msra.mxu0 0
        %613 = vmatprep.subr.bf16.mxu0 0
        %614 = vmatpush1.bf16.xpose.msra.mxu0 0
        %615 = vmatprep.subr.bf16.mxu0 0
        %616 = vmatpush1.bf16.xpose.msra.mxu0 0
        %617 = vmatprep.subr.bf16.mxu0 0
        %618 = vmatpush1.bf16.xpose.msra.mxu0 0
        %619 = vmatprep.subr.bf16.mxu0 0
        %620 = vmatpush1.bf16.xpose.msra.mxu0 0
        %621 = vmatprep.subr.bf16.mxu0 0
        %622 = vmatpush1.bf16.xpose.msra.mxu0 0
        %623 = vmatprep.subr.bf16.mxu0 0
        %624 = vmatpush1.bf16.xpose.msra.mxu0 0
        %625 = vmatprep.subr.bf16.mxu0 0
        %626 = vmatpush1.bf16.xpose.msra.mxu0 0
        %627 = vmatprep.subr.bf16.mxu0 0
        %628 = vmatpush1.bf16.xpose.msra.mxu0 0
        %629 = vmatprep.subr.bf16.mxu0 0
        %630 = vmatpush1.bf16.xpose.msra.mxu0 0
        %631 = vmatprep.subr.bf16.mxu0 0
        %632 = vmatpush1.bf16.xpose.msra.mxu0 0
        %633 = vmatprep.subr.bf16.mxu0 0
        %634 = vmatpush1.bf16.xpose.msra.mxu0 0
        %635 = vmatprep.subr.bf16.mxu0 0
        %636 = vmatpush1.bf16.xpose.msra.mxu0 0
        %637 = vmatprep.mubr.bf16.mxu0 0
        %638 = vmatmul.mubr.bf16.gmra.mrb[0].mxu0 %v600
        %v639 = vpop.f32.mrb[0].mxu0
        %v640 = vadd.f32 0.0, %v639
        %v641 = vpop.f32.mrb[0].mxu0
        %v642 = vpop.f32.mrb[0].mxu0
        %v643 = vpop.f32.mrb[0].mxu0
        %644 = vdwg.mxu0
        %v645 = vpack.c.bf16 %v640, %v640
        %s646 = scalar_lea.vmem [#allocation7], 4
        %v647 = vld [vmem:[%s646] sm:$0xf]
        %649 = vrot.lane.b32.xlu0 %v354, 120
        %v650 = vpop.permute.xlu0 %649
        %v652 = vsel %vm355, %v650, 0
        %v655 = vsel %vm359, %v647, 0
        %657 = vmatprep.subr.bf16.mxu0 0
        %658 = vmatpush1.bf16.msra.mxu0 %v655
        %659 = vmatprep.subr.bf16.mxu0 0
        %660 = vmatpush1.bf16.msra.mxu0 0
        %661 = vmatprep.subr.bf16.mxu0 0
        %662 = vmatpush1.bf16.msra.mxu0 0
        %663 = vmatprep.subr.bf16.mxu0 0
        %664 = vmatpush1.bf16.msra.mxu0 0
        %665 = vmatprep.subr.bf16.mxu0 0
        %666 = vmatpush1.bf16.msra.mxu0 0
        %667 = vmatprep.subr.bf16.mxu0 0
        %668 = vmatpush1.bf16.msra.mxu0 0
        %669 = vmatprep.subr.bf16.mxu0 0
        %670 = vmatpush1.bf16.msra.mxu0 0
        %671 = vmatprep.subr.bf16.mxu0 0
        %672 = vmatpush1.bf16.msra.mxu0 0
        %673 = vmatprep.subr.bf16.mxu0 0
        %674 = vmatpush1.bf16.msra.mxu0 0
        %675 = vmatprep.subr.bf16.mxu0 0
        %676 = vmatpush1.bf16.msra.mxu0 0
        %677 = vmatprep.subr.bf16.mxu0 0
        %678 = vmatpush1.bf16.msra.mxu0 0
        %679 = vmatprep.subr.bf16.mxu0 0
        %680 = vmatpush1.bf16.msra.mxu0 0
        %681 = vmatprep.subr.bf16.mxu0 0
        %682 = vmatpush1.bf16.msra.mxu0 0
        %683 = vmatprep.subr.bf16.mxu0 0
        %684 = vmatpush1.bf16.msra.mxu0 0
        %685 = vmatprep.subr.bf16.mxu0 0
        %686 = vmatpush1.bf16.msra.mxu0 0
        %687 = vmatprep.subr.bf16.mxu0 0
        %688 = vmatpush1.bf16.msra.mxu0 0
        %689 = vmatprep.mubr.bf16.mxu0 0
        %690 = vmatmul.mubr.bf16.gmra.mrb[0].mxu0 %v652
        %v691 = vpop.f32.mrb[0].mxu0
        %v692 = vadd.f32 0.0, %v691
        %v693 = vpop.f32.mrb[0].mxu0
        %v694 = vpop.f32.mrb[0].mxu0
        %v695 = vpop.f32.mrb[0].mxu0
        %696 = vdwg.mxu0
        %698 = vrot.lane.b32.xlu0 %v403, 120
        %v699 = vpop.permute.xlu0 %698
        %v701 = vsel %vm355, %v699, 0
        %703 = vmatprep.subr.bf16.mxu0 0
        %704 = vmatpush1.bf16.msra.mxu0 %v408
        %705 = vmatprep.subr.bf16.mxu0 0
        %706 = vmatpush1.bf16.msra.mxu0 0
        %707 = vmatprep.subr.bf16.mxu0 0
        %708 = vmatpush1.bf16.msra.mxu0 0
        %709 = vmatprep.subr.bf16.mxu0 0
        %710 = vmatpush1.bf16.msra.mxu0 0
        %711 = vmatprep.subr.bf16.mxu0 0
        %712 = vmatpush1.bf16.msra.mxu0 0
        %713 = vmatprep.subr.bf16.mxu0 0
        %714 = vmatpush1.bf16.msra.mxu0 0
        %715 = vmatprep.subr.bf16.mxu0 0
        %716 = vmatpush1.bf16.msra.mxu0 0
        %717 = vmatprep.subr.bf16.mxu0 0
        %718 = vmatpush1.bf16.msra.mxu0 0
        %719 = vmatprep.subr.bf16.mxu0 0
        %720 = vmatpush1.bf16.msra.mxu0 0
        %721 = vmatprep.subr.bf16.mxu0 0
        %722 = vmatpush1.bf16.msra.mxu0 0
        %723 = vmatprep.subr.bf16.mxu0 0
        %724 = vmatpush1.bf16.msra.mxu0 0
        %725 = vmatprep.subr.bf16.mxu0 0
        %726 = vmatpush1.bf16.msra.mxu0 0
        %727 = vmatprep.subr.bf16.mxu0 0
        %728 = vmatpush1.bf16.msra.mxu0 0
        %729 = vmatprep.subr.bf16.mxu0 0
        %730 = vmatpush1.bf16.msra.mxu0 0
        %731 = vmatprep.subr.bf16.mxu0 0
        %732 = vmatpush1.bf16.msra.mxu0 0
        %733 = vmatprep.subr.bf16.mxu0 0
        %734 = vmatpush1.bf16.msra.mxu0 0
        %735 = vmatprep.mubr.bf16.mxu0 0
        %736 = vmatmul.mubr.bf16.gmra.mrb[0].mxu0 %v701
        %v737 = vpop.f32.mrb[0].mxu0
        %v738 = vadd.f32 0.0, %v737
        %v739 = vpop.f32.mrb[0].mxu0
        %v740 = vpop.f32.mrb[0].mxu0
        %v741 = vpop.f32.mrb[0].mxu0
        %742 = vdwg.mxu0
        %743 = vmatprep.subr.bf16.mxu0 0
        %744 = vmatpush1.bf16.msra.mxu0 %v451
        %745 = vmatprep.subr.bf16.mxu0 0
        %746 = vmatpush1.bf16.msra.mxu0 0
        %747 = vmatprep.subr.bf16.mxu0 0
        %748 = vmatpush1.bf16.msra.mxu0 0
        %749 = vmatprep.subr.bf16.mxu0 0
        %750 = vmatpush1.bf16.msra.mxu0 0
        %751 = vmatprep.subr.bf16.mxu0 0
        %752 = vmatpush1.bf16.msra.mxu0 0
        %753 = vmatprep.subr.bf16.mxu0 0
        %754 = vmatpush1.bf16.msra.mxu0 0
        %755 = vmatprep.subr.bf16.mxu0 0
        %756 = vmatpush1.bf16.msra.mxu0 0
        %757 = vmatprep.subr.bf16.mxu0 0
        %758 = vmatpush1.bf16.msra.mxu0 0
        %759 = vmatprep.subr.bf16.mxu0 0
        %760 = vmatpush1.bf16.msra.mxu0 0
        %761 = vmatprep.subr.bf16.mxu0 0
        %762 = vmatpush1.bf16.msra.mxu0 0
        %763 = vmatprep.subr.bf16.mxu0 0
        %764 = vmatpush1.bf16.msra.mxu0 0
        %765 = vmatprep.subr.bf16.mxu0 0
        %766 = vmatpush1.bf16.msra.mxu0 0
        %767 = vmatprep.subr.bf16.mxu0 0
        %768 = vmatpush1.bf16.msra.mxu0 0
        %769 = vmatprep.subr.bf16.mxu0 0
        %770 = vmatpush1.bf16.msra.mxu0 0
        %771 = vmatprep.subr.bf16.mxu0 0
        %772 = vmatpush1.bf16.msra.mxu0 0
        %773 = vmatprep.subr.bf16.mxu0 0
        %774 = vmatpush1.bf16.msra.mxu0 0
        %775 = vmatprep.mubr.bf16.mxu0 0
        %776 = vmatmul.mubr.bf16.gmra.mrb[0].mxu0 %v701
        %v777 = vpop.f32.mrb[0].mxu0
        %v778 = vadd.f32 0.0, %v777
        %v779 = vpop.f32.mrb[0].mxu0
        %v780 = vpop.f32.mrb[0].mxu0
        %v781 = vpop.f32.mrb[0].mxu0
        %782 = vdwg.mxu0
        %v783 = vpack.c.bf16 %v692, %v692
        %v784 = vpack.c.bf16 %v738, %v738
        %785 = vxpose.xlu0.c.b16.start [1/8] %v783, 128
        %786 = vxpose.xlu0.c.b16.cont [2/8] 0, 128
        %787 = vxpose.xlu0.c.b16.cont [3/8] 0, 128
        %788 = vxpose.xlu0.c.b16.cont [4/8] 0, 128
        %789 = vxpose.xlu0.c.b16.cont [5/8] 0, 128
        %790 = vxpose.xlu0.c.b16.cont [6/8] 0, 128
        %791 = vxpose.xlu0.c.b16.cont [7/8] 0, 128
        %792 = vxpose.xlu0.c.b16.end [8/8] 0, 128
        %v793 = vpop.trf.xlu0
        %v794 = vpop.trf.xlu0
        %v795 = vpop.trf.xlu0
        %v796 = vpop.trf.xlu0
        %v797 = vpop.trf.xlu0
        %v798 = vpop.trf.xlu0
        %v799 = vpop.trf.xlu0
        %v800 = vpop.trf.xlu0
        %v802 = vsel %vm355, %v793, 0
        %v805 = vsel %vm359, %v784, 0
        %807 = vmatprep.subr.bf16.mxu0 0
        %808 = vmatpush1.bf16.msra.mxu0 %v805
        %809 = vmatprep.subr.bf16.mxu0 0
        %810 = vmatpush1.bf16.msra.mxu0 0
        %811 = vmatprep.subr.bf16.mxu0 0
        %812 = vmatpush1.bf16.msra.mxu0 0
        %813 = vmatprep.subr.bf16.mxu0 0
        %814 = vmatpush1.bf16.msra.mxu0 0
        %815 = vmatprep.subr.bf16.mxu0 0
        %816 = vmatpush1.bf16.msra.mxu0 0
        %817 = vmatprep.subr.bf16.mxu0 0
        %818 = vmatpush1.bf16.msra.mxu0 0
        %819 = vmatprep.subr.bf16.mxu0 0
        %820 = vmatpush1.bf16.msra.mxu0 0
        %821 = vmatprep.subr.bf16.mxu0 0
        %822 = vmatpush1.bf16.msra.mxu0 0
        %823 = vmatprep.subr.bf16.mxu0 0
        %824 = vmatpush1.bf16.msra.mxu0 0
        %825 = vmatprep.subr.bf16.mxu0 0
        %826 = vmatpush1.bf16.msra.mxu0 0
        %827 = vmatprep.subr.bf16.mxu0 0
        %828 = vmatpush1.bf16.msra.mxu0 0
        %829 = vmatprep.subr.bf16.mxu0 0
        %830 = vmatpush1.bf16.msra.mxu0 0
        %831 = vmatprep.subr.bf16.mxu0 0
        %832 = vmatpush1.bf16.msra.mxu0 0
        %833 = vmatprep.subr.bf16.mxu0 0
        %834 = vmatpush1.bf16.msra.mxu0 0
        %835 = vmatprep.subr.bf16.mxu0 0
        %836 = vmatpush1.bf16.msra.mxu0 0
        %837 = vmatprep.subr.bf16.mxu0 0
        %838 = vmatpush1.bf16.msra.mxu0 0
        %839 = vmatprep.mubr.bf16.mxu0 0
        %840 = vmatmul.mubr.bf16.gmra.mrb[0].mxu0 %v802
        %v841 = vpop.f32.mrb[0].mxu0
        %v842 = vadd.f32 0.0, %v841
        %v843 = vpop.f32.mrb[0].mxu0
        %v844 = vpop.f32.mrb[0].mxu0
        %v845 = vpop.f32.mrb[0].mxu0
        %846 = vdwg.mxu0
        %v847 = vmul.f32 %v842, 0.17677669
        %v848 = vsel %vm355, %v847, 0.0
        %849 = vadd.xlane.f32.xlu0 %v848
        %v850 = vpop.xlane.xlu0 %849
        %v851 = vrot.slane %v850, 4
        %v852 = vadd.f32 %v850, %v851
        %v853 = vrot.slane %v852, 2
        %v854 = vadd.f32 %v852, %v853
        %v855 = vrot.slane %v854, 1
        %v856 = vadd.f32 %v854, %v855
        %s857 = vtos %v856
        %v858 = vstv %s857
        %v859 = vmul.f32 %v858, %v569
        %v860 = vsub.f32 %v847, %v859
        %v861 = vmul.f32 %v860, %v860
        %v862 = vsel %vm355, %v861, 0.0
        %863 = vadd.xlane.f32.xlu0 %v862
        %v864 = vpop.xlane.xlu0 %863
        %v865 = vrot.slane %v864, 4
        %v866 = vadd.f32 %v864, %v865
        %v867 = vrot.slane %v866, 2
        %v868 = vadd.f32 %v866, %v867
        %v869 = vrot.slane %v868, 1
        %v870 = vadd.f32 %v868, %v869
        %s871 = vtos %v870
        %v872 = vstv %s871
        %v873 = vmul.f32 %v872, %v569
        %v874 = vadd.f32 %v873, 1e-05
        %v875 = vrsqrt.pop %v874
        %v876 = vmul.f32 %v860, %v875
        %v877 = vmul.f32 %v876, 1.442695
        %v878 = vpow.pop %v877
        %v879 = vsel %vm355, %v878, 0.0
        %880 = vadd.xlane.f32.xlu0 %v879
        %v881 = vpop.xlane.xlu0 %880
        %v882 = vrcp.pop %v881
        %v883 = vmul.f32 %v878, %v882
        %v884 = vmul.f32 %v883, 0.25
        %v885 = vadd.f32 %v596, %v884
        %v886 = vpack.c.bf16 %v778, %v778
        %v887 = vpack.c.bf16 %v883, %v883
        %v889 = vsel %vm355, %v886, 0
        %v892 = vsel %vm355, %v887, 0
        %894 = vmatprep.subr.bf16.mxu0 0
        %895 = vmatpush1.bf16.xpose.msra.mxu0 %v892
        %896 = vmatprep.subr.bf16.mxu0 0
        %897 = vmatpush1.bf16.xpose.msra.mxu0 0
        %898 = vmatprep.subr.bf16.mxu0 0
        %899 = vmatpush1.bf16.xpose.msra.mxu0 0
        %900 = vmatprep.subr.bf16.mxu0 0
        %901 = vmatpush1.bf16.xpose.msra.mxu0 0
        %902 = vmatprep.subr.bf16.mxu0 0
        %903 = vmatpush1.bf16.xpose.msra.mxu0 0
        %904 = vmatprep.subr.bf16.mxu0 0
        %905 = vmatpush1.bf16.xpose.msra.mxu0 0
        %906 = vmatprep.subr.bf16.mxu0 0
        %907 = vmatpush1.bf16.xpose.msra.mxu0 0
        %908 = vmatprep.subr.bf16.mxu0 0
        %909 = vmatpush1.bf16.xpose.msra.mxu0 0
        %910 = vmatprep.subr.bf16.mxu0 0
        %911 = vmatpush1.bf16.xpose.msra.mxu0 0
        %912 = vmatprep.subr.bf16.mxu0 0
        %913 = vmatpush1.bf16.xpose.msra.mxu0 0
        %914 = vmatprep.subr.bf16.mxu0 0
        %915 = vmatpush1.bf16.xpose.msra.mxu0 0
        %916 = vmatprep.subr.bf16.mxu0 0
        %917 = vmatpush1.bf16.xpose.msra.mxu0 0
        %918 = vmatprep.subr.bf16.mxu0 0
        %919 = vmatpush1.bf16.xpose.msra.mxu0 0
        %920 = vmatprep.subr.bf16.mxu0 0
        %921 = vmatpush1.bf16.xpose.msra.mxu0 0
        %922 = vmatprep.subr.bf16.mxu0 0
        %923 = vmatpush1.bf16.xpose.msra.mxu0 0
        %924 = vmatprep.subr.bf16.mxu0 0
        %925 = vmatpush1.bf16.xpose.msra.mxu0 0
        %926 = vmatprep.mubr.bf16.mxu0 0
        %927 = vmatmul.mubr.bf16.gmra.mrb[0].mxu0 %v889
        %v928 = vpop.f32.mrb[0].mxu0
        %v929 = vadd.f32 0.0, %v928
        %v930 = vpop.f32.mrb[0].mxu0
        %v931 = vpop.f32.mrb[0].mxu0
        %v932 = vpop.f32.mrb[0].mxu0
        %933 = vdwg.mxu0
        %v934 = vpack.c.bf16 %v929, %v929
        %v936 = vsel %vm355, %v934, 0
        %v939 = vsel %vm359, %v305, 0
        %941 = vmatprep.subr.bf16.mxu0 0
        %942 = vmatpush1.bf16.msra.mxu0 %v939
        %943 = vmatprep.subr.bf16.mxu0 0
        %944 = vmatpush1.bf16.msra.mxu0 0
        %945 = vmatprep.subr.bf16.mxu0 0
        %946 = vmatpush1.bf16.msra.mxu0 0
        %947 = vmatprep.subr.bf16.mxu0 0
        %948 = vmatpush1.bf16.msra.mxu0 0
        %949 = vmatprep.subr.bf16.mxu0 0
        %950 = vmatpush1.bf16.msra.mxu0 0
        %951 = vmatprep.subr.bf16.mxu0 0
        %952 = vmatpush1.bf16.msra.mxu0 0
        %953 = vmatprep.subr.bf16.mxu0 0
        %954 = vmatpush1.bf16.msra.mxu0 0
        %955 = vmatprep.subr.bf16.mxu0 0
        %956 = vmatpush1.bf16.msra.mxu0 0
        %957 = vmatprep.subr.bf16.mxu0 0
        %958 = vmatpush1.bf16.msra.mxu0 0
        %959 = vmatprep.subr.bf16.mxu0 0
        %960 = vmatpush1.bf16.msra.mxu0 0
        %961 = vmatprep.subr.bf16.mxu0 0
        %962 = vmatpush1.bf16.msra.mxu0 0
        %963 = vmatprep.subr.bf16.mxu0 0
        %964 = vmatpush1.bf16.msra.mxu0 0
        %965 = vmatprep.subr.bf16.mxu0 0
        %966 = vmatpush1.bf16.msra.mxu0 0
        %967 = vmatprep.subr.bf16.mxu0 0
        %968 = vmatpush1.bf16.msra.mxu0 0
        %969 = vmatprep.subr.bf16.mxu0 0
        %970 = vmatpush1.bf16.msra.mxu0 0
        %971 = vmatprep.subr.bf16.mxu0 0
        %972 = vmatpush1.bf16.msra.mxu0 0
        %973 = vmatprep.mubr.bf16.mxu0 0
        %974 = vmatmul.mubr.bf16.gmra.mrb[0].mxu0 %v936
        %v975 = vpop.f32.mrb[0].mxu0
        %v976 = vadd.f32 0.0, %v975
        %v977 = vpop.f32.mrb[0].mxu0
        %v978 = vpop.f32.mrb[0].mxu0
        %v979 = vpop.f32.mrb[0].mxu0
        %980 = vdwg.mxu0
        %v982 = vsel %vm355, %v645, 0
        %v985 = vsel %vm359, %v304, 0
        %987 = vmatprep.subr.bf16.mxu0 0
        %988 = vmatpush1.bf16.msra.mxu0 %v985
        %989 = vmatprep.subr.bf16.mxu0 0
        %990 = vmatpush1.bf16.msra.mxu0 0
        %991 = vmatprep.subr.bf16.mxu0 0
        %992 = vmatpush1.bf16.msra.mxu0 0
        %993 = vmatprep.subr.bf16.mxu0 0
        %994 = vmatpush1.bf16.msra.mxu0 0
        %995 = vmatprep.subr.bf16.mxu0 0
        %996 = vmatpush1.bf16.msra.mxu0 0
        %997 = vmatprep.subr.bf16.mxu0 0
        %998 = vmatpush1.bf16.msra.mxu0 0
        %999 = vmatprep.subr.bf16.mxu0 0
        %1000 = vmatpush1.bf16.msra.mxu0 0
        %1001 = vmatprep.subr.bf16.mxu0 0
        %1002 = vmatpush1.bf16.msra.mxu0 0
        %1003 = vmatprep.subr.bf16.mxu0 0
        %1004 = vmatpush1.bf16.msra.mxu0 0
        %1005 = vmatprep.subr.bf16.mxu0 0
        %1006 = vmatpush1.bf16.msra.mxu0 0
        %1007 = vmatprep.subr.bf16.mxu0 0
        %1008 = vmatpush1.bf16.msra.mxu0 0
        %1009 = vmatprep.subr.bf16.mxu0 0
        %1010 = vmatpush1.bf16.msra.mxu0 0
        %1011 = vmatprep.subr.bf16.mxu0 0
        %1012 = vmatpush1.bf16.msra.mxu0 0
        %1013 = vmatprep.subr.bf16.mxu0 0
        %1014 = vmatpush1.bf16.msra.mxu0 0
        %1015 = vmatprep.subr.bf16.mxu0 0
        %1016 = vmatpush1.bf16.msra.mxu0 0
        %1017 = vmatprep.subr.bf16.mxu0 0
        %1018 = vmatpush1.bf16.msra.mxu0 0
        %1019 = vmatprep.mubr.bf16.mxu0 0
        %1020 = vmatmul.mubr.bf16.gmra.mrb[0].mxu0 %v982
        %v1021 = vpop.f32.mrb[0].mxu0
        %v1022 = vadd.f32 %v976, %v1021
        %v1023 = vpop.f32.mrb[0].mxu0
        %v1024 = vpop.f32.mrb[0].mxu0
        %v1025 = vpop.f32.mrb[0].mxu0
        %1026 = vdwg.mxu0
        %s1027 = scalar_lea.vmem [#allocation7], 8
        %v1028 = vld [vmem:[%s1027] sm:$0xf]
        %1029 = vrot.lane.b32.xlu0 %v354, 112
        %v1030 = vpop.permute.xlu0 %1029
        %v1032 = vsel %vm355, %v1030, 0
        %v1035 = vsel %vm359, %v1028, 0
        %1037 = vmatprep.subr.bf16.mxu0 0
        %1038 = vmatpush1.bf16.msra.mxu0 %v1035
        %1039 = vmatprep.subr.bf16.mxu0 0
        %1040 = vmatpush1.bf16.msra.mxu0 0
        %1041 = vmatprep.subr.bf16.mxu0 0
        %1042 = vmatpush1.bf16.msra.mxu0 0
        %1043 = vmatprep.subr.bf16.mxu0 0
        %1044 = vmatpush1.bf16.msra.mxu0 0
        %1045 = vmatprep.subr.bf16.mxu0 0
        %1046 = vmatpush1.bf16.msra.mxu0 0
        %1047 = vmatprep.subr.bf16.mxu0 0
        %1048 = vmatpush1.bf16.msra.mxu0 0
        %1049 = vmatprep.subr.bf16.mxu0 0
        %1050 = vmatpush1.bf16.msra.mxu0 0
        %1051 = vmatprep.subr.bf16.mxu0 0
        %1052 = vmatpush1.bf16.msra.mxu0 0
        %1053 = vmatprep.subr.bf16.mxu0 0
        %1054 = vmatpush1.bf16.msra.mxu0 0
        %1055 = vmatprep.subr.bf16.mxu0 0
        %1056 = vmatpush1.bf16.msra.mxu0 0
        %1057 = vmatprep.subr.bf16.mxu0 0
        %1058 = vmatpush1.bf16.msra.mxu0 0
        %1059 = vmatprep.subr.bf16.mxu0 0
        %1060 = vmatpush1.bf16.msra.mxu0 0
        %1061 = vmatprep.subr.bf16.mxu0 0
        %1062 = vmatpush1.bf16.msra.mxu0 0
        %1063 = vmatprep.subr.bf16.mxu0 0
        %1064 = vmatpush1.bf16.msra.mxu0 0
        %1065 = vmatprep.subr.bf16.mxu0 0
        %1066 = vmatpush1.bf16.msra.mxu0 0
        %1067 = vmatprep.subr.bf16.mxu0 0
        %1068 = vmatpush1.bf16.msra.mxu0 0
        %1069 = vmatprep.mubr.bf16.mxu0 0
        %1070 = vmatmul.mubr.bf16.gmra.mrb[0].mxu0 %v1032
        %v1071 = vpop.f32.mrb[0].mxu0
        %v1072 = vadd.f32 0.0, %v1071
        %v1073 = vpop.f32.mrb[0].mxu0
        %v1074 = vpop.f32.mrb[0].mxu0
        %v1075 = vpop.f32.mrb[0].mxu0
        %1076 = vdwg.mxu0
        %1077 = vrot.lane.b32.xlu0 %v403, 112
        %v1078 = vpop.permute.xlu0 %1077
        %v1080 = vsel %vm355, %v1078, 0
        %1082 = vmatprep.subr.bf16.mxu0 0
        %1083 = vmatpush1.bf16.msra.mxu0 %v408
        %1084 = vmatprep.subr.bf16.mxu0 0
        %1085 = vmatpush1.bf16.msra.mxu0 0
        %1086 = vmatprep.subr.bf16.mxu0 0
        %1087 = vmatpush1.bf16.msra.mxu0 0
        %1088 = vmatprep.subr.bf16.mxu0 0
        %1089 = vmatpush1.bf16.msra.mxu0 0
        %1090 = vmatprep.subr.bf16.mxu0 0
        %1091 = vmatpush1.bf16.msra.mxu0 0
        %1092 = vmatprep.subr.bf16.mxu0 0
        %1093 = vmatpush1.bf16.msra.mxu0 0
        %1094 = vmatprep.subr.bf16.mxu0 0
        %1095 = vmatpush1.bf16.msra.mxu0 0
        %1096 = vmatprep.subr.bf16.mxu0 0
        %1097 = vmatpush1.bf16.msra.mxu0 0
        %1098 = vmatprep.subr.bf16.mxu0 0
        %1099 = vmatpush1.bf16.msra.mxu0 0
        %1100 = vmatprep.subr.bf16.mxu0 0
        %1101 = vmatpush1.bf16.msra.mxu0 0
        %1102 = vmatprep.subr.bf16.mxu0 0
        %1103 = vmatpush1.bf16.msra.mxu0 0
        %1104 = vmatprep.subr.bf16.mxu0 0
        %1105 = vmatpush1.bf16.msra.mxu0 0
        %1106 = vmatprep.subr.bf16.mxu0 0
        %1107 = vmatpush1.bf16.msra.mxu0 0
        %1108 = vmatprep.subr.bf16.mxu0 0
        %1109 = vmatpush1.bf16.msra.mxu0 0
        %1110 = vmatprep.subr.bf16.mxu0 0
        %1111 = vmatpush1.bf16.msra.mxu0 0
        %1112 = vmatprep.subr.bf16.mxu0 0
        %1113 = vmatpush1.bf16.msra.mxu0 0
        %1114 = vmatprep.mubr.bf16.mxu0 0
        %1115 = vmatmul.mubr.bf16.gmra.mrb[0].mxu0 %v1080
        %v1116 = vpop.f32.mrb[0].mxu0
        %v1117 = vadd.f32 0.0, %v1116
        %v1118 = vpop.f32.mrb[0].mxu0
        %v1119 = vpop.f32.mrb[0].mxu0
        %v1120 = vpop.f32.mrb[0].mxu0
        %1121 = vdwg.mxu0
        %1122 = vmatprep.subr.bf16.mxu0 0
        %1123 = vmatpush1.bf16.msra.mxu0 %v451
        %1124 = vmatprep.subr.bf16.mxu0 0
        %1125 = vmatpush1.bf16.msra.mxu0 0
        %1126 = vmatprep.subr.bf16.mxu0 0
        %1127 = vmatpush1.bf16.msra.mxu0 0
        %1128 = vmatprep.subr.bf16.mxu0 0
        %1129 = vmatpush1.bf16.msra.mxu0 0
        %1130 = vmatprep.subr.bf16.mxu0 0
        %1131 = vmatpush1.bf16.msra.mxu0 0
        %1132 = vmatprep.subr.bf16.mxu0 0
        %1133 = vmatpush1.bf16.msra.mxu0 0
        %1134 = vmatprep.subr.bf16.mxu0 0
        %1135 = vmatpush1.bf16.msra.mxu0 0
        %1136 = vmatprep.subr.bf16.mxu0 0
        %1137 = vmatpush1.bf16.msra.mxu0 0
        %1138 = vmatprep.subr.bf16.mxu0 0
        %1139 = vmatpush1.bf16.msra.mxu0 0
        %1140 = vmatprep.subr.bf16.mxu0 0
        %1141 = vmatpush1.bf16.msra.mxu0 0
        %1142 = vmatprep.subr.bf16.mxu0 0
        %1143 = vmatpush1.bf16.msra.mxu0 0
        %1144 = vmatprep.subr.bf16.mxu0 0
        %1145 = vmatpush1.bf16.msra.mxu0 0
        %1146 = vmatprep.subr.bf16.mxu0 0
        %1147 = vmatpush1.bf16.msra.mxu0 0
        %1148 = vmatprep.subr.bf16.mxu0 0
        %1149 = vmatpush1.bf16.msra.mxu0 0
        %1150 = vmatprep.subr.bf16.mxu0 0
        %1151 = vmatpush1.bf16.msra.mxu0 0
        %1152 = vmatprep.subr.bf16.mxu0 0
        %1153 = vmatpush1.bf16.msra.mxu0 0
        %1154 = vmatprep.mubr.bf16.mxu0 0
        %1155 = vmatmul.mubr.bf16.gmra.mrb[0].mxu0 %v1080
        %v1156 = vpop.f32.mrb[0].mxu0
        %v1157 = vadd.f32 0.0, %v1156
        %v1158 = vpop.f32.mrb[0].mxu0
        %v1159 = vpop.f32.mrb[0].mxu0
        %v1160 = vpop.f32.mrb[0].mxu0
        %1161 = vdwg.mxu0
        %v1162 = vpack.c.bf16 %v1072, %v1072
        %v1163 = vpack.c.bf16 %v1117, %v1117
        %1164 = vxpose.xlu0.c.b16.start [1/8] %v1162, 128
        %1165 = vxpose.xlu0.c.b16.cont [2/8] 0, 128
        %1166 = vxpose.xlu0.c.b16.cont [3/8] 0, 128
        %1167 = vxpose.xlu0.c.b16.cont [4/8] 0, 128
        %1168 = vxpose.xlu0.c.b16.cont [5/8] 0, 128
        %1169 = vxpose.xlu0.c.b16.cont [6/8] 0, 128
        %1170 = vxpose.xlu0.c.b16.cont [7/8] 0, 128
        %1171 = vxpose.xlu0.c.b16.end [8/8] 0, 128
        %v1172 = vpop.trf.xlu0
        %v1173 = vpop.trf.xlu0
        %v1174 = vpop.trf.xlu0
        %v1175 = vpop.trf.xlu0
        %v1176 = vpop.trf.xlu0
        %v1177 = vpop.trf.xlu0
        %v1178 = vpop.trf.xlu0
        %v1179 = vpop.trf.xlu0
        %v1181 = vsel %vm355, %v1172, 0
        %v1184 = vsel %vm359, %v1163, 0
        %1186 = vmatprep.subr.bf16.mxu0 0
        %1187 = vmatpush1.bf16.msra.mxu0 %v1184
        %1188 = vmatprep.subr.bf16.mxu0 0
        %1189 = vmatpush1.bf16.msra.mxu0 0
        %1190 = vmatprep.subr.bf16.mxu0 0
        %1191 = vmatpush1.bf16.msra.mxu0 0
        %1192 = vmatprep.subr.bf16.mxu0 0
        %1193 = vmatpush1.bf16.msra.mxu0 0
        %1194 = vmatprep.subr.bf16.mxu0 0
        %1195 = vmatpush1.bf16.msra.mxu0 0
        %1196 = vmatprep.subr.bf16.mxu0 0
        %1197 = vmatpush1.bf16.msra.mxu0 0
        %1198 = vmatprep.subr.bf16.mxu0 0
        %1199 = vmatpush1.bf16.msra.mxu0 0
        %1200 = vmatprep.subr.bf16.mxu0 0
        %1201 = vmatpush1.bf16.msra.mxu0 0
        %1202 = vmatprep.subr.bf16.mxu0 0
        %1203 = vmatpush1.bf16.msra.mxu0 0
        %1204 = vmatprep.subr.bf16.mxu0 0
        %1205 = vmatpush1.bf16.msra.mxu0 0
        %1206 = vmatprep.subr.bf16.mxu0 0
        %1207 = vmatpush1.bf16.msra.mxu0 0
        %1208 = vmatprep.subr.bf16.mxu0 0
        %1209 = vmatpush1.bf16.msra.mxu0 0
        %1210 = vmatprep.subr.bf16.mxu0 0
        %1211 = vmatpush1.bf16.msra.mxu0 0
        %1212 = vmatprep.subr.bf16.mxu0 0
        %1213 = vmatpush1.bf16.msra.mxu0 0
        %1214 = vmatprep.subr.bf16.mxu0 0
        %1215 = vmatpush1.bf16.msra.mxu0 0
        %1216 = vmatprep.subr.bf16.mxu0 0
        %1217 = vmatpush1.bf16.msra.mxu0 0
        %1218 = vmatprep.mubr.bf16.mxu0 0
        %1219 = vmatmul.mubr.bf16.gmra.mrb[0].mxu0 %v1181
        %v1220 = vpop.f32.mrb[0].mxu0
        %v1221 = vadd.f32 0.0, %v1220
        %v1222 = vpop.f32.mrb[0].mxu0
        %v1223 = vpop.f32.mrb[0].mxu0
        %v1224 = vpop.f32.mrb[0].mxu0
        %1225 = vdwg.mxu0
        %v1226 = vmul.f32 %v1221, 0.17677669
        %v1227 = vsel %vm355, %v1226, 0.0
        %1228 = vadd.xlane.f32.xlu0 %v1227
        %v1229 = vpop.xlane.xlu0 %1228
        %v1230 = vrot.slane %v1229, 4
        %v1231 = vadd.f32 %v1229, %v1230
        %v1232 = vrot.slane %v1231, 2
        %v1233 = vadd.f32 %v1231, %v1232
        %v1234 = vrot.slane %v1233, 1
        %v1235 = vadd.f32 %v1233, %v1234
        %s1236 = vtos %v1235
        %v1237 = vstv %s1236
        %v1238 = vmul.f32 %v1237, %v569
        %v1239 = vsub.f32 %v1226, %v1238
        %v1240 = vmul.f32 %v1239, %v1239
        %v1241 = vsel %vm355, %v1240, 0.0
        %1242 = vadd.xlane.f32.xlu0 %v1241
        %v1243 = vpop.xlane.xlu0 %1242
        %v1244 = vrot.slane %v1243, 4
        %v1245 = vadd.f32 %v1243, %v1244
        %v1246 = vrot.slane %v1245, 2
        %v1247 = vadd.f32 %v1245, %v1246
        %v1248 = vrot.slane %v1247, 1
        %v1249 = vadd.f32 %v1247, %v1248
        %s1250 = vtos %v1249
        %v1251 = vstv %s1250
        %v1252 = vmul.f32 %v1251, %v569
        %v1253 = vadd.f32 %v1252, 1e-05
        %v1254 = vrsqrt.pop %v1253
        %v1255 = vmul.f32 %v1239, %v1254
        %v1256 = vmul.f32 %v1255, 1.442695
        %v1257 = vpow.pop %v1256
        %v1258 = vsel %vm355, %v1257, 0.0
        %1259 = vadd.xlane.f32.xlu0 %v1258
        %v1260 = vpop.xlane.xlu0 %1259
        %v1261 = vrcp.pop %v1260
        %v1262 = vmul.f32 %v1257, %v1261
        %v1263 = vmul.f32 %v1262, 0.25
        %v1264 = vadd.f32 %v885, %v1263
        %v1265 = vpack.c.bf16 %v1157, %v1157
        %v1266 = vpack.c.bf16 %v1262, %v1262
        %v1268 = vsel %vm355, %v1265, 0
        %v1271 = vsel %vm355, %v1266, 0
        %1273 = vmatprep.subr.bf16.mxu0 0
        %1274 = vmatpush1.bf16.xpose.msra.mxu0 %v1271
        %1275 = vmatprep.subr.bf16.mxu0 0
        %1276 = vmatpush1.bf16.xpose.msra.mxu0 0
        %1277 = vmatprep.subr.bf16.mxu0 0
        %1278 = vmatpush1.bf16.xpose.msra.mxu0 0
        %1279 = vmatprep.subr.bf16.mxu0 0
        %1280 = vmatpush1.bf16.xpose.msra.mxu0 0
        %1281 = vmatprep.subr.bf16.mxu0 0
        %1282 = vmatpush1.bf16.xpose.msra.mxu0 0
        %1283 = vmatprep.subr.bf16.mxu0 0
        %1284 = vmatpush1.bf16.xpose.msra.mxu0 0
        %1285 = vmatprep.subr.bf16.mxu0 0
        %1286 = vmatpush1.bf16.xpose.msra.mxu0 0
        %1287 = vmatprep.subr.bf16.mxu0 0
        %1288 = vmatpush1.bf16.xpose.msra.mxu0 0
        %1289 = vmatprep.subr.bf16.mxu0 0
        %1290 = vmatpush1.bf16.xpose.msra.mxu0 0
        %1291 = vmatprep.subr.bf16.mxu0 0
        %1292 = vmatpush1.bf16.xpose.msra.mxu0 0
        %1293 = vmatprep.subr.bf16.mxu0 0
        %1294 = vmatpush1.bf16.xpose.msra.mxu0 0
        %1295 = vmatprep.subr.bf16.mxu0 0
        %1296 = vmatpush1.bf16.xpose.msra.mxu0 0
        %1297 = vmatprep.subr.bf16.mxu0 0
        %1298 = vmatpush1.bf16.xpose.msra.mxu0 0
        %1299 = vmatprep.subr.bf16.mxu0 0
        %1300 = vmatpush1.bf16.xpose.msra.mxu0 0
        %1301 = vmatprep.subr.bf16.mxu0 0
        %1302 = vmatpush1.bf16.xpose.msra.mxu0 0
        %1303 = vmatprep.subr.bf16.mxu0 0
        %1304 = vmatpush1.bf16.xpose.msra.mxu0 0
        %1305 = vmatprep.mubr.bf16.mxu0 0
        %1306 = vmatmul.mubr.bf16.gmra.mrb[0].mxu0 %v1268
        %v1307 = vpop.f32.mrb[0].mxu0
        %v1308 = vadd.f32 0.0, %v1307
        %v1309 = vpop.f32.mrb[0].mxu0
        %v1310 = vpop.f32.mrb[0].mxu0
        %v1311 = vpop.f32.mrb[0].mxu0
        %1312 = vdwg.mxu0
        %v1313 = vpack.c.bf16 %v1308, %v1308
        %v1315 = vsel %vm355, %v1313, 0
        %v1318 = vsel %vm359, %v306, 0
        %1320 = vmatprep.subr.bf16.mxu0 0
        %1321 = vmatpush1.bf16.msra.mxu0 %v1318
        %1322 = vmatprep.subr.bf16.mxu0 0
        %1323 = vmatpush1.bf16.msra.mxu0 0
        %1324 = vmatprep.subr.bf16.mxu0 0
        %1325 = vmatpush1.bf16.msra.mxu0 0
        %1326 = vmatprep.subr.bf16.mxu0 0
        %1327 = vmatpush1.bf16.msra.mxu0 0
        %1328 = vmatprep.subr.bf16.mxu0 0
        %1329 = vmatpush1.bf16.msra.mxu0 0
        %1330 = vmatprep.subr.bf16.mxu0 0
        %1331 = vmatpush1.bf16.msra.mxu0 0
        %1332 = vmatprep.subr.bf16.mxu0 0
        %1333 = vmatpush1.bf16.msra.mxu0 0
        %1334 = vmatprep.subr.bf16.mxu0 0
        %1335 = vmatpush1.bf16.msra.mxu0 0
        %1336 = vmatprep.subr.bf16.mxu0 0
        %1337 = vmatpush1.bf16.msra.mxu0 0
        %1338 = vmatprep.subr.bf16.mxu0 0
        %1339 = vmatpush1.bf16.msra.mxu0 0
        %1340 = vmatprep.subr.bf16.mxu0 0
        %1341 = vmatpush1.bf16.msra.mxu0 0
        %1342 = vmatprep.subr.bf16.mxu0 0
        %1343 = vmatpush1.bf16.msra.mxu0 0
        %1344 = vmatprep.subr.bf16.mxu0 0
        %1345 = vmatpush1.bf16.msra.mxu0 0
        %1346 = vmatprep.subr.bf16.mxu0 0
        %1347 = vmatpush1.bf16.msra.mxu0 0
        %1348 = vmatprep.subr.bf16.mxu0 0
        %1349 = vmatpush1.bf16.msra.mxu0 0
        %1350 = vmatprep.subr.bf16.mxu0 0
        %1351 = vmatpush1.bf16.msra.mxu0 0
        %1352 = vmatprep.mubr.bf16.mxu0 0
        %1353 = vmatmul.mubr.bf16.gmra.mrb[0].mxu0 %v1315
        %v1354 = vpop.f32.mrb[0].mxu0
        %v1355 = vadd.f32 0.0, %v1354
        %v1356 = vpop.f32.mrb[0].mxu0
        %v1357 = vpop.f32.mrb[0].mxu0
        %v1358 = vpop.f32.mrb[0].mxu0
        %1359 = vdwg.mxu0
        %v1360 = vadd.f32 %v1022, %v1355
        %s1361 = scalar_lea.vmem [#allocation7], 12
        %v1362 = vld [vmem:[%s1361] sm:$0xf]
        %1363 = vrot.lane.b32.xlu0 %v354, 104
        %v1364 = vpop.permute.xlu0 %1363
        %v1366 = vsel %vm355, %v1364, 0
        %v1369 = vsel %vm359, %v1362, 0
        %1371 = vmatprep.subr.bf16.mxu0 0
        %1372 = vmatpush1.bf16.msra.mxu0 %v1369
        %1373 = vmatprep.subr.bf16.mxu0 0
        %1374 = vmatpush1.bf16.msra.mxu0 0
        %1375 = vmatprep.subr.bf16.mxu0 0
        %1376 = vmatpush1.bf16.msra.mxu0 0
        %1377 = vmatprep.subr.bf16.mxu0 0
        %1378 = vmatpush1.bf16.msra.mxu0 0
        %1379 = vmatprep.subr.bf16.mxu0 0
        %1380 = vmatpush1.bf16.msra.mxu0 0
        %1381 = vmatprep.subr.bf16.mxu0 0
        %1382 = vmatpush1.bf16.msra.mxu0 0
        %1383 = vmatprep.subr.bf16.mxu0 0
        %1384 = vmatpush1.bf16.msra.mxu0 0
        %1385 = vmatprep.subr.bf16.mxu0 0
        %1386 = vmatpush1.bf16.msra.mxu0 0
        %1387 = vmatprep.subr.bf16.mxu0 0
        %1388 = vmatpush1.bf16.msra.mxu0 0
        %1389 = vmatprep.subr.bf16.mxu0 0
        %1390 = vmatpush1.bf16.msra.mxu0 0
        %1391 = vmatprep.subr.bf16.mxu0 0
        %1392 = vmatpush1.bf16.msra.mxu0 0
        %1393 = vmatprep.subr.bf16.mxu0 0
        %1394 = vmatpush1.bf16.msra.mxu0 0
        %1395 = vmatprep.subr.bf16.mxu0 0
        %1396 = vmatpush1.bf16.msra.mxu0 0
        %1397 = vmatprep.subr.bf16.mxu0 0
        %1398 = vmatpush1.bf16.msra.mxu0 0
        %1399 = vmatprep.subr.bf16.mxu0 0
        %1400 = vmatpush1.bf16.msra.mxu0 0
        %1401 = vmatprep.subr.bf16.mxu0 0
        %1402 = vmatpush1.bf16.msra.mxu0 0
        %1403 = vmatprep.mubr.bf16.mxu0 0
        %1404 = vmatmul.mubr.bf16.gmra.mrb[0].mxu0 %v1366
        %v1405 = vpop.f32.mrb[0].mxu0
        %v1406 = vadd.f32 0.0, %v1405
        %v1407 = vpop.f32.mrb[0].mxu0
        %v1408 = vpop.f32.mrb[0].mxu0
        %v1409 = vpop.f32.mrb[0].mxu0
        %1410 = vdwg.mxu0
        %1411 = vrot.lane.b32.xlu0 %v403, 104
        %v1412 = vpop.permute.xlu0 %1411
        %v1414 = vsel %vm355, %v1412, 0
        %1416 = vmatprep.subr.bf16.mxu0 0
        %1417 = vmatpush1.bf16.msra.mxu0 %v408
        %1418 = vmatprep.subr.bf16.mxu0 0
        %1419 = vmatpush1.bf16.msra.mxu0 0
        %1420 = vmatprep.subr.bf16.mxu0 0
        %1421 = vmatpush1.bf16.msra.mxu0 0
        %1422 = vmatprep.subr.bf16.mxu0 0
        %1423 = vmatpush1.bf16.msra.mxu0 0
        %1424 = vmatprep.subr.bf16.mxu0 0
        %1425 = vmatpush1.bf16.msra.mxu0 0
        %1426 = vmatprep.subr.bf16.mxu0 0
        %1427 = vmatpush1.bf16.msra.mxu0 0
        %1428 = vmatprep.subr.bf16.mxu0 0
        %1429 = vmatpush1.bf16.msra.mxu0 0
        %1430 = vmatprep.subr.bf16.mxu0 0
        %1431 = vmatpush1.bf16.msra.mxu0 0
        %1432 = vmatprep.subr.bf16.mxu0 0
        %1433 = vmatpush1.bf16.msra.mxu0 0
        %1434 = vmatprep.subr.bf16.mxu0 0
        %1435 = vmatpush1.bf16.msra.mxu0 0
        %1436 = vmatprep.subr.bf16.mxu0 0
        %1437 = vmatpush1.bf16.msra.mxu0 0
        %1438 = vmatprep.subr.bf16.mxu0 0
        %1439 = vmatpush1.bf16.msra.mxu0 0
        %1440 = vmatprep.subr.bf16.mxu0 0
        %1441 = vmatpush1.bf16.msra.mxu0 0
        %1442 = vmatprep.subr.bf16.mxu0 0
        %1443 = vmatpush1.bf16.msra.mxu0 0
        %1444 = vmatprep.subr.bf16.mxu0 0
        %1445 = vmatpush1.bf16.msra.mxu0 0
        %1446 = vmatprep.subr.bf16.mxu0 0
        %1447 = vmatpush1.bf16.msra.mxu0 0
        %1448 = vmatprep.mubr.bf16.mxu0 0
        %1449 = vmatmul.mubr.bf16.gmra.mrb[0].mxu0 %v1414
        %v1450 = vpop.f32.mrb[0].mxu0
        %v1451 = vadd.f32 0.0, %v1450
        %v1452 = vpop.f32.mrb[0].mxu0
        %v1453 = vpop.f32.mrb[0].mxu0
        %v1454 = vpop.f32.mrb[0].mxu0
        %1455 = vdwg.mxu0
        %1456 = vmatprep.subr.bf16.mxu0 0
        %1457 = vmatpush1.bf16.msra.mxu0 %v451
        %1458 = vmatprep.subr.bf16.mxu0 0
        %1459 = vmatpush1.bf16.msra.mxu0 0
        %1460 = vmatprep.subr.bf16.mxu0 0
        %1461 = vmatpush1.bf16.msra.mxu0 0
        %1462 = vmatprep.subr.bf16.mxu0 0
        %1463 = vmatpush1.bf16.msra.mxu0 0
        %1464 = vmatprep.subr.bf16.mxu0 0
        %1465 = vmatpush1.bf16.msra.mxu0 0
        %1466 = vmatprep.subr.bf16.mxu0 0
        %1467 = vmatpush1.bf16.msra.mxu0 0
        %1468 = vmatprep.subr.bf16.mxu0 0
        %1469 = vmatpush1.bf16.msra.mxu0 0
        %1470 = vmatprep.subr.bf16.mxu0 0
        %1471 = vmatpush1.bf16.msra.mxu0 0
        %1472 = vmatprep.subr.bf16.mxu0 0
        %1473 = vmatpush1.bf16.msra.mxu0 0
        %1474 = vmatprep.subr.bf16.mxu0 0
        %1475 = vmatpush1.bf16.msra.mxu0 0
        %1476 = vmatprep.subr.bf16.mxu0 0
        %1477 = vmatpush1.bf16.msra.mxu0 0
        %1478 = vmatprep.subr.bf16.mxu0 0
        %1479 = vmatpush1.bf16.msra.mxu0 0
        %1480 = vmatprep.subr.bf16.mxu0 0
        %1481 = vmatpush1.bf16.msra.mxu0 0
        %1482 = vmatprep.subr.bf16.mxu0 0
        %1483 = vmatpush1.bf16.msra.mxu0 0
        %1484 = vmatprep.subr.bf16.mxu0 0
        %1485 = vmatpush1.bf16.msra.mxu0 0
        %1486 = vmatprep.subr.bf16.mxu0 0
        %1487 = vmatpush1.bf16.msra.mxu0 0
        %1488 = vmatprep.mubr.bf16.mxu0 0
        %1489 = vmatmul.mubr.bf16.gmra.mrb[0].mxu0 %v1414
        %v1490 = vpop.f32.mrb[0].mxu0
        %v1491 = vadd.f32 0.0, %v1490
        %v1492 = vpop.f32.mrb[0].mxu0
        %v1493 = vpop.f32.mrb[0].mxu0
        %v1494 = vpop.f32.mrb[0].mxu0
        %1495 = vdwg.mxu0
        %v1496 = vpack.c.bf16 %v1406, %v1406
        %v1497 = vpack.c.bf16 %v1451, %v1451
        %1498 = vxpose.xlu0.c.b16.start [1/8] %v1496, 128
        %1499 = vxpose.xlu0.c.b16.cont [2/8] 0, 128
        %1500 = vxpose.xlu0.c.b16.cont [3/8] 0, 128
        %1501 = vxpose.xlu0.c.b16.cont [4/8] 0, 128
        %1502 = vxpose.xlu0.c.b16.cont [5/8] 0, 128
        %1503 = vxpose.xlu0.c.b16.cont [6/8] 0, 128
        %1504 = vxpose.xlu0.c.b16.cont [7/8] 0, 128
        %1505 = vxpose.xlu0.c.b16.end [8/8] 0, 128
        %v1506 = vpop.trf.xlu0
        %v1507 = vpop.trf.xlu0
        %v1508 = vpop.trf.xlu0
        %v1509 = vpop.trf.xlu0
        %v1510 = vpop.trf.xlu0
        %v1511 = vpop.trf.xlu0
        %v1512 = vpop.trf.xlu0
        %v1513 = vpop.trf.xlu0
        %v1515 = vsel %vm355, %v1506, 0
        %v1518 = vsel %vm359, %v1497, 0
        %1520 = vmatprep.subr.bf16.mxu0 0
        %1521 = vmatpush1.bf16.msra.mxu0 %v1518
        %1522 = vmatprep.subr.bf16.mxu0 0
        %1523 = vmatpush1.bf16.msra.mxu0 0
        %1524 = vmatprep.subr.bf16.mxu0 0
        %1525 = vmatpush1.bf16.msra.mxu0 0
        %1526 = vmatprep.subr.bf16.mxu0 0
        %1527 = vmatpush1.bf16.msra.mxu0 0
        %1528 = vmatprep.subr.bf16.mxu0 0
        %1529 = vmatpush1.bf16.msra.mxu0 0
        %1530 = vmatprep.subr.bf16.mxu0 0
        %1531 = vmatpush1.bf16.msra.mxu0 0
        %1532 = vmatprep.subr.bf16.mxu0 0
        %1533 = vmatpush1.bf16.msra.mxu0 0
        %1534 = vmatprep.subr.bf16.mxu0 0
        %1535 = vmatpush1.bf16.msra.mxu0 0
        %1536 = vmatprep.subr.bf16.mxu0 0
        %1537 = vmatpush1.bf16.msra.mxu0 0
        %1538 = vmatprep.subr.bf16.mxu0 0
        %1539 = vmatpush1.bf16.msra.mxu0 0
        %1540 = vmatprep.subr.bf16.mxu0 0
        %1541 = vmatpush1.bf16.msra.mxu0 0
        %1542 = vmatprep.subr.bf16.mxu0 0
        %1543 = vmatpush1.bf16.msra.mxu0 0
        %1544 = vmatprep.subr.bf16.mxu0 0
        %1545 = vmatpush1.bf16.msra.mxu0 0
        %1546 = vmatprep.subr.bf16.mxu0 0
        %1547 = vmatpush1.bf16.msra.mxu0 0
        %1548 = vmatprep.subr.bf16.mxu0 0
        %1549 = vmatpush1.bf16.msra.mxu0 0
        %1550 = vmatprep.subr.bf16.mxu0 0
        %1551 = vmatpush1.bf16.msra.mxu0 0
        %1552 = vmatprep.mubr.bf16.mxu0 0
        %1553 = vmatmul.mubr.bf16.gmra.mrb[0].mxu0 %v1515
        %v1554 = vpop.f32.mrb[0].mxu0
        %v1555 = vadd.f32 0.0, %v1554
        %v1556 = vpop.f32.mrb[0].mxu0
        %v1557 = vpop.f32.mrb[0].mxu0
        %v1558 = vpop.f32.mrb[0].mxu0
        %1559 = vdwg.mxu0
        %v1560 = vmul.f32 %v1555, 0.17677669
        %v1561 = vsel %vm355, %v1560, 0.0
        %1562 = vadd.xlane.f32.xlu0 %v1561
        %v1563 = vpop.xlane.xlu0 %1562
        %v1564 = vrot.slane %v1563, 4
        %v1565 = vadd.f32 %v1563, %v1564
        %v1566 = vrot.slane %v1565, 2
        %v1567 = vadd.f32 %v1565, %v1566
        %v1568 = vrot.slane %v1567, 1
        %v1569 = vadd.f32 %v1567, %v1568
        %s1570 = vtos %v1569
        %v1571 = vstv %s1570
        %v1572 = vmul.f32 %v1571, %v569
        %v1573 = vsub.f32 %v1560, %v1572
        %v1574 = vmul.f32 %v1573, %v1573
        %v1575 = vsel %vm355, %v1574, 0.0
        %1576 = vadd.xlane.f32.xlu0 %v1575
        %v1577 = vpop.xlane.xlu0 %1576
        %v1578 = vrot.slane %v1577, 4
        %v1579 = vadd.f32 %v1577, %v1578
        %v1580 = vrot.slane %v1579, 2
        %v1581 = vadd.f32 %v1579, %v1580
        %v1582 = vrot.slane %v1581, 1
        %v1583 = vadd.f32 %v1581, %v1582
        %s1584 = vtos %v1583
        %v1585 = vstv %s1584
        %v1586 = vmul.f32 %v1585, %v569
        %v1587 = vadd.f32 %v1586, 1e-05
        %v1588 = vrsqrt.pop %v1587
        %v1589 = vmul.f32 %v1573, %v1588
        %v1590 = vmul.f32 %v1589, 1.442695
        %v1591 = vpow.pop %v1590
        %v1592 = vsel %vm355, %v1591, 0.0
        %1593 = vadd.xlane.f32.xlu0 %v1592
        %v1594 = vpop.xlane.xlu0 %1593
        %v1595 = vrcp.pop %v1594
        %v1596 = vmul.f32 %v1591, %v1595
        %v1597 = vmul.f32 %v1596, 0.25
        %v1598 = vadd.f32 %v1264, %v1597
        %v1599 = vpack.c.bf16 %v1491, %v1491
        %v1600 = vpack.c.bf16 %v1596, %v1596
        %v1602 = vsel %vm355, %v1599, 0
        %v1605 = vsel %vm355, %v1600, 0
        %1607 = vmatprep.subr.bf16.mxu0 0
        %1608 = vmatpush1.bf16.xpose.msra.mxu0 %v1605
        %1609 = vmatprep.subr.bf16.mxu0 0
        %1610 = vmatpush1.bf16.xpose.msra.mxu0 0
        %1611 = vmatprep.subr.bf16.mxu0 0
        %1612 = vmatpush1.bf16.xpose.msra.mxu0 0
        %1613 = vmatprep.subr.bf16.mxu0 0
        %1614 = vmatpush1.bf16.xpose.msra.mxu0 0
        %1615 = vmatprep.subr.bf16.mxu0 0
        %1616 = vmatpush1.bf16.xpose.msra.mxu0 0
        %1617 = vmatprep.subr.bf16.mxu0 0
        %1618 = vmatpush1.bf16.xpose.msra.mxu0 0
        %1619 = vmatprep.subr.bf16.mxu0 0
        %1620 = vmatpush1.bf16.xpose.msra.mxu0 0
        %1621 = vmatprep.subr.bf16.mxu0 0
        %1622 = vmatpush1.bf16.xpose.msra.mxu0 0
        %1623 = vmatprep.subr.bf16.mxu0 0
        %1624 = vmatpush1.bf16.xpose.msra.mxu0 0
        %1625 = vmatprep.subr.bf16.mxu0 0
        %1626 = vmatpush1.bf16.xpose.msra.mxu0 0
        %1627 = vmatprep.subr.bf16.mxu0 0
        %1628 = vmatpush1.bf16.xpose.msra.mxu0 0
        %1629 = vmatprep.subr.bf16.mxu0 0
        %1630 = vmatpush1.bf16.xpose.msra.mxu0 0
        %1631 = vmatprep.subr.bf16.mxu0 0
        %1632 = vmatpush1.bf16.xpose.msra.mxu0 0
        %1633 = vmatprep.subr.bf16.mxu0 0
        %1634 = vmatpush1.bf16.xpose.msra.mxu0 0
        %1635 = vmatprep.subr.bf16.mxu0 0
        %1636 = vmatpush1.bf16.xpose.msra.mxu0 0
        %1637 = vmatprep.subr.bf16.mxu0 0
        %1638 = vmatpush1.bf16.xpose.msra.mxu0 0
        %1639 = vmatprep.mubr.bf16.mxu0 0
        %1640 = vmatmul.mubr.bf16.gmra.mrb[0].mxu0 %v1602
        %v1641 = vpop.f32.mrb[0].mxu0
        %v1642 = vadd.f32 0.0, %v1641
        %v1643 = vpop.f32.mrb[0].mxu0
        %v1644 = vpop.f32.mrb[0].mxu0
        %v1645 = vpop.f32.mrb[0].mxu0
        %1646 = vdwg.mxu0
        %v1647 = vpack.c.bf16 %v1642, %v1642
        %v1649 = vsel %vm355, %v1647, 0
        %v1652 = vsel %vm359, %v307, 0
        %1654 = vmatprep.subr.bf16.mxu0 0
        %1655 = vmatpush1.bf16.msra.mxu0 %v1652
        %1656 = vmatprep.subr.bf16.mxu0 0
        %1657 = vmatpush1.bf16.msra.mxu0 0
        %1658 = vmatprep.subr.bf16.mxu0 0
        %1659 = vmatpush1.bf16.msra.mxu0 0
        %1660 = vmatprep.subr.bf16.mxu0 0
        %1661 = vmatpush1.bf16.msra.mxu0 0
        %1662 = vmatprep.subr.bf16.mxu0 0
        %1663 = vmatpush1.bf16.msra.mxu0 0
        %1664 = vmatprep.subr.bf16.mxu0 0
        %1665 = vmatpush1.bf16.msra.mxu0 0
        %1666 = vmatprep.subr.bf16.mxu0 0
        %1667 = vmatpush1.bf16.msra.mxu0 0
        %1668 = vmatprep.subr.bf16.mxu0 0
        %1669 = vmatpush1.bf16.msra.mxu0 0
        %1670 = vmatprep.subr.bf16.mxu0 0
        %1671 = vmatpush1.bf16.msra.mxu0 0
        %1672 = vmatprep.subr.bf16.mxu0 0
        %1673 = vmatpush1.bf16.msra.mxu0 0
        %1674 = vmatprep.subr.bf16.mxu0 0
        %1675 = vmatpush1.bf16.msra.mxu0 0
        %1676 = vmatprep.subr.bf16.mxu0 0
        %1677 = vmatpush1.bf16.msra.mxu0 0
        %1678 = vmatprep.subr.bf16.mxu0 0
        %1679 = vmatpush1.bf16.msra.mxu0 0
        %1680 = vmatprep.subr.bf16.mxu0 0
        %1681 = vmatpush1.bf16.msra.mxu0 0
        %1682 = vmatprep.subr.bf16.mxu0 0
        %1683 = vmatpush1.bf16.msra.mxu0 0
        %1684 = vmatprep.subr.bf16.mxu0 0
        %1685 = vmatpush1.bf16.msra.mxu0 0
        %1686 = vmatprep.mubr.bf16.mxu0 0
        %1687 = vmatmul.mubr.bf16.gmra.mrb[0].mxu0 %v1649
        %v1688 = vpop.f32.mrb[0].mxu0
        %v1689 = vadd.f32 0.0, %v1688
        %v1690 = vpop.f32.mrb[0].mxu0
        %v1691 = vpop.f32.mrb[0].mxu0
        %v1692 = vpop.f32.mrb[0].mxu0
        %1693 = vdwg.mxu0
        %v1694 = vadd.f32 %v1360, %v1689
        %1695 = vst.msk [vmem:[%s296] sm:$0xff] %vm355, %v1598
        %v1696 = vadd.f32 %v298, %v1694
        %v1697 = vsel %vm318, %v1696, 0.0
        %1698 = vadd.xlane.f32.xlu0 %v1697
        %v1699 = vpop.xlane.xlu0 %1698
        %v1700 = vmul.f32 %v1699, %v322
        %v1701 = vsub.f32 %v1696, %v1700
        %v1702 = vmul.f32 %v1701, %v1701
        %v1703 = vsel %vm318, %v1702, 0.0
        %1704 = vadd.xlane.f32.xlu0 %v1703
        %v1705 = vpop.xlane.xlu0 %1704
        %v1706 = vmul.f32 %v1705, %v322
        %v1707 = vadd.f32 %v1706, 1e-06
        %v1708 = vrsqrt.pop %v1707
        %v1709 = vmul.f32 %v1701, %v1708
        %v1710 = vlaneseq
        %v1711 = vshrl.u32 %v1710, 7
        %v1712 = vsub.s32 4, %v1711
        %v1713 = vrot.slane %v299, %v1712
        %v1714 = vmul.f32 %v1709, %v1713
        %v1715 = vlaneseq
        %v1716 = vshrl.u32 %v1715, 7
        %v1717 = vsub.s32 5, %v1716
        %v1718 = vrot.slane %v299, %v1717
        %v1719 = vadd.f32 %v1714, %v1718
        %v1720 = vpack.c.bf16 %v1719, %v1719
        %v1721 = vlaneseq
        %v1722 = vshrl.u32 %v1721, 7
        %v1723 = vsub.s32 6, %v1722
        %v1724 = vrot.slane %v299, %v1723
        %v1729 = vunpack.c.l.b16 %v309
        %v1730 = vunpack.c.l.b16 %v310
        %v1731 = vunpack.c.l.b16 %v311
        %v1732 = vunpack.c.l.b16 %v312
        %v1733 = vpack.c.b16 %v1730, %v1729
        %v1734 = vpack.c.b16 %v1732, %v1731
        %v1738 = vsel %vm318, %v1720, 0
        %1740 = vmatprep.subr.bf16.mxu0 0
        %1741 = vmatpush1.bf16.msra.mxu0 %v1733
        %1742 = vmatprep.subr.bf16.mxu0 0
        %1743 = vmatpush1.bf16.msra.mxu0 %v1734
        %1744 = vmatprep.subr.bf16.mxu0 0
        %1745 = vmatpush1.bf16.msra.mxu0 0
        %1746 = vmatprep.subr.bf16.mxu0 0
        %1747 = vmatpush1.bf16.msra.mxu0 0
        %1748 = vmatprep.subr.bf16.mxu0 0
        %1749 = vmatpush1.bf16.msra.mxu0 0
        %1750 = vmatprep.subr.bf16.mxu0 0
        %1751 = vmatpush1.bf16.msra.mxu0 0
        %1752 = vmatprep.subr.bf16.mxu0 0
        %1753 = vmatpush1.bf16.msra.mxu0 0
        %1754 = vmatprep.subr.bf16.mxu0 0
        %1755 = vmatpush1.bf16.msra.mxu0 0
        %1756 = vmatprep.subr.bf16.mxu0 0
        %1757 = vmatpush1.bf16.msra.mxu0 0
        %1758 = vmatprep.subr.bf16.mxu0 0
        %1759 = vmatpush1.bf16.msra.mxu0 0
        %1760 = vmatprep.subr.bf16.mxu0 0
        %1761 = vmatpush1.bf16.msra.mxu0 0
        %1762 = vmatprep.subr.bf16.mxu0 0
        %1763 = vmatpush1.bf16.msra.mxu0 0
        %1764 = vmatprep.subr.bf16.mxu0 0
        %1765 = vmatpush1.bf16.msra.mxu0 0
        %1766 = vmatprep.subr.bf16.mxu0 0
        %1767 = vmatpush1.bf16.msra.mxu0 0
        %1768 = vmatprep.subr.bf16.mxu0 0
        %1769 = vmatpush1.bf16.msra.mxu0 0
        %1770 = vmatprep.subr.bf16.mxu0 0
        %1771 = vmatpush1.bf16.msra.mxu0 0
        %1772 = vmatprep.mubr.bf16.mxu0 0
        %1773 = vmatmul.mubr.bf16.gmra.mrb[0].mxu0 %v1738
        %v1774 = vpop.f32.mrb[0].mxu0
        %v1775 = vadd.f32 %v1724, %v1774
        %v1776 = vpop.f32.mrb[0].mxu0
        %v1777 = vpop.f32.mrb[0].mxu0
        %v1778 = vpop.f32.mrb[0].mxu0
        %1779 = vdwg.mxu0
        %v1780 = vmul.f32 %v1775, 0.5
        %v1781 = vmul.f32 %v1775, 0.70710677
        %v1782 = vand.u32 2147483647, %v1781
        %v1783 = vmul.f32 %v1782, 0.3275911
        %v1784 = vadd.f32 %v1783, 1.0
        %v1785 = vrcp.pop %v1784
        %v1786 = vmul.f32 1.0, %v1785
        %v1787 = vmul.f32 %v1786, 1.0614054
        %v1788 = vadd.f32 %v1787, -1.4531521
        %v1789 = vmul.f32 %v1788, %v1786
        %v1790 = vadd.f32 %v1789, 1.4214138
        %v1791 = vmul.f32 %v1790, %v1786
        %v1792 = vadd.f32 %v1791, -0.28449672
        %v1793 = vmul.f32 %v1792, %v1786
        %v1794 = vadd.f32 %v1793, 0.2548296
        %v1795 = vmul.f32 %v1794, %v1786
        %v1796 = vsub.f32 0.0, %v1782
        %v1797 = vmul.f32 %v1796, %v1782
        %v1798 = vmul.f32 %v1797, 1.442695
        %v1799 = vpow.pop %v1798
        %v1800 = vmul.f32 %v1795, %v1799
        %v1801 = vsub.f32 1.0, %v1800
        %vm1802 = vcmp.ge.f32.partialorder %v1781, 0.0
        %v1803 = vsub.f32 0.0, %v1801
        %v1804 = vsel %vm1802, %v1801, %v1803
        %v1805 = vadd.f32 %v1804, 1.0
        %v1806 = vmul.f32 %v1780, %v1805
        %v1807 = vpack.c.bf16 %v1806, %v1806
        %v1812 = vunpack.c.l.b16 %v314
        %v1813 = vunpack.c.l.b16 %v315
        %v1814 = vunpack.c.l.b16 %v316
        %v1815 = vunpack.c.l.b16 %v317
        %v1816 = vpack.c.b16 %v1813, %v1812
        %v1817 = vpack.c.b16 %v1815, %v1814
        %v1821 = vsel %vm318, %v1807, 0
        %1823 = vmatprep.subr.bf16.mxu0 0
        %1824 = vmatpush1.bf16.msra.mxu0 %v1816
        %1825 = vmatprep.subr.bf16.mxu0 0
        %1826 = vmatpush1.bf16.msra.mxu0 %v1817
        %1827 = vmatprep.subr.bf16.mxu0 0
        %1828 = vmatpush1.bf16.msra.mxu0 0
        %1829 = vmatprep.subr.bf16.mxu0 0
        %1830 = vmatpush1.bf16.msra.mxu0 0
        %1831 = vmatprep.subr.bf16.mxu0 0
        %1832 = vmatpush1.bf16.msra.mxu0 0
        %1833 = vmatprep.subr.bf16.mxu0 0
        %1834 = vmatpush1.bf16.msra.mxu0 0
        %1835 = vmatprep.subr.bf16.mxu0 0
        %1836 = vmatpush1.bf16.msra.mxu0 0
        %1837 = vmatprep.subr.bf16.mxu0 0
        %1838 = vmatpush1.bf16.msra.mxu0 0
        %1839 = vmatprep.subr.bf16.mxu0 0
        %1840 = vmatpush1.bf16.msra.mxu0 0
        %1841 = vmatprep.subr.bf16.mxu0 0
        %1842 = vmatpush1.bf16.msra.mxu0 0
        %1843 = vmatprep.subr.bf16.mxu0 0
        %1844 = vmatpush1.bf16.msra.mxu0 0
        %1845 = vmatprep.subr.bf16.mxu0 0
        %1846 = vmatpush1.bf16.msra.mxu0 0
        %1847 = vmatprep.subr.bf16.mxu0 0
        %1848 = vmatpush1.bf16.msra.mxu0 0
        %1849 = vmatprep.subr.bf16.mxu0 0
        %1850 = vmatpush1.bf16.msra.mxu0 0
        %1851 = vmatprep.subr.bf16.mxu0 0
        %1852 = vmatpush1.bf16.msra.mxu0 0
        %1853 = vmatprep.subr.bf16.mxu0 0
        %1854 = vmatpush1.bf16.msra.mxu0 0
        %1855 = vmatprep.mubr.bf16.mxu0 0
        %1856 = vmatmul.mubr.bf16.gmra.mrb[0].mxu0 %v1821
        %v1857 = vpop.f32.mrb[0].mxu0
        %v1858 = vadd.f32 0.0, %v1857
        %v1859 = vpop.f32.mrb[0].mxu0
        %v1860 = vpop.f32.mrb[0].mxu0
        %v1861 = vpop.f32.mrb[0].mxu0
        %1862 = vdwg.mxu0
        %v1863 = vadd.f32 %v1696, %v1858
        %v1864 = vlaneseq
        %v1865 = vshrl.u32 %v1864, 7
        %v1866 = vsub.s32 7, %v1865
        %v1867 = vrot.slane %v299, %v1866
        %v1868 = vadd.f32 %v1863, %v1867
        %v1869 = vld [vmem:[#allocation5 + $0x8] sm:$0xff]
        %s1870 = scalar_lea.vmem [#allocation7], 40
        %v1871 = vld [vmem:[%s1870] sm:$0xf]
        %s1872 = scalar_lea.vmem [#allocation7], 44
        %v1873 = vld [vmem:[%s1872] sm:$0xf]
        %s1874 = scalar_lea.vmem [#allocation8], 48
        %v1875 = vld [vmem:[%s1874] sm:$0xf]
        %v1876 = vld [vmem:[%s1874 + $0x4] sm:$0xf]
        %v1877 = vld [vmem:[%s1874 + $0x8] sm:$0xf]
        %v1878 = vld [vmem:[%s1874 + $0xc] sm:$0xf]
        %s1879 = scalar_lea.vmem [#allocation8], 64
        %v1880 = vld [vmem:[%s1879] sm:$0xf]
        %v1881 = vld [vmem:[%s1879 + $0x4] sm:$0xf]
        %v1882 = vld [vmem:[%s1879 + $0x8] sm:$0xf]
        %v1883 = vld [vmem:[%s1879 + $0xc] sm:$0xf]
        %s1884 = scalar_lea.vmem [#allocation8], 80
        %v1885 = vld [vmem:[%s1884] sm:$0xf]
        %v1886 = vld [vmem:[%s1884 + $0x4] sm:$0xf]
        %v1887 = vld [vmem:[%s1884 + $0x8] sm:$0xf]
        %v1888 = vld [vmem:[%s1884 + $0xc] sm:$0xf]
        %v1889 = vsel %vm318, %v1868, 0.0
        %1890 = vadd.xlane.f32.xlu0 %v1889
        %v1891 = vpop.xlane.xlu0 %1890
        %v1892 = vmul.f32 %v1891, %v322
        %v1893 = vsub.f32 %v1868, %v1892
        %v1894 = vmul.f32 %v1893, %v1893
        %v1895 = vsel %vm318, %v1894, 0.0
        %1896 = vadd.xlane.f32.xlu0 %v1895
        %v1897 = vpop.xlane.xlu0 %1896
        %v1898 = vmul.f32 %v1897, %v322
        %v1899 = vadd.f32 %v1898, 1e-06
        %v1900 = vrsqrt.pop %v1899
        %v1901 = vmul.f32 %v1893, %v1900
        %v1902 = vlaneseq
        %v1903 = vshrl.u32 %v1902, 7
        %v1904 = vsub.s32 0, %v1903
        %v1905 = vrot.slane %v1869, %v1904
        %v1906 = vmul.f32 %v1901, %v1905
        %v1907 = vlaneseq
        %v1908 = vshrl.u32 %v1907, 7
        %v1909 = vsub.s32 1, %v1908
        %v1910 = vrot.slane %v1869, %v1909
        %v1911 = vadd.f32 %v1906, %v1910
        %v1912 = vlaneseq
        %v1913 = vshrl.u32 %v1912, 7
        %v1914 = vsub.s32 2, %v1913
        %v1915 = vrot.slane %v1869, %v1914
        %v1916 = vmul.f32 %v1901, %v1915
        %v1917 = vlaneseq
        %v1918 = vshrl.u32 %v1917, 7
        %v1919 = vsub.s32 3, %v1918
        %v1920 = vrot.slane %v1869, %v1919
        %v1921 = vadd.f32 %v1916, %v1920
        %s1922 = scalar_lea.vmem [#allocation7], 24
        %v1923 = vld [vmem:[%s1922] sm:$0xf]
        %v1924 = vpack.c.bf16 %v1911, %v1911
        %v1926 = vsel %vm355, %v1924, 0
        %v1929 = vsel %vm359, %v1923, 0
        %1931 = vmatprep.subr.bf16.mxu0 0
        %1932 = vmatpush1.bf16.msra.mxu0 %v1929
        %1933 = vmatprep.subr.bf16.mxu0 0
        %1934 = vmatpush1.bf16.msra.mxu0 0
        %1935 = vmatprep.subr.bf16.mxu0 0
        %1936 = vmatpush1.bf16.msra.mxu0 0
        %1937 = vmatprep.subr.bf16.mxu0 0
        %1938 = vmatpush1.bf16.msra.mxu0 0
        %1939 = vmatprep.subr.bf16.mxu0 0
        %1940 = vmatpush1.bf16.msra.mxu0 0
        %1941 = vmatprep.subr.bf16.mxu0 0
        %1942 = vmatpush1.bf16.msra.mxu0 0
        %1943 = vmatprep.subr.bf16.mxu0 0
        %1944 = vmatpush1.bf16.msra.mxu0 0
        %1945 = vmatprep.subr.bf16.mxu0 0
        %1946 = vmatpush1.bf16.msra.mxu0 0
        %1947 = vmatprep.subr.bf16.mxu0 0
        %1948 = vmatpush1.bf16.msra.mxu0 0
        %1949 = vmatprep.subr.bf16.mxu0 0
        %1950 = vmatpush1.bf16.msra.mxu0 0
        %1951 = vmatprep.subr.bf16.mxu0 0
        %1952 = vmatpush1.bf16.msra.mxu0 0
        %1953 = vmatprep.subr.bf16.mxu0 0
        %1954 = vmatpush1.bf16.msra.mxu0 0
        %1955 = vmatprep.subr.bf16.mxu0 0
        %1956 = vmatpush1.bf16.msra.mxu0 0
        %1957 = vmatprep.subr.bf16.mxu0 0
        %1958 = vmatpush1.bf16.msra.mxu0 0
        %1959 = vmatprep.subr.bf16.mxu0 0
        %1960 = vmatpush1.bf16.msra.mxu0 0
        %1961 = vmatprep.subr.bf16.mxu0 0
        %1962 = vmatpush1.bf16.msra.mxu0 0
        %1963 = vmatprep.mubr.bf16.mxu0 0
        %1964 = vmatmul.mubr.bf16.gmra.mrb[0].mxu0 %v1926
        %v1965 = vpop.f32.mrb[0].mxu0
        %v1966 = vadd.f32 0.0, %v1965
        %v1967 = vpop.f32.mrb[0].mxu0
        %v1968 = vpop.f32.mrb[0].mxu0
        %v1969 = vpop.f32.mrb[0].mxu0
        %1970 = vdwg.mxu0
        %v1971 = vpack.c.bf16 %v1921, %v1921
        %v1973 = vsel %vm355, %v1971, 0
        %v1976 = vsel %vm359, %v1871, 0
        %1978 = vmatprep.subr.bf16.mxu0 0
        %1979 = vmatpush1.bf16.msra.mxu0 %v1976
        %1980 = vmatprep.subr.bf16.mxu0 0
        %1981 = vmatpush1.bf16.msra.mxu0 0
        %1982 = vmatprep.subr.bf16.mxu0 0
        %1983 = vmatpush1.bf16.msra.mxu0 0
        %1984 = vmatprep.subr.bf16.mxu0 0
        %1985 = vmatpush1.bf16.msra.mxu0 0
        %1986 = vmatprep.subr.bf16.mxu0 0
        %1987 = vmatpush1.bf16.msra.mxu0 0
        %1988 = vmatprep.subr.bf16.mxu0 0
        %1989 = vmatpush1.bf16.msra.mxu0 0
        %1990 = vmatprep.subr.bf16.mxu0 0
        %1991 = vmatpush1.bf16.msra.mxu0 0
        %1992 = vmatprep.subr.bf16.mxu0 0
        %1993 = vmatpush1.bf16.msra.mxu0 0
        %1994 = vmatprep.subr.bf16.mxu0 0
        %1995 = vmatpush1.bf16.msra.mxu0 0
        %1996 = vmatprep.subr.bf16.mxu0 0
        %1997 = vmatpush1.bf16.msra.mxu0 0
        %1998 = vmatprep.subr.bf16.mxu0 0
        %1999 = vmatpush1.bf16.msra.mxu0 0
        %2000 = vmatprep.subr.bf16.mxu0 0
        %2001 = vmatpush1.bf16.msra.mxu0 0
        %2002 = vmatprep.subr.bf16.mxu0 0
        %2003 = vmatpush1.bf16.msra.mxu0 0
        %2004 = vmatprep.subr.bf16.mxu0 0
        %2005 = vmatpush1.bf16.msra.mxu0 0
        %2006 = vmatprep.subr.bf16.mxu0 0
        %2007 = vmatpush1.bf16.msra.mxu0 0
        %2008 = vmatprep.subr.bf16.mxu0 0
        %2009 = vmatpush1.bf16.msra.mxu0 0
        %2010 = vmatprep.mubr.bf16.mxu0 0
        %2011 = vmatmul.mubr.bf16.gmra.mrb[0].mxu0 %v1973
        %v2012 = vpop.f32.mrb[0].mxu0
        %v2013 = vadd.f32 0.0, %v2012
        %v2014 = vpop.f32.mrb[0].mxu0
        %v2015 = vpop.f32.mrb[0].mxu0
        %v2016 = vpop.f32.mrb[0].mxu0
        %2017 = vdwg.mxu0
        %v2019 = vsel %vm359, %v1873, 0
        %2021 = vmatprep.subr.bf16.mxu0 0
        %2022 = vmatpush1.bf16.msra.mxu0 %v2019
        %2023 = vmatprep.subr.bf16.mxu0 0
        %2024 = vmatpush1.bf16.msra.mxu0 0
        %2025 = vmatprep.subr.bf16.mxu0 0
        %2026 = vmatpush1.bf16.msra.mxu0 0
        %2027 = vmatprep.subr.bf16.mxu0 0
        %2028 = vmatpush1.bf16.msra.mxu0 0
        %2029 = vmatprep.subr.bf16.mxu0 0
        %2030 = vmatpush1.bf16.msra.mxu0 0
        %2031 = vmatprep.subr.bf16.mxu0 0
        %2032 = vmatpush1.bf16.msra.mxu0 0
        %2033 = vmatprep.subr.bf16.mxu0 0
        %2034 = vmatpush1.bf16.msra.mxu0 0
        %2035 = vmatprep.subr.bf16.mxu0 0
        %2036 = vmatpush1.bf16.msra.mxu0 0
        %2037 = vmatprep.subr.bf16.mxu0 0
        %2038 = vmatpush1.bf16.msra.mxu0 0
        %2039 = vmatprep.subr.bf16.mxu0 0
        %2040 = vmatpush1.bf16.msra.mxu0 0
        %2041 = vmatprep.subr.bf16.mxu0 0
        %2042 = vmatpush1.bf16.msra.mxu0 0
        %2043 = vmatprep.subr.bf16.mxu0 0
        %2044 = vmatpush1.bf16.msra.mxu0 0
        %2045 = vmatprep.subr.bf16.mxu0 0
        %2046 = vmatpush1.bf16.msra.mxu0 0
        %2047 = vmatprep.subr.bf16.mxu0 0
        %2048 = vmatpush1.bf16.msra.mxu0 0
        %2049 = vmatprep.subr.bf16.mxu0 0
        %2050 = vmatpush1.bf16.msra.mxu0 0
        %2051 = vmatprep.subr.bf16.mxu0 0
        %2052 = vmatpush1.bf16.msra.mxu0 0
        %2053 = vmatprep.mubr.bf16.mxu0 0
        %2054 = vmatmul.mubr.bf16.gmra.mrb[0].mxu0 %v1973
        %v2055 = vpop.f32.mrb[0].mxu0
        %v2056 = vadd.f32 0.0, %v2055
        %v2057 = vpop.f32.mrb[0].mxu0
        %v2058 = vpop.f32.mrb[0].mxu0
        %v2059 = vpop.f32.mrb[0].mxu0
        %2060 = vdwg.mxu0
        %v2061 = vpack.c.bf16 %v1966, %v1966
        %v2062 = vpack.c.bf16 %v2013, %v2013
        %2063 = vxpose.xlu0.c.b16.start [1/8] %v2061, 128
        %2064 = vxpose.xlu0.c.b16.cont [2/8] 0, 128
        %2065 = vxpose.xlu0.c.b16.cont [3/8] 0, 128
        %2066 = vxpose.xlu0.c.b16.cont [4/8] 0, 128
        %2067 = vxpose.xlu0.c.b16.cont [5/8] 0, 128
        %2068 = vxpose.xlu0.c.b16.cont [6/8] 0, 128
        %2069 = vxpose.xlu0.c.b16.cont [7/8] 0, 128
        %2070 = vxpose.xlu0.c.b16.end [8/8] 0, 128
        %v2071 = vpop.trf.xlu0
        %v2072 = vpop.trf.xlu0
        %v2073 = vpop.trf.xlu0
        %v2074 = vpop.trf.xlu0
        %v2075 = vpop.trf.xlu0
        %v2076 = vpop.trf.xlu0
        %v2077 = vpop.trf.xlu0
        %v2078 = vpop.trf.xlu0
        %v2080 = vsel %vm355, %v2071, 0
        %v2083 = vsel %vm359, %v2062, 0
        %2085 = vmatprep.subr.bf16.mxu0 0
        %2086 = vmatpush1.bf16.msra.mxu0 %v2083
        %2087 = vmatprep.subr.bf16.mxu0 0
        %2088 = vmatpush1.bf16.msra.mxu0 0
        %2089 = vmatprep.subr.bf16.mxu0 0
        %2090 = vmatpush1.bf16.msra.mxu0 0
        %2091 = vmatprep.subr.bf16.mxu0 0
        %2092 = vmatpush1.bf16.msra.mxu0 0
        %2093 = vmatprep.subr.bf16.mxu0 0
        %2094 = vmatpush1.bf16.msra.mxu0 0
        %2095 = vmatprep.subr.bf16.mxu0 0
        %2096 = vmatpush1.bf16.msra.mxu0 0
        %2097 = vmatprep.subr.bf16.mxu0 0
        %2098 = vmatpush1.bf16.msra.mxu0 0
        %2099 = vmatprep.subr.bf16.mxu0 0
        %2100 = vmatpush1.bf16.msra.mxu0 0
        %2101 = vmatprep.subr.bf16.mxu0 0
        %2102 = vmatpush1.bf16.msra.mxu0 0
        %2103 = vmatprep.subr.bf16.mxu0 0
        %2104 = vmatpush1.bf16.msra.mxu0 0
        %2105 = vmatprep.subr.bf16.mxu0 0
        %2106 = vmatpush1.bf16.msra.mxu0 0
        %2107 = vmatprep.subr.bf16.mxu0 0
        %2108 = vmatpush1.bf16.msra.mxu0 0
        %2109 = vmatprep.subr.bf16.mxu0 0
        %2110 = vmatpush1.bf16.msra.mxu0 0
        %2111 = vmatprep.subr.bf16.mxu0 0
        %2112 = vmatpush1.bf16.msra.mxu0 0
        %2113 = vmatprep.subr.bf16.mxu0 0
        %2114 = vmatpush1.bf16.msra.mxu0 0
        %2115 = vmatprep.subr.bf16.mxu0 0
        %2116 = vmatpush1.bf16.msra.mxu0 0
        %2117 = vmatprep.mubr.bf16.mxu0 0
        %2118 = vmatmul.mubr.bf16.gmra.mrb[0].mxu0 %v2080
        %v2119 = vpop.f32.mrb[0].mxu0
        %v2120 = vadd.f32 0.0, %v2119
        %v2121 = vpop.f32.mrb[0].mxu0
        %v2122 = vpop.f32.mrb[0].mxu0
        %v2123 = vpop.f32.mrb[0].mxu0
        %2124 = vdwg.mxu0
        %v2125 = vmul.f32 %v2120, 0.17677669
        %v2126 = vsel %vm355, %v2125, 0.0
        %2127 = vadd.xlane.f32.xlu0 %v2126
        %v2128 = vpop.xlane.xlu0 %2127
        %v2129 = vrot.slane %v2128, 4
        %v2130 = vadd.f32 %v2128, %v2129
        %v2131 = vrot.slane %v2130, 2
        %v2132 = vadd.f32 %v2130, %v2131
        %v2133 = vrot.slane %v2132, 1
        %v2134 = vadd.f32 %v2132, %v2133
        %s2135 = vtos %v2134
        %v2136 = vstv %s2135
        %v2137 = vmul.f32 %v2136, %v569
        %v2138 = vsub.f32 %v2125, %v2137
        %v2139 = vmul.f32 %v2138, %v2138
        %v2140 = vsel %vm355, %v2139, 0.0
        %2141 = vadd.xlane.f32.xlu0 %v2140
        %v2142 = vpop.xlane.xlu0 %2141
        %v2143 = vrot.slane %v2142, 4
        %v2144 = vadd.f32 %v2142, %v2143
        %v2145 = vrot.slane %v2144, 2
        %v2146 = vadd.f32 %v2144, %v2145
        %v2147 = vrot.slane %v2146, 1
        %v2148 = vadd.f32 %v2146, %v2147
        %s2149 = vtos %v2148
        %v2150 = vstv %s2149
        %v2151 = vmul.f32 %v2150, %v569
        %v2152 = vadd.f32 %v2151, 1e-05
        %v2153 = vrsqrt.pop %v2152
        %v2154 = vmul.f32 %v2138, %v2153
        %v2155 = vmul.f32 %v2154, 1.442695
        %v2156 = vpow.pop %v2155
        %v2157 = vsel %vm355, %v2156, 0.0
        %2158 = vadd.xlane.f32.xlu0 %v2157
        %v2159 = vpop.xlane.xlu0 %2158
        %v2160 = vrcp.pop %v2159
        %v2161 = vmul.f32 %v2156, %v2160
        %v2162 = vmul.f32 %v2161, 0.25
        %v2163 = vadd.f32 %v2162, 0.0
        %v2164 = vpack.c.bf16 %v2056, %v2056
        %v2165 = vpack.c.bf16 %v2161, %v2161
        %v2167 = vsel %vm355, %v2164, 0
        %v2170 = vsel %vm355, %v2165, 0
        %2172 = vmatprep.subr.bf16.mxu0 0
        %2173 = vmatpush1.bf16.xpose.msra.mxu0 %v2170
        %2174 = vmatprep.subr.bf16.mxu0 0
        %2175 = vmatpush1.bf16.xpose.msra.mxu0 0
        %2176 = vmatprep.subr.bf16.mxu0 0
        %2177 = vmatpush1.bf16.xpose.msra.mxu0 0
        %2178 = vmatprep.subr.bf16.mxu0 0
        %2179 = vmatpush1.bf16.xpose.msra.mxu0 0
        %2180 = vmatprep.subr.bf16.mxu0 0
        %2181 = vmatpush1.bf16.xpose.msra.mxu0 0
        %2182 = vmatprep.subr.bf16.mxu0 0
        %2183 = vmatpush1.bf16.xpose.msra.mxu0 0
        %2184 = vmatprep.subr.bf16.mxu0 0
        %2185 = vmatpush1.bf16.xpose.msra.mxu0 0
        %2186 = vmatprep.subr.bf16.mxu0 0
        %2187 = vmatpush1.bf16.xpose.msra.mxu0 0
        %2188 = vmatprep.subr.bf16.mxu0 0
        %2189 = vmatpush1.bf16.xpose.msra.mxu0 0
        %2190 = vmatprep.subr.bf16.mxu0 0
        %2191 = vmatpush1.bf16.xpose.msra.mxu0 0
        %2192 = vmatprep.subr.bf16.mxu0 0
        %2193 = vmatpush1.bf16.xpose.msra.mxu0 0
        %2194 = vmatprep.subr.bf16.mxu0 0
        %2195 = vmatpush1.bf16.xpose.msra.mxu0 0
        %2196 = vmatprep.subr.bf16.mxu0 0
        %2197 = vmatpush1.bf16.xpose.msra.mxu0 0
        %2198 = vmatprep.subr.bf16.mxu0 0
        %2199 = vmatpush1.bf16.xpose.msra.mxu0 0
        %2200 = vmatprep.subr.bf16.mxu0 0
        %2201 = vmatpush1.bf16.xpose.msra.mxu0 0
        %2202 = vmatprep.subr.bf16.mxu0 0
        %2203 = vmatpush1.bf16.xpose.msra.mxu0 0
        %2204 = vmatprep.mubr.bf16.mxu0 0
        %2205 = vmatmul.mubr.bf16.gmra.mrb[0].mxu0 %v2167
        %v2206 = vpop.f32.mrb[0].mxu0
        %v2207 = vadd.f32 0.0, %v2206
        %v2208 = vpop.f32.mrb[0].mxu0
        %v2209 = vpop.f32.mrb[0].mxu0
        %v2210 = vpop.f32.mrb[0].mxu0
        %2211 = vdwg.mxu0
        %v2212 = vpack.c.bf16 %v2207, %v2207
        %s2213 = scalar_lea.vmem [#allocation7], 28
        %v2214 = vld [vmem:[%s2213] sm:$0xf]
        %2216 = vrot.lane.b32.xlu0 %v1924, 120
        %v2217 = vpop.permute.xlu0 %2216
        %v2219 = vsel %vm355, %v2217, 0
        %v2222 = vsel %vm359, %v2214, 0
        %2224 = vmatprep.subr.bf16.mxu0 0
        %2225 = vmatpush1.bf16.msra.mxu0 %v2222
        %2226 = vmatprep.subr.bf16.mxu0 0
        %2227 = vmatpush1.bf16.msra.mxu0 0
        %2228 = vmatprep.subr.bf16.mxu0 0
        %2229 = vmatpush1.bf16.msra.mxu0 0
        %2230 = vmatprep.subr.bf16.mxu0 0
        %2231 = vmatpush1.bf16.msra.mxu0 0
        %2232 = vmatprep.subr.bf16.mxu0 0
        %2233 = vmatpush1.bf16.msra.mxu0 0
        %2234 = vmatprep.subr.bf16.mxu0 0
        %2235 = vmatpush1.bf16.msra.mxu0 0
        %2236 = vmatprep.subr.bf16.mxu0 0
        %2237 = vmatpush1.bf16.msra.mxu0 0
        %2238 = vmatprep.subr.bf16.mxu0 0
        %2239 = vmatpush1.bf16.msra.mxu0 0
        %2240 = vmatprep.subr.bf16.mxu0 0
        %2241 = vmatpush1.bf16.msra.mxu0 0
        %2242 = vmatprep.subr.bf16.mxu0 0
        %2243 = vmatpush1.bf16.msra.mxu0 0
        %2244 = vmatprep.subr.bf16.mxu0 0
        %2245 = vmatpush1.bf16.msra.mxu0 0
        %2246 = vmatprep.subr.bf16.mxu0 0
        %2247 = vmatpush1.bf16.msra.mxu0 0
        %2248 = vmatprep.subr.bf16.mxu0 0
        %2249 = vmatpush1.bf16.msra.mxu0 0
        %2250 = vmatprep.subr.bf16.mxu0 0
        %2251 = vmatpush1.bf16.msra.mxu0 0
        %2252 = vmatprep.subr.bf16.mxu0 0
        %2253 = vmatpush1.bf16.msra.mxu0 0
        %2254 = vmatprep.subr.bf16.mxu0 0
        %2255 = vmatpush1.bf16.msra.mxu0 0
        %2256 = vmatprep.mubr.bf16.mxu0 0
        %2257 = vmatmul.mubr.bf16.gmra.mrb[0].mxu0 %v2219
        %v2258 = vpop.f32.mrb[0].mxu0
        %v2259 = vadd.f32 0.0, %v2258
        %v2260 = vpop.f32.mrb[0].mxu0
        %v2261 = vpop.f32.mrb[0].mxu0
        %v2262 = vpop.f32.mrb[0].mxu0
        %2263 = vdwg.mxu0
        %2265 = vrot.lane.b32.xlu0 %v1971, 120
        %v2266 = vpop.permute.xlu0 %2265
        %v2268 = vsel %vm355, %v2266, 0
        %2270 = vmatprep.subr.bf16.mxu0 0
        %2271 = vmatpush1.bf16.msra.mxu0 %v1976
        %2272 = vmatprep.subr.bf16.mxu0 0
        %2273 = vmatpush1.bf16.msra.mxu0 0
        %2274 = vmatprep.subr.bf16.mxu0 0
        %2275 = vmatpush1.bf16.msra.mxu0 0
        %2276 = vmatprep.subr.bf16.mxu0 0
        %2277 = vmatpush1.bf16.msra.mxu0 0
        %2278 = vmatprep.subr.bf16.mxu0 0
        %2279 = vmatpush1.bf16.msra.mxu0 0
        %2280 = vmatprep.subr.bf16.mxu0 0
        %2281 = vmatpush1.bf16.msra.mxu0 0
        %2282 = vmatprep.subr.bf16.mxu0 0
        %2283 = vmatpush1.bf16.msra.mxu0 0
        %2284 = vmatprep.subr.bf16.mxu0 0
        %2285 = vmatpush1.bf16.msra.mxu0 0
        %2286 = vmatprep.subr.bf16.mxu0 0
        %2287 = vmatpush1.bf16.msra.mxu0 0
        %2288 = vmatprep.subr.bf16.mxu0 0
        %2289 = vmatpush1.bf16.msra.mxu0 0
        %2290 = vmatprep.subr.bf16.mxu0 0
        %2291 = vmatpush1.bf16.msra.mxu0 0
        %2292 = vmatprep.subr.bf16.mxu0 0
        %2293 = vmatpush1.bf16.msra.mxu0 0
        %2294 = vmatprep.subr.bf16.mxu0 0
        %2295 = vmatpush1.bf16.msra.mxu0 0
        %2296 = vmatprep.subr.bf16.mxu0 0
        %2297 = vmatpush1.bf16.msra.mxu0 0
        %2298 = vmatprep.subr.bf16.mxu0 0
        %2299 = vmatpush1.bf16.msra.mxu0 0
        %2300 = vmatprep.subr.bf16.mxu0 0
        %2301 = vmatpush1.bf16.msra.mxu0 0
        %2302 = vmatprep.mubr.bf16.mxu0 0
        %2303 = vmatmul.mubr.bf16.gmra.mrb[0].mxu0 %v2268
        %v2304 = vpop.f32.mrb[0].mxu0
        %v2305 = vadd.f32 0.0, %v2304
        %v2306 = vpop.f32.mrb[0].mxu0
        %v2307 = vpop.f32.mrb[0].mxu0
        %v2308 = vpop.f32.mrb[0].mxu0
        %2309 = vdwg.mxu0
        %2310 = vmatprep.subr.bf16.mxu0 0
        %2311 = vmatpush1.bf16.msra.mxu0 %v2019
        %2312 = vmatprep.subr.bf16.mxu0 0
        %2313 = vmatpush1.bf16.msra.mxu0 0
        %2314 = vmatprep.subr.bf16.mxu0 0
        %2315 = vmatpush1.bf16.msra.mxu0 0
        %2316 = vmatprep.subr.bf16.mxu0 0
        %2317 = vmatpush1.bf16.msra.mxu0 0
        %2318 = vmatprep.subr.bf16.mxu0 0
        %2319 = vmatpush1.bf16.msra.mxu0 0
        %2320 = vmatprep.subr.bf16.mxu0 0
        %2321 = vmatpush1.bf16.msra.mxu0 0
        %2322 = vmatprep.subr.bf16.mxu0 0
        %2323 = vmatpush1.bf16.msra.mxu0 0
        %2324 = vmatprep.subr.bf16.mxu0 0
        %2325 = vmatpush1.bf16.msra.mxu0 0
        %2326 = vmatprep.subr.bf16.mxu0 0
        %2327 = vmatpush1.bf16.msra.mxu0 0
        %2328 = vmatprep.subr.bf16.mxu0 0
        %2329 = vmatpush1.bf16.msra.mxu0 0
        %2330 = vmatprep.subr.bf16.mxu0 0
        %2331 = vmatpush1.bf16.msra.mxu0 0
        %2332 = vmatprep.subr.bf16.mxu0 0
        %2333 = vmatpush1.bf16.msra.mxu0 0
        %2334 = vmatprep.subr.bf16.mxu0 0
        %2335 = vmatpush1.bf16.msra.mxu0 0
        %2336 = vmatprep.subr.bf16.mxu0 0
        %2337 = vmatpush1.bf16.msra.mxu0 0
        %2338 = vmatprep.subr.bf16.mxu0 0
        %2339 = vmatpush1.bf16.msra.mxu0 0
        %2340 = vmatprep.subr.bf16.mxu0 0
        %2341 = vmatpush1.bf16.msra.mxu0 0
        %2342 = vmatprep.mubr.bf16.mxu0 0
        %2343 = vmatmul.mubr.bf16.gmra.mrb[0].mxu0 %v2268
        %v2344 = vpop.f32.mrb[0].mxu0
        %v2345 = vadd.f32 0.0, %v2344
        %v2346 = vpop.f32.mrb[0].mxu0
        %v2347 = vpop.f32.mrb[0].mxu0
        %v2348 = vpop.f32.mrb[0].mxu0
        %2349 = vdwg.mxu0
        %v2350 = vpack.c.bf16 %v2259, %v2259
        %v2351 = vpack.c.bf16 %v2305, %v2305
        %2352 = vxpose.xlu0.c.b16.start [1/8] %v2350, 128
        %2353 = vxpose.xlu0.c.b16.cont [2/8] 0, 128
        %2354 = vxpose.xlu0.c.b16.cont [3/8] 0, 128
        %2355 = vxpose.xlu0.c.b16.cont [4/8] 0, 128
        %2356 = vxpose.xlu0.c.b16.cont [5/8] 0, 128
        %2357 = vxpose.xlu0.c.b16.cont [6/8] 0, 128
        %2358 = vxpose.xlu0.c.b16.cont [7/8] 0, 128
        %2359 = vxpose.xlu0.c.b16.end [8/8] 0, 128
        %v2360 = vpop.trf.xlu0
        %v2361 = vpop.trf.xlu0
        %v2362 = vpop.trf.xlu0
        %v2363 = vpop.trf.xlu0
        %v2364 = vpop.trf.xlu0
        %v2365 = vpop.trf.xlu0
        %v2366 = vpop.trf.xlu0
        %v2367 = vpop.trf.xlu0
        %v2369 = vsel %vm355, %v2360, 0
        %v2372 = vsel %vm359, %v2351, 0
        %2374 = vmatprep.subr.bf16.mxu0 0
        %2375 = vmatpush1.bf16.msra.mxu0 %v2372
        %2376 = vmatprep.subr.bf16.mxu0 0
        %2377 = vmatpush1.bf16.msra.mxu0 0
        %2378 = vmatprep.subr.bf16.mxu0 0
        %2379 = vmatpush1.bf16.msra.mxu0 0
        %2380 = vmatprep.subr.bf16.mxu0 0
        %2381 = vmatpush1.bf16.msra.mxu0 0
        %2382 = vmatprep.subr.bf16.mxu0 0
        %2383 = vmatpush1.bf16.msra.mxu0 0
        %2384 = vmatprep.subr.bf16.mxu0 0
        %2385 = vmatpush1.bf16.msra.mxu0 0
        %2386 = vmatprep.subr.bf16.mxu0 0
        %2387 = vmatpush1.bf16.msra.mxu0 0
        %2388 = vmatprep.subr.bf16.mxu0 0
        %2389 = vmatpush1.bf16.msra.mxu0 0
        %2390 = vmatprep.subr.bf16.mxu0 0
        %2391 = vmatpush1.bf16.msra.mxu0 0
        %2392 = vmatprep.subr.bf16.mxu0 0
        %2393 = vmatpush1.bf16.msra.mxu0 0
        %2394 = vmatprep.subr.bf16.mxu0 0
        %2395 = vmatpush1.bf16.msra.mxu0 0
        %2396 = vmatprep.subr.bf16.mxu0 0
        %2397 = vmatpush1.bf16.msra.mxu0 0
        %2398 = vmatprep.subr.bf16.mxu0 0
        %2399 = vmatpush1.bf16.msra.mxu0 0
        %2400 = vmatprep.subr.bf16.mxu0 0
        %2401 = vmatpush1.bf16.msra.mxu0 0
        %2402 = vmatprep.subr.bf16.mxu0 0
        %2403 = vmatpush1.bf16.msra.mxu0 0
        %2404 = vmatprep.subr.bf16.mxu0 0
        %2405 = vmatpush1.bf16.msra.mxu0 0
        %2406 = vmatprep.mubr.bf16.mxu0 0
        %2407 = vmatmul.mubr.bf16.gmra.mrb[0].mxu0 %v2369
        %v2408 = vpop.f32.mrb[0].mxu0
        %v2409 = vadd.f32 0.0, %v2408
        %v2410 = vpop.f32.mrb[0].mxu0
        %v2411 = vpop.f32.mrb[0].mxu0
        %v2412 = vpop.f32.mrb[0].mxu0
        %2413 = vdwg.mxu0
        %v2414 = vmul.f32 %v2409, 0.17677669
        %v2415 = vsel %vm355, %v2414, 0.0
        %2416 = vadd.xlane.f32.xlu0 %v2415
        %v2417 = vpop.xlane.xlu0 %2416
        %v2418 = vrot.slane %v2417, 4
        %v2419 = vadd.f32 %v2417, %v2418
        %v2420 = vrot.slane %v2419, 2
        %v2421 = vadd.f32 %v2419, %v2420
        %v2422 = vrot.slane %v2421, 1
        %v2423 = vadd.f32 %v2421, %v2422
        %s2424 = vtos %v2423
        %v2425 = vstv %s2424
        %v2426 = vmul.f32 %v2425, %v569
        %v2427 = vsub.f32 %v2414, %v2426
        %v2428 = vmul.f32 %v2427, %v2427
        %v2429 = vsel %vm355, %v2428, 0.0
        %2430 = vadd.xlane.f32.xlu0 %v2429
        %v2431 = vpop.xlane.xlu0 %2430
        %v2432 = vrot.slane %v2431, 4
        %v2433 = vadd.f32 %v2431, %v2432
        %v2434 = vrot.slane %v2433, 2
        %v2435 = vadd.f32 %v2433, %v2434
        %v2436 = vrot.slane %v2435, 1
        %v2437 = vadd.f32 %v2435, %v2436
        %s2438 = vtos %v2437
        %v2439 = vstv %s2438
        %v2440 = vmul.f32 %v2439, %v569
        %v2441 = vadd.f32 %v2440, 1e-05
        %v2442 = vrsqrt.pop %v2441
        %v2443 = vmul.f32 %v2427, %v2442
        %v2444 = vmul.f32 %v2443, 1.442695
        %v2445 = vpow.pop %v2444
        %v2446 = vsel %vm355, %v2445, 0.0
        %2447 = vadd.xlane.f32.xlu0 %v2446
        %v2448 = vpop.xlane.xlu0 %2447
        %v2449 = vrcp.pop %v2448
        %v2450 = vmul.f32 %v2445, %v2449
        %v2451 = vmul.f32 %v2450, 0.25
        %v2452 = vadd.f32 %v2163, %v2451
        %v2453 = vpack.c.bf16 %v2345, %v2345
        %v2454 = vpack.c.bf16 %v2450, %v2450
        %v2456 = vsel %vm355, %v2453, 0
        %v2459 = vsel %vm355, %v2454, 0
        %2461 = vmatprep.subr.bf16.mxu0 0
        %2462 = vmatpush1.bf16.xpose.msra.mxu0 %v2459
        %2463 = vmatprep.subr.bf16.mxu0 0
        %2464 = vmatpush1.bf16.xpose.msra.mxu0 0
        %2465 = vmatprep.subr.bf16.mxu0 0
        %2466 = vmatpush1.bf16.xpose.msra.mxu0 0
        %2467 = vmatprep.subr.bf16.mxu0 0
        %2468 = vmatpush1.bf16.xpose.msra.mxu0 0
        %2469 = vmatprep.subr.bf16.mxu0 0
        %2470 = vmatpush1.bf16.xpose.msra.mxu0 0
        %2471 = vmatprep.subr.bf16.mxu0 0
        %2472 = vmatpush1.bf16.xpose.msra.mxu0 0
        %2473 = vmatprep.subr.bf16.mxu0 0
        %2474 = vmatpush1.bf16.xpose.msra.mxu0 0
        %2475 = vmatprep.subr.bf16.mxu0 0
        %2476 = vmatpush1.bf16.xpose.msra.mxu0 0
        %2477 = vmatprep.subr.bf16.mxu0 0
        %2478 = vmatpush1.bf16.xpose.msra.mxu0 0
        %2479 = vmatprep.subr.bf16.mxu0 0
        %2480 = vmatpush1.bf16.xpose.msra.mxu0 0
        %2481 = vmatprep.subr.bf16.mxu0 0
        %2482 = vmatpush1.bf16.xpose.msra.mxu0 0
        %2483 = vmatprep.subr.bf16.mxu0 0
        %2484 = vmatpush1.bf16.xpose.msra.mxu0 0
        %2485 = vmatprep.subr.bf16.mxu0 0
        %2486 = vmatpush1.bf16.xpose.msra.mxu0 0
        %2487 = vmatprep.subr.bf16.mxu0 0
        %2488 = vmatpush1.bf16.xpose.msra.mxu0 0
        %2489 = vmatprep.subr.bf16.mxu0 0
        %2490 = vmatpush1.bf16.xpose.msra.mxu0 0
        %2491 = vmatprep.subr.bf16.mxu0 0
        %2492 = vmatpush1.bf16.xpose.msra.mxu0 0
        %2493 = vmatprep.mubr.bf16.mxu0 0
        %2494 = vmatmul.mubr.bf16.gmra.mrb[0].mxu0 %v2456
        %v2495 = vpop.f32.mrb[0].mxu0
        %v2496 = vadd.f32 0.0, %v2495
        %v2497 = vpop.f32.mrb[0].mxu0
        %v2498 = vpop.f32.mrb[0].mxu0
        %v2499 = vpop.f32.mrb[0].mxu0
        %2500 = vdwg.mxu0
        %v2501 = vpack.c.bf16 %v2496, %v2496
        %v2503 = vsel %vm355, %v2501, 0
        %v2506 = vsel %vm359, %v1876, 0
        %2508 = vmatprep.subr.bf16.mxu0 0
        %2509 = vmatpush1.bf16.msra.mxu0 %v2506
        %2510 = vmatprep.subr.bf16.mxu0 0
        %2511 = vmatpush1.bf16.msra.mxu0 0
        %2512 = vmatprep.subr.bf16.mxu0 0
        %2513 = vmatpush1.bf16.msra.mxu0 0
        %2514 = vmatprep.subr.bf16.mxu0 0
        %2515 = vmatpush1.bf16.msra.mxu0 0
        %2516 = vmatprep.subr.bf16.mxu0 0
        %2517 = vmatpush1.bf16.msra.mxu0 0
        %2518 = vmatprep.subr.bf16.mxu0 0
        %2519 = vmatpush1.bf16.msra.mxu0 0
        %2520 = vmatprep.subr.bf16.mxu0 0
        %2521 = vmatpush1.bf16.msra.mxu0 0
        %2522 = vmatprep.subr.bf16.mxu0 0
        %2523 = vmatpush1.bf16.msra.mxu0 0
        %2524 = vmatprep.subr.bf16.mxu0 0
        %2525 = vmatpush1.bf16.msra.mxu0 0
        %2526 = vmatprep.subr.bf16.mxu0 0
        %2527 = vmatpush1.bf16.msra.mxu0 0
        %2528 = vmatprep.subr.bf16.mxu0 0
        %2529 = vmatpush1.bf16.msra.mxu0 0
        %2530 = vmatprep.subr.bf16.mxu0 0
        %2531 = vmatpush1.bf16.msra.mxu0 0
        %2532 = vmatprep.subr.bf16.mxu0 0
        %2533 = vmatpush1.bf16.msra.mxu0 0
        %2534 = vmatprep.subr.bf16.mxu0 0
        %2535 = vmatpush1.bf16.msra.mxu0 0
        %2536 = vmatprep.subr.bf16.mxu0 0
        %2537 = vmatpush1.bf16.msra.mxu0 0
        %2538 = vmatprep.subr.bf16.mxu0 0
        %2539 = vmatpush1.bf16.msra.mxu0 0
        %2540 = vmatprep.mubr.bf16.mxu0 0
        %2541 = vmatmul.mubr.bf16.gmra.mrb[0].mxu0 %v2503
        %v2542 = vpop.f32.mrb[0].mxu0
        %v2543 = vadd.f32 0.0, %v2542
        %v2544 = vpop.f32.mrb[0].mxu0
        %v2545 = vpop.f32.mrb[0].mxu0
        %v2546 = vpop.f32.mrb[0].mxu0
        %2547 = vdwg.mxu0
        %v2549 = vsel %vm355, %v2212, 0
        %v2552 = vsel %vm359, %v1875, 0
        %2554 = vmatprep.subr.bf16.mxu0 0
        %2555 = vmatpush1.bf16.msra.mxu0 %v2552
        %2556 = vmatprep.subr.bf16.mxu0 0
        %2557 = vmatpush1.bf16.msra.mxu0 0
        %2558 = vmatprep.subr.bf16.mxu0 0
        %2559 = vmatpush1.bf16.msra.mxu0 0
        %2560 = vmatprep.subr.bf16.mxu0 0
        %2561 = vmatpush1.bf16.msra.mxu0 0
        %2562 = vmatprep.subr.bf16.mxu0 0
        %2563 = vmatpush1.bf16.msra.mxu0 0
        %2564 = vmatprep.subr.bf16.mxu0 0
        %2565 = vmatpush1.bf16.msra.mxu0 0
        %2566 = vmatprep.subr.bf16.mxu0 0
        %2567 = vmatpush1.bf16.msra.mxu0 0
        %2568 = vmatprep.subr.bf16.mxu0 0
        %2569 = vmatpush1.bf16.msra.mxu0 0
        %2570 = vmatprep.subr.bf16.mxu0 0
        %2571 = vmatpush1.bf16.msra.mxu0 0
        %2572 = vmatprep.subr.bf16.mxu0 0
        %2573 = vmatpush1.bf16.msra.mxu0 0
        %2574 = vmatprep.subr.bf16.mxu0 0
        %2575 = vmatpush1.bf16.msra.mxu0 0
        %2576 = vmatprep.subr.bf16.mxu0 0
        %2577 = vmatpush1.bf16.msra.mxu0 0
        %2578 = vmatprep.subr.bf16.mxu0 0
        %2579 = vmatpush1.bf16.msra.mxu0 0
        %2580 = vmatprep.subr.bf16.mxu0 0
        %2581 = vmatpush1.bf16.msra.mxu0 0
        %2582 = vmatprep.subr.bf16.mxu0 0
        %2583 = vmatpush1.bf16.msra.mxu0 0
        %2584 = vmatprep.subr.bf16.mxu0 0
        %2585 = vmatpush1.bf16.msra.mxu0 0
        %2586 = vmatprep.mubr.bf16.mxu0 0
        %2587 = vmatmul.mubr.bf16.gmra.mrb[0].mxu0 %v2549
        %v2588 = vpop.f32.mrb[0].mxu0
        %v2589 = vadd.f32 %v2543, %v2588
        %v2590 = vpop.f32.mrb[0].mxu0
        %v2591 = vpop.f32.mrb[0].mxu0
        %v2592 = vpop.f32.mrb[0].mxu0
        %2593 = vdwg.mxu0
        %s2594 = scalar_lea.vmem [#allocation7], 32
        %v2595 = vld [vmem:[%s2594] sm:$0xf]
        %2596 = vrot.lane.b32.xlu0 %v1924, 112
        %v2597 = vpop.permute.xlu0 %2596
        %v2599 = vsel %vm355, %v2597, 0
        %v2602 = vsel %vm359, %v2595, 0
        %2604 = vmatprep.subr.bf16.mxu0 0
        %2605 = vmatpush1.bf16.msra.mxu0 %v2602
        %2606 = vmatprep.subr.bf16.mxu0 0
        %2607 = vmatpush1.bf16.msra.mxu0 0
        %2608 = vmatprep.subr.bf16.mxu0 0
        %2609 = vmatpush1.bf16.msra.mxu0 0
        %2610 = vmatprep.subr.bf16.mxu0 0
        %2611 = vmatpush1.bf16.msra.mxu0 0
        %2612 = vmatprep.subr.bf16.mxu0 0
        %2613 = vmatpush1.bf16.msra.mxu0 0
        %2614 = vmatprep.subr.bf16.mxu0 0
        %2615 = vmatpush1.bf16.msra.mxu0 0
        %2616 = vmatprep.subr.bf16.mxu0 0
        %2617 = vmatpush1.bf16.msra.mxu0 0
        %2618 = vmatprep.subr.bf16.mxu0 0
        %2619 = vmatpush1.bf16.msra.mxu0 0
        %2620 = vmatprep.subr.bf16.mxu0 0
        %2621 = vmatpush1.bf16.msra.mxu0 0
        %2622 = vmatprep.subr.bf16.mxu0 0
        %2623 = vmatpush1.bf16.msra.mxu0 0
        %2624 = vmatprep.subr.bf16.mxu0 0
        %2625 = vmatpush1.bf16.msra.mxu0 0
        %2626 = vmatprep.subr.bf16.mxu0 0
        %2627 = vmatpush1.bf16.msra.mxu0 0
        %2628 = vmatprep.subr.bf16.mxu0 0
        %2629 = vmatpush1.bf16.msra.mxu0 0
        %2630 = vmatprep.subr.bf16.mxu0 0
        %2631 = vmatpush1.bf16.msra.mxu0 0
        %2632 = vmatprep.subr.bf16.mxu0 0
        %2633 = vmatpush1.bf16.msra.mxu0 0
        %2634 = vmatprep.subr.bf16.mxu0 0
        %2635 = vmatpush1.bf16.msra.mxu0 0
        %2636 = vmatprep.mubr.bf16.mxu0 0
        %2637 = vmatmul.mubr.bf16.gmra.mrb[0].mxu0 %v2599
        %v2638 = vpop.f32.mrb[0].mxu0
        %v2639 = vadd.f32 0.0, %v2638
        %v2640 = vpop.f32.mrb[0].mxu0
        %v2641 = vpop.f32.mrb[0].mxu0
        %v2642 = vpop.f32.mrb[0].mxu0
        %2643 = vdwg.mxu0
        %2644 = vrot.lane.b32.xlu0 %v1971, 112
        %v2645 = vpop.permute.xlu0 %2644
        %v2647 = vsel %vm355, %v2645, 0
        %2649 = vmatprep.subr.bf16.mxu0 0
        %2650 = vmatpush1.bf16.msra.mxu0 %v1976
        %2651 = vmatprep.subr.bf16.mxu0 0
        %2652 = vmatpush1.bf16.msra.mxu0 0
        %2653 = vmatprep.subr.bf16.mxu0 0
        %2654 = vmatpush1.bf16.msra.mxu0 0
        %2655 = vmatprep.subr.bf16.mxu0 0
        %2656 = vmatpush1.bf16.msra.mxu0 0
        %2657 = vmatprep.subr.bf16.mxu0 0
        %2658 = vmatpush1.bf16.msra.mxu0 0
        %2659 = vmatprep.subr.bf16.mxu0 0
        %2660 = vmatpush1.bf16.msra.mxu0 0
        %2661 = vmatprep.subr.bf16.mxu0 0
        %2662 = vmatpush1.bf16.msra.mxu0 0
        %2663 = vmatprep.subr.bf16.mxu0 0
        %2664 = vmatpush1.bf16.msra.mxu0 0
        %2665 = vmatprep.subr.bf16.mxu0 0
        %2666 = vmatpush1.bf16.msra.mxu0 0
        %2667 = vmatprep.subr.bf16.mxu0 0
        %2668 = vmatpush1.bf16.msra.mxu0 0
        %2669 = vmatprep.subr.bf16.mxu0 0
        %2670 = vmatpush1.bf16.msra.mxu0 0
        %2671 = vmatprep.subr.bf16.mxu0 0
        %2672 = vmatpush1.bf16.msra.mxu0 0
        %2673 = vmatprep.subr.bf16.mxu0 0
        %2674 = vmatpush1.bf16.msra.mxu0 0
        %2675 = vmatprep.subr.bf16.mxu0 0
        %2676 = vmatpush1.bf16.msra.mxu0 0
        %2677 = vmatprep.subr.bf16.mxu0 0
        %2678 = vmatpush1.bf16.msra.mxu0 0
        %2679 = vmatprep.subr.bf16.mxu0 0
        %2680 = vmatpush1.bf16.msra.mxu0 0
        %2681 = vmatprep.mubr.bf16.mxu0 0
        %2682 = vmatmul.mubr.bf16.gmra.mrb[0].mxu0 %v2647
        %v2683 = vpop.f32.mrb[0].mxu0
        %v2684 = vadd.f32 0.0, %v2683
        %v2685 = vpop.f32.mrb[0].mxu0
        %v2686 = vpop.f32.mrb[0].mxu0
        %v2687 = vpop.f32.mrb[0].mxu0
        %2688 = vdwg.mxu0
        %2689 = vmatprep.subr.bf16.mxu0 0
        %2690 = vmatpush1.bf16.msra.mxu0 %v2019
        %2691 = vmatprep.subr.bf16.mxu0 0
        %2692 = vmatpush1.bf16.msra.mxu0 0
        %2693 = vmatprep.subr.bf16.mxu0 0
        %2694 = vmatpush1.bf16.msra.mxu0 0
        %2695 = vmatprep.subr.bf16.mxu0 0
        %2696 = vmatpush1.bf16.msra.mxu0 0
        %2697 = vmatprep.subr.bf16.mxu0 0
        %2698 = vmatpush1.bf16.msra.mxu0 0
        %2699 = vmatprep.subr.bf16.mxu0 0
        %2700 = vmatpush1.bf16.msra.mxu0 0
        %2701 = vmatprep.subr.bf16.mxu0 0
        %2702 = vmatpush1.bf16.msra.mxu0 0
        %2703 = vmatprep.subr.bf16.mxu0 0
        %2704 = vmatpush1.bf16.msra.mxu0 0
        %2705 = vmatprep.subr.bf16.mxu0 0
        %2706 = vmatpush1.bf16.msra.mxu0 0
        %2707 = vmatprep.subr.bf16.mxu0 0
        %2708 = vmatpush1.bf16.msra.mxu0 0
        %2709 = vmatprep.subr.bf16.mxu0 0
        %2710 = vmatpush1.bf16.msra.mxu0 0
        %2711 = vmatprep.subr.bf16.mxu0 0
        %2712 = vmatpush1.bf16.msra.mxu0 0
        %2713 = vmatprep.subr.bf16.mxu0 0
        %2714 = vmatpush1.bf16.msra.mxu0 0
        %2715 = vmatprep.subr.bf16.mxu0 0
        %2716 = vmatpush1.bf16.msra.mxu0 0
        %2717 = vmatprep.subr.bf16.mxu0 0
        %2718 = vmatpush1.bf16.msra.mxu0 0
        %2719 = vmatprep.subr.bf16.mxu0 0
        %2720 = vmatpush1.bf16.msra.mxu0 0
        %2721 = vmatprep.mubr.bf16.mxu0 0
        %2722 = vmatmul.mubr.bf16.gmra.mrb[0].mxu0 %v2647
        %v2723 = vpop.f32.mrb[0].mxu0
        %v2724 = vadd.f32 0.0, %v2723
        %v2725 = vpop.f32.mrb[0].mxu0
        %v2726 = vpop.f32.mrb[0].mxu0
        %v2727 = vpop.f32.mrb[0].mxu0
        %2728 = vdwg.mxu0
        %v2729 = vpack.c.bf16 %v2639, %v2639
        %v2730 = vpack.c.bf16 %v2684, %v2684
        %2731 = vxpose.xlu0.c.b16.start [1/8] %v2729, 128
        %2732 = vxpose.xlu0.c.b16.cont [2/8] 0, 128
        %2733 = vxpose.xlu0.c.b16.cont [3/8] 0, 128
        %2734 = vxpose.xlu0.c.b16.cont [4/8] 0, 128
        %2735 = vxpose.xlu0.c.b16.cont [5/8] 0, 128
        %2736 = vxpose.xlu0.c.b16.cont [6/8] 0, 128
        %2737 = vxpose.xlu0.c.b16.cont [7/8] 0, 128
        %2738 = vxpose.xlu0.c.b16.end [8/8] 0, 128
        %v2739 = vpop.trf.xlu0
        %v2740 = vpop.trf.xlu0
        %v2741 = vpop.trf.xlu0
        %v2742 = vpop.trf.xlu0
        %v2743 = vpop.trf.xlu0
        %v2744 = vpop.trf.xlu0
        %v2745 = vpop.trf.xlu0
        %v2746 = vpop.trf.xlu0
        %v2748 = vsel %vm355, %v2739, 0
        %v2751 = vsel %vm359, %v2730, 0
        %2753 = vmatprep.subr.bf16.mxu0 0
        %2754 = vmatpush1.bf16.msra.mxu0 %v2751
        %2755 = vmatprep.subr.bf16.mxu0 0
        %2756 = vmatpush1.bf16.msra.mxu0 0
        %2757 = vmatprep.subr.bf16.mxu0 0
        %2758 = vmatpush1.bf16.msra.mxu0 0
        %2759 = vmatprep.subr.bf16.mxu0 0
        %2760 = vmatpush1.bf16.msra.mxu0 0
        %2761 = vmatprep.subr.bf16.mxu0 0
        %2762 = vmatpush1.bf16.msra.mxu0 0
        %2763 = vmatprep.subr.bf16.mxu0 0
        %2764 = vmatpush1.bf16.msra.mxu0 0
        %2765 = vmatprep.subr.bf16.mxu0 0
        %2766 = vmatpush1.bf16.msra.mxu0 0
        %2767 = vmatprep.subr.bf16.mxu0 0
        %2768 = vmatpush1.bf16.msra.mxu0 0
        %2769 = vmatprep.subr.bf16.mxu0 0
        %2770 = vmatpush1.bf16.msra.mxu0 0
        %2771 = vmatprep.subr.bf16.mxu0 0
        %2772 = vmatpush1.bf16.msra.mxu0 0
        %2773 = vmatprep.subr.bf16.mxu0 0
        %2774 = vmatpush1.bf16.msra.mxu0 0
        %2775 = vmatprep.subr.bf16.mxu0 0
        %2776 = vmatpush1.bf16.msra.mxu0 0
        %2777 = vmatprep.subr.bf16.mxu0 0
        %2778 = vmatpush1.bf16.msra.mxu0 0
        %2779 = vmatprep.subr.bf16.mxu0 0
        %2780 = vmatpush1.bf16.msra.mxu0 0
        %2781 = vmatprep.subr.bf16.mxu0 0
        %2782 = vmatpush1.bf16.msra.mxu0 0
        %2783 = vmatprep.subr.bf16.mxu0 0
        %2784 = vmatpush1.bf16.msra.mxu0 0
        %2785 = vmatprep.mubr.bf16.mxu0 0
        %2786 = vmatmul.mubr.bf16.gmra.mrb[0].mxu0 %v2748
        %v2787 = vpop.f32.mrb[0].mxu0
        %v2788 = vadd.f32 0.0, %v2787
        %v2789 = vpop.f32.mrb[0].mxu0
        %v2790 = vpop.f32.mrb[0].mxu0
        %v2791 = vpop.f32.mrb[0].mxu0
        %2792 = vdwg.mxu0
        %v2793 = vmul.f32 %v2788, 0.17677669
        %v2794 = vsel %vm355, %v2793, 0.0
        %2795 = vadd.xlane.f32.xlu0 %v2794
        %v2796 = vpop.xlane.xlu0 %2795
        %v2797 = vrot.slane %v2796, 4
        %v2798 = vadd.f32 %v2796, %v2797
        %v2799 = vrot.slane %v2798, 2
        %v2800 = vadd.f32 %v2798, %v2799
        %v2801 = vrot.slane %v2800, 1
        %v2802 = vadd.f32 %v2800, %v2801
        %s2803 = vtos %v2802
        %v2804 = vstv %s2803
        %v2805 = vmul.f32 %v2804, %v569
        %v2806 = vsub.f32 %v2793, %v2805
        %v2807 = vmul.f32 %v2806, %v2806
        %v2808 = vsel %vm355, %v2807, 0.0
        %2809 = vadd.xlane.f32.xlu0 %v2808
        %v2810 = vpop.xlane.xlu0 %2809
        %v2811 = vrot.slane %v2810, 4
        %v2812 = vadd.f32 %v2810, %v2811
        %v2813 = vrot.slane %v2812, 2
        %v2814 = vadd.f32 %v2812, %v2813
        %v2815 = vrot.slane %v2814, 1
        %v2816 = vadd.f32 %v2814, %v2815
        %s2817 = vtos %v2816
        %v2818 = vstv %s2817
        %v2819 = vmul.f32 %v2818, %v569
        %v2820 = vadd.f32 %v2819, 1e-05
        %v2821 = vrsqrt.pop %v2820
        %v2822 = vmul.f32 %v2806, %v2821
        %v2823 = vmul.f32 %v2822, 1.442695
        %v2824 = vpow.pop %v2823
        %v2825 = vsel %vm355, %v2824, 0.0
        %2826 = vadd.xlane.f32.xlu0 %v2825
        %v2827 = vpop.xlane.xlu0 %2826
        %v2828 = vrcp.pop %v2827
        %v2829 = vmul.f32 %v2824, %v2828
        %v2830 = vmul.f32 %v2829, 0.25
        %v2831 = vadd.f32 %v2452, %v2830
        %v2832 = vpack.c.bf16 %v2724, %v2724
        %v2833 = vpack.c.bf16 %v2829, %v2829
        %v2835 = vsel %vm355, %v2832, 0
        %v2838 = vsel %vm355, %v2833, 0
        %2840 = vmatprep.subr.bf16.mxu0 0
        %2841 = vmatpush1.bf16.xpose.msra.mxu0 %v2838
        %2842 = vmatprep.subr.bf16.mxu0 0
        %2843 = vmatpush1.bf16.xpose.msra.mxu0 0
        %2844 = vmatprep.subr.bf16.mxu0 0
        %2845 = vmatpush1.bf16.xpose.msra.mxu0 0
        %2846 = vmatprep.subr.bf16.mxu0 0
        %2847 = vmatpush1.bf16.xpose.msra.mxu0 0
        %2848 = vmatprep.subr.bf16.mxu0 0
        %2849 = vmatpush1.bf16.xpose.msra.mxu0 0
        %2850 = vmatprep.subr.bf16.mxu0 0
        %2851 = vmatpush1.bf16.xpose.msra.mxu0 0
        %2852 = vmatprep.subr.bf16.mxu0 0
        %2853 = vmatpush1.bf16.xpose.msra.mxu0 0
        %2854 = vmatprep.subr.bf16.mxu0 0
        %2855 = vmatpush1.bf16.xpose.msra.mxu0 0
        %2856 = vmatprep.subr.bf16.mxu0 0
        %2857 = vmatpush1.bf16.xpose.msra.mxu0 0
        %2858 = vmatprep.subr.bf16.mxu0 0
        %2859 = vmatpush1.bf16.xpose.msra.mxu0 0
        %2860 = vmatprep.subr.bf16.mxu0 0
        %2861 = vmatpush1.bf16.xpose.msra.mxu0 0
        %2862 = vmatprep.subr.bf16.mxu0 0
        %2863 = vmatpush1.bf16.xpose.msra.mxu0 0
        %2864 = vmatprep.subr.bf16.mxu0 0
        %2865 = vmatpush1.bf16.xpose.msra.mxu0 0
        %2866 = vmatprep.subr.bf16.mxu0 0
        %2867 = vmatpush1.bf16.xpose.msra.mxu0 0
        %2868 = vmatprep.subr.bf16.mxu0 0
        %2869 = vmatpush1.bf16.xpose.msra.mxu0 0
        %2870 = vmatprep.subr.bf16.mxu0 0
        %2871 = vmatpush1.bf16.xpose.msra.mxu0 0
        %2872 = vmatprep.mubr.bf16.mxu0 0
        %2873 = vmatmul.mubr.bf16.gmra.mrb[0].mxu0 %v2835
        %v2874 = vpop.f32.mrb[0].mxu0
        %v2875 = vadd.f32 0.0, %v2874
        %v2876 = vpop.f32.mrb[0].mxu0
        %v2877 = vpop.f32.mrb[0].mxu0
        %v2878 = vpop.f32.mrb[0].mxu0
        %2879 = vdwg.mxu0
        %v2880 = vpack.c.bf16 %v2875, %v2875
        %v2882 = vsel %vm355, %v2880, 0
        %v2885 = vsel %vm359, %v1877, 0
        %2887 = vmatprep.subr.bf16.mxu0 0
        %2888 = vmatpush1.bf16.msra.mxu0 %v2885
        %2889 = vmatprep.subr.bf16.mxu0 0
        %2890 = vmatpush1.bf16.msra.mxu0 0
        %2891 = vmatprep.subr.bf16.mxu0 0
        %2892 = vmatpush1.bf16.msra.mxu0 0
        %2893 = vmatprep.subr.bf16.mxu0 0
        %2894 = vmatpush1.bf16.msra.mxu0 0
        %2895 = vmatprep.subr.bf16.mxu0 0
        %2896 = vmatpush1.bf16.msra.mxu0 0
        %2897 = vmatprep.subr.bf16.mxu0 0
        %2898 = vmatpush1.bf16.msra.mxu0 0
        %2899 = vmatprep.subr.bf16.mxu0 0
        %2900 = vmatpush1.bf16.msra.mxu0 0
        %2901 = vmatprep.subr.bf16.mxu0 0
        %2902 = vmatpush1.bf16.msra.mxu0 0
        %2903 = vmatprep.subr.bf16.mxu0 0
        %2904 = vmatpush1.bf16.msra.mxu0 0
        %2905 = vmatprep.subr.bf16.mxu0 0
        %2906 = vmatpush1.bf16.msra.mxu0 0
        %2907 = vmatprep.subr.bf16.mxu0 0
        %2908 = vmatpush1.bf16.msra.mxu0 0
        %2909 = vmatprep.subr.bf16.mxu0 0
        %2910 = vmatpush1.bf16.msra.mxu0 0
        %2911 = vmatprep.subr.bf16.mxu0 0
        %2912 = vmatpush1.bf16.msra.mxu0 0
        %2913 = vmatprep.subr.bf16.mxu0 0
        %2914 = vmatpush1.bf16.msra.mxu0 0
        %2915 = vmatprep.subr.bf16.mxu0 0
        %2916 = vmatpush1.bf16.msra.mxu0 0
        %2917 = vmatprep.subr.bf16.mxu0 0
        %2918 = vmatpush1.bf16.msra.mxu0 0
        %2919 = vmatprep.mubr.bf16.mxu0 0
        %2920 = vmatmul.mubr.bf16.gmra.mrb[0].mxu0 %v2882
        %v2921 = vpop.f32.mrb[0].mxu0
        %v2922 = vadd.f32 0.0, %v2921
        %v2923 = vpop.f32.mrb[0].mxu0
        %v2924 = vpop.f32.mrb[0].mxu0
        %v2925 = vpop.f32.mrb[0].mxu0
        %2926 = vdwg.mxu0
        %v2927 = vadd.f32 %v2589, %v2922
        %s2928 = scalar_lea.vmem [#allocation7], 36
        %v2929 = vld [vmem:[%s2928] sm:$0xf]
        %2930 = vrot.lane.b32.xlu0 %v1924, 104
        %v2931 = vpop.permute.xlu0 %2930
        %v2933 = vsel %vm355, %v2931, 0
        %v2936 = vsel %vm359, %v2929, 0
        %2938 = vmatprep.subr.bf16.mxu0 0
        %2939 = vmatpush1.bf16.msra.mxu0 %v2936
        %2940 = vmatprep.subr.bf16.mxu0 0
        %2941 = vmatpush1.bf16.msra.mxu0 0
        %2942 = vmatprep.subr.bf16.mxu0 0
        %2943 = vmatpush1.bf16.msra.mxu0 0
        %2944 = vmatprep.subr.bf16.mxu0 0
        %2945 = vmatpush1.bf16.msra.mxu0 0
        %2946 = vmatprep.subr.bf16.mxu0 0
        %2947 = vmatpush1.bf16.msra.mxu0 0
        %2948 = vmatprep.subr.bf16.mxu0 0
        %2949 = vmatpush1.bf16.msra.mxu0 0
        %2950 = vmatprep.subr.bf16.mxu0 0
        %2951 = vmatpush1.bf16.msra.mxu0 0
        %2952 = vmatprep.subr.bf16.mxu0 0
        %2953 = vmatpush1.bf16.msra.mxu0 0
        %2954 = vmatprep.subr.bf16.mxu0 0
        %2955 = vmatpush1.bf16.msra.mxu0 0
        %2956 = vmatprep.subr.bf16.mxu0 0
        %2957 = vmatpush1.bf16.msra.mxu0 0
        %2958 = vmatprep.subr.bf16.mxu0 0
        %2959 = vmatpush1.bf16.msra.mxu0 0
        %2960 = vmatprep.subr.bf16.mxu0 0
        %2961 = vmatpush1.bf16.msra.mxu0 0
        %2962 = vmatprep.subr.bf16.mxu0 0
        %2963 = vmatpush1.bf16.msra.mxu0 0
        %2964 = vmatprep.subr.bf16.mxu0 0
        %2965 = vmatpush1.bf16.msra.mxu0 0
        %2966 = vmatprep.subr.bf16.mxu0 0
        %2967 = vmatpush1.bf16.msra.mxu0 0
        %2968 = vmatprep.subr.bf16.mxu0 0
        %2969 = vmatpush1.bf16.msra.mxu0 0
        %2970 = vmatprep.mubr.bf16.mxu0 0
        %2971 = vmatmul.mubr.bf16.gmra.mrb[0].mxu0 %v2933
        %v2972 = vpop.f32.mrb[0].mxu0
        %v2973 = vadd.f32 0.0, %v2972
        %v2974 = vpop.f32.mrb[0].mxu0
        %v2975 = vpop.f32.mrb[0].mxu0
        %v2976 = vpop.f32.mrb[0].mxu0
        %2977 = vdwg.mxu0
        %2978 = vrot.lane.b32.xlu0 %v1971, 104
        %v2979 = vpop.permute.xlu0 %2978
        %v2981 = vsel %vm355, %v2979, 0
        %2983 = vmatprep.subr.bf16.mxu0 0
        %2984 = vmatpush1.bf16.msra.mxu0 %v1976
        %2985 = vmatprep.subr.bf16.mxu0 0
        %2986 = vmatpush1.bf16.msra.mxu0 0
        %2987 = vmatprep.subr.bf16.mxu0 0
        %2988 = vmatpush1.bf16.msra.mxu0 0
        %2989 = vmatprep.subr.bf16.mxu0 0
        %2990 = vmatpush1.bf16.msra.mxu0 0
        %2991 = vmatprep.subr.bf16.mxu0 0
        %2992 = vmatpush1.bf16.msra.mxu0 0
        %2993 = vmatprep.subr.bf16.mxu0 0
        %2994 = vmatpush1.bf16.msra.mxu0 0
        %2995 = vmatprep.subr.bf16.mxu0 0
        %2996 = vmatpush1.bf16.msra.mxu0 0
        %2997 = vmatprep.subr.bf16.mxu0 0
        %2998 = vmatpush1.bf16.msra.mxu0 0
        %2999 = vmatprep.subr.bf16.mxu0 0
        %3000 = vmatpush1.bf16.msra.mxu0 0
        %3001 = vmatprep.subr.bf16.mxu0 0
        %3002 = vmatpush1.bf16.msra.mxu0 0
        %3003 = vmatprep.subr.bf16.mxu0 0
        %3004 = vmatpush1.bf16.msra.mxu0 0
        %3005 = vmatprep.subr.bf16.mxu0 0
        %3006 = vmatpush1.bf16.msra.mxu0 0
        %3007 = vmatprep.subr.bf16.mxu0 0
        %3008 = vmatpush1.bf16.msra.mxu0 0
        %3009 = vmatprep.subr.bf16.mxu0 0
        %3010 = vmatpush1.bf16.msra.mxu0 0
        %3011 = vmatprep.subr.bf16.mxu0 0
        %3012 = vmatpush1.bf16.msra.mxu0 0
        %3013 = vmatprep.subr.bf16.mxu0 0
        %3014 = vmatpush1.bf16.msra.mxu0 0
        %3015 = vmatprep.mubr.bf16.mxu0 0
        %3016 = vmatmul.mubr.bf16.gmra.mrb[0].mxu0 %v2981
        %v3017 = vpop.f32.mrb[0].mxu0
        %v3018 = vadd.f32 0.0, %v3017
        %v3019 = vpop.f32.mrb[0].mxu0
        %v3020 = vpop.f32.mrb[0].mxu0
        %v3021 = vpop.f32.mrb[0].mxu0
        %3022 = vdwg.mxu0
        %3023 = vmatprep.subr.bf16.mxu0 0
        %3024 = vmatpush1.bf16.msra.mxu0 %v2019
        %3025 = vmatprep.subr.bf16.mxu0 0
        %3026 = vmatpush1.bf16.msra.mxu0 0
        %3027 = vmatprep.subr.bf16.mxu0 0
        %3028 = vmatpush1.bf16.msra.mxu0 0
        %3029 = vmatprep.subr.bf16.mxu0 0
        %3030 = vmatpush1.bf16.msra.mxu0 0
        %3031 = vmatprep.subr.bf16.mxu0 0
        %3032 = vmatpush1.bf16.msra.mxu0 0
        %3033 = vmatprep.subr.bf16.mxu0 0
        %3034 = vmatpush1.bf16.msra.mxu0 0
        %3035 = vmatprep.subr.bf16.mxu0 0
        %3036 = vmatpush1.bf16.msra.mxu0 0
        %3037 = vmatprep.subr.bf16.mxu0 0
        %3038 = vmatpush1.bf16.msra.mxu0 0
        %3039 = vmatprep.subr.bf16.mxu0 0
        %3040 = vmatpush1.bf16.msra.mxu0 0
        %3041 = vmatprep.subr.bf16.mxu0 0
        %3042 = vmatpush1.bf16.msra.mxu0 0
        %3043 = vmatprep.subr.bf16.mxu0 0
        %3044 = vmatpush1.bf16.msra.mxu0 0
        %3045 = vmatprep.subr.bf16.mxu0 0
        %3046 = vmatpush1.bf16.msra.mxu0 0
        %3047 = vmatprep.subr.bf16.mxu0 0
        %3048 = vmatpush1.bf16.msra.mxu0 0
        %3049 = vmatprep.subr.bf16.mxu0 0
        %3050 = vmatpush1.bf16.msra.mxu0 0
        %3051 = vmatprep.subr.bf16.mxu0 0
        %3052 = vmatpush1.bf16.msra.mxu0 0
        %3053 = vmatprep.subr.bf16.mxu0 0
        %3054 = vmatpush1.bf16.msra.mxu0 0
        %3055 = vmatprep.mubr.bf16.mxu0 0
        %3056 = vmatmul.mubr.bf16.gmra.mrb[0].mxu0 %v2981
        %v3057 = vpop.f32.mrb[0].mxu0
        %v3058 = vadd.f32 0.0, %v3057
        %v3059 = vpop.f32.mrb[0].mxu0
        %v3060 = vpop.f32.mrb[0].mxu0
        %v3061 = vpop.f32.mrb[0].mxu0
        %3062 = vdwg.mxu0
        %v3063 = vpack.c.bf16 %v2973, %v2973
        %v3064 = vpack.c.bf16 %v3018, %v3018
        %3065 = vxpose.xlu0.c.b16.start [1/8] %v3063, 128
        %3066 = vxpose.xlu0.c.b16.cont [2/8] 0, 128
        %3067 = vxpose.xlu0.c.b16.cont [3/8] 0, 128
        %3068 = vxpose.xlu0.c.b16.cont [4/8] 0, 128
        %3069 = vxpose.xlu0.c.b16.cont [5/8] 0, 128
        %3070 = vxpose.xlu0.c.b16.cont [6/8] 0, 128
        %3071 = vxpose.xlu0.c.b16.cont [7/8] 0, 128
        %3072 = vxpose.xlu0.c.b16.end [8/8] 0, 128
        %v3073 = vpop.trf.xlu0
        %v3074 = vpop.trf.xlu0
        %v3075 = vpop.trf.xlu0
        %v3076 = vpop.trf.xlu0
        %v3077 = vpop.trf.xlu0
        %v3078 = vpop.trf.xlu0
        %v3079 = vpop.trf.xlu0
        %v3080 = vpop.trf.xlu0
        %v3082 = vsel %vm355, %v3073, 0
        %v3085 = vsel %vm359, %v3064, 0
        %3087 = vmatprep.subr.bf16.mxu0 0
        %3088 = vmatpush1.bf16.msra.mxu0 %v3085
        %3089 = vmatprep.subr.bf16.mxu0 0
        %3090 = vmatpush1.bf16.msra.mxu0 0
        %3091 = vmatprep.subr.bf16.mxu0 0
        %3092 = vmatpush1.bf16.msra.mxu0 0
        %3093 = vmatprep.subr.bf16.mxu0 0
        %3094 = vmatpush1.bf16.msra.mxu0 0
        %3095 = vmatprep.subr.bf16.mxu0 0
        %3096 = vmatpush1.bf16.msra.mxu0 0
        %3097 = vmatprep.subr.bf16.mxu0 0
        %3098 = vmatpush1.bf16.msra.mxu0 0
        %3099 = vmatprep.subr.bf16.mxu0 0
        %3100 = vmatpush1.bf16.msra.mxu0 0
        %3101 = vmatprep.subr.bf16.mxu0 0
        %3102 = vmatpush1.bf16.msra.mxu0 0
        %3103 = vmatprep.subr.bf16.mxu0 0
        %3104 = vmatpush1.bf16.msra.mxu0 0
        %3105 = vmatprep.subr.bf16.mxu0 0
        %3106 = vmatpush1.bf16.msra.mxu0 0
        %3107 = vmatprep.subr.bf16.mxu0 0
        %3108 = vmatpush1.bf16.msra.mxu0 0
        %3109 = vmatprep.subr.bf16.mxu0 0
        %3110 = vmatpush1.bf16.msra.mxu0 0
        %3111 = vmatprep.subr.bf16.mxu0 0
        %3112 = vmatpush1.bf16.msra.mxu0 0
        %3113 = vmatprep.subr.bf16.mxu0 0
        %3114 = vmatpush1.bf16.msra.mxu0 0
        %3115 = vmatprep.subr.bf16.mxu0 0
        %3116 = vmatpush1.bf16.msra.mxu0 0
        %3117 = vmatprep.subr.bf16.mxu0 0
        %3118 = vmatpush1.bf16.msra.mxu0 0
        %3119 = vmatprep.mubr.bf16.mxu0 0
        %3120 = vmatmul.mubr.bf16.gmra.mrb[0].mxu0 %v3082
        %v3121 = vpop.f32.mrb[0].mxu0
        %v3122 = vadd.f32 0.0, %v3121
        %v3123 = vpop.f32.mrb[0].mxu0
        %v3124 = vpop.f32.mrb[0].mxu0
        %v3125 = vpop.f32.mrb[0].mxu0
        %3126 = vdwg.mxu0
        %v3127 = vmul.f32 %v3122, 0.17677669
        %v3128 = vsel %vm355, %v3127, 0.0
        %3129 = vadd.xlane.f32.xlu0 %v3128
        %v3130 = vpop.xlane.xlu0 %3129
        %v3131 = vrot.slane %v3130, 4
        %v3132 = vadd.f32 %v3130, %v3131
        %v3133 = vrot.slane %v3132, 2
        %v3134 = vadd.f32 %v3132, %v3133
        %v3135 = vrot.slane %v3134, 1
        %v3136 = vadd.f32 %v3134, %v3135
        %s3137 = vtos %v3136
        %v3138 = vstv %s3137
        %v3139 = vmul.f32 %v3138, %v569
        %v3140 = vsub.f32 %v3127, %v3139
        %v3141 = vmul.f32 %v3140, %v3140
        %v3142 = vsel %vm355, %v3141, 0.0
        %3143 = vadd.xlane.f32.xlu0 %v3142
        %v3144 = vpop.xlane.xlu0 %3143
        %v3145 = vrot.slane %v3144, 4
        %v3146 = vadd.f32 %v3144, %v3145
        %v3147 = vrot.slane %v3146, 2
        %v3148 = vadd.f32 %v3146, %v3147
        %v3149 = vrot.slane %v3148, 1
        %v3150 = vadd.f32 %v3148, %v3149
        %s3151 = vtos %v3150
        %v3152 = vstv %s3151
        %v3153 = vmul.f32 %v3152, %v569
        %v3154 = vadd.f32 %v3153, 1e-05
        %v3155 = vrsqrt.pop %v3154
        %v3156 = vmul.f32 %v3140, %v3155
        %v3157 = vmul.f32 %v3156, 1.442695
        %v3158 = vpow.pop %v3157
        %v3159 = vsel %vm355, %v3158, 0.0
        %3160 = vadd.xlane.f32.xlu0 %v3159
        %v3161 = vpop.xlane.xlu0 %3160
        %v3162 = vrcp.pop %v3161
        %v3163 = vmul.f32 %v3158, %v3162
        %v3164 = vmul.f32 %v3163, 0.25
        %v3165 = vadd.f32 %v2831, %v3164
        %v3166 = vpack.c.bf16 %v3058, %v3058
        %v3167 = vpack.c.bf16 %v3163, %v3163
        %v3169 = vsel %vm355, %v3166, 0
        %v3172 = vsel %vm355, %v3167, 0
        %3174 = vmatprep.subr.bf16.mxu0 0
        %3175 = vmatpush1.bf16.xpose.msra.mxu0 %v3172
        %3176 = vmatprep.subr.bf16.mxu0 0
        %3177 = vmatpush1.bf16.xpose.msra.mxu0 0
        %3178 = vmatprep.subr.bf16.mxu0 0
        %3179 = vmatpush1.bf16.xpose.msra.mxu0 0
        %3180 = vmatprep.subr.bf16.mxu0 0
        %3181 = vmatpush1.bf16.xpose.msra.mxu0 0
        %3182 = vmatprep.subr.bf16.mxu0 0
        %3183 = vmatpush1.bf16.xpose.msra.mxu0 0
        %3184 = vmatprep.subr.bf16.mxu0 0
        %3185 = vmatpush1.bf16.xpose.msra.mxu0 0
        %3186 = vmatprep.subr.bf16.mxu0 0
        %3187 = vmatpush1.bf16.xpose.msra.mxu0 0
        %3188 = vmatprep.subr.bf16.mxu0 0
        %3189 = vmatpush1.bf16.xpose.msra.mxu0 0
        %3190 = vmatprep.subr.bf16.mxu0 0
        %3191 = vmatpush1.bf16.xpose.msra.mxu0 0
        %3192 = vmatprep.subr.bf16.mxu0 0
        %3193 = vmatpush1.bf16.xpose.msra.mxu0 0
        %3194 = vmatprep.subr.bf16.mxu0 0
        %3195 = vmatpush1.bf16.xpose.msra.mxu0 0
        %3196 = vmatprep.subr.bf16.mxu0 0
        %3197 = vmatpush1.bf16.xpose.msra.mxu0 0
        %3198 = vmatprep.subr.bf16.mxu0 0
        %3199 = vmatpush1.bf16.xpose.msra.mxu0 0
        %3200 = vmatprep.subr.bf16.mxu0 0
        %3201 = vmatpush1.bf16.xpose.msra.mxu0 0
        %3202 = vmatprep.subr.bf16.mxu0 0
        %3203 = vmatpush1.bf16.xpose.msra.mxu0 0
        %3204 = vmatprep.subr.bf16.mxu0 0
        %3205 = vmatpush1.bf16.xpose.msra.mxu0 0
        %3206 = vmatprep.mubr.bf16.mxu0 0
        %3207 = vmatmul.mubr.bf16.gmra.mrb[0].mxu0 %v3169
        %v3208 = vpop.f32.mrb[0].mxu0
        %v3209 = vadd.f32 0.0, %v3208
        %v3210 = vpop.f32.mrb[0].mxu0
        %v3211 = vpop.f32.mrb[0].mxu0
        %v3212 = vpop.f32.mrb[0].mxu0
        %3213 = vdwg.mxu0
        %v3214 = vpack.c.bf16 %v3209, %v3209
        %v3216 = vsel %vm355, %v3214, 0
        %v3219 = vsel %vm359, %v1878, 0
        %3221 = vmatprep.subr.bf16.mxu0 0
        %3222 = vmatpush1.bf16.msra.mxu0 %v3219
        %3223 = vmatprep.subr.bf16.mxu0 0
        %3224 = vmatpush1.bf16.msra.mxu0 0
        %3225 = vmatprep.subr.bf16.mxu0 0
        %3226 = vmatpush1.bf16.msra.mxu0 0
        %3227 = vmatprep.subr.bf16.mxu0 0
        %3228 = vmatpush1.bf16.msra.mxu0 0
        %3229 = vmatprep.subr.bf16.mxu0 0
        %3230 = vmatpush1.bf16.msra.mxu0 0
        %3231 = vmatprep.subr.bf16.mxu0 0
        %3232 = vmatpush1.bf16.msra.mxu0 0
        %3233 = vmatprep.subr.bf16.mxu0 0
        %3234 = vmatpush1.bf16.msra.mxu0 0
        %3235 = vmatprep.subr.bf16.mxu0 0
        %3236 = vmatpush1.bf16.msra.mxu0 0
        %3237 = vmatprep.subr.bf16.mxu0 0
        %3238 = vmatpush1.bf16.msra.mxu0 0
        %3239 = vmatprep.subr.bf16.mxu0 0
        %3240 = vmatpush1.bf16.msra.mxu0 0
        %3241 = vmatprep.subr.bf16.mxu0 0
        %3242 = vmatpush1.bf16.msra.mxu0 0
        %3243 = vmatprep.subr.bf16.mxu0 0
        %3244 = vmatpush1.bf16.msra.mxu0 0
        %3245 = vmatprep.subr.bf16.mxu0 0
        %3246 = vmatpush1.bf16.msra.mxu0 0
        %3247 = vmatprep.subr.bf16.mxu0 0
        %3248 = vmatpush1.bf16.msra.mxu0 0
        %3249 = vmatprep.subr.bf16.mxu0 0
        %3250 = vmatpush1.bf16.msra.mxu0 0
        %3251 = vmatprep.subr.bf16.mxu0 0
        %3252 = vmatpush1.bf16.msra.mxu0 0
        %3253 = vmatprep.mubr.bf16.mxu0 0
        %3254 = vmatmul.mubr.bf16.gmra.mrb[0].mxu0 %v3216
        %v3255 = vpop.f32.mrb[0].mxu0
        %v3256 = vadd.f32 0.0, %v3255
        %v3257 = vpop.f32.mrb[0].mxu0
        %v3258 = vpop.f32.mrb[0].mxu0
        %v3259 = vpop.f32.mrb[0].mxu0
        %3260 = vdwg.mxu0
        %v3261 = vadd.f32 %v2927, %v3256
        %s3262 = scalar_lea.vmem %s296, 8
        %3263 = vst.msk [vmem:[%s3262] sm:$0xff] %vm355, %v3165
        %v3264 = vadd.f32 %v1868, %v3261
        %v3265 = vsel %vm318, %v3264, 0.0
        %3266 = vadd.xlane.f32.xlu0 %v3265
        %v3267 = vpop.xlane.xlu0 %3266
        %v3268 = vmul.f32 %v3267, %v322
        %v3269 = vsub.f32 %v3264, %v3268
        %v3270 = vmul.f32 %v3269, %v3269
        %v3271 = vsel %vm318, %v3270, 0.0
        %3272 = vadd.xlane.f32.xlu0 %v3271
        %v3273 = vpop.xlane.xlu0 %3272
        %v3274 = vmul.f32 %v3273, %v322
        %v3275 = vadd.f32 %v3274, 1e-06
        %v3276 = vrsqrt.pop %v3275
        %v3277 = vmul.f32 %v3269, %v3276
        %v3278 = vlaneseq
        %v3279 = vshrl.u32 %v3278, 7
        %v3280 = vsub.s32 4, %v3279
        %v3281 = vrot.slane %v1869, %v3280
        %v3282 = vmul.f32 %v3277, %v3281
        %v3283 = vlaneseq
        %v3284 = vshrl.u32 %v3283, 7
        %v3285 = vsub.s32 5, %v3284
        %v3286 = vrot.slane %v1869, %v3285
        %v3287 = vadd.f32 %v3282, %v3286
        %v3288 = vpack.c.bf16 %v3287, %v3287
        %v3289 = vlaneseq
        %v3290 = vshrl.u32 %v3289, 7
        %v3291 = vsub.s32 6, %v3290
        %v3292 = vrot.slane %v1869, %v3291
        %v3297 = vunpack.c.l.b16 %v1880
        %v3298 = vunpack.c.l.b16 %v1881
        %v3299 = vunpack.c.l.b16 %v1882
        %v3300 = vunpack.c.l.b16 %v1883
        %v3301 = vpack.c.b16 %v3298, %v3297
        %v3302 = vpack.c.b16 %v3300, %v3299
        %v3306 = vsel %vm318, %v3288, 0
        %3308 = vmatprep.subr.bf16.mxu0 0
        %3309 = vmatpush1.bf16.msra.mxu0 %v3301
        %3310 = vmatprep.subr.bf16.mxu0 0
        %3311 = vmatpush1.bf16.msra.mxu0 %v3302
        %3312 = vmatprep.subr.bf16.mxu0 0
        %3313 = vmatpush1.bf16.msra.mxu0 0
        %3314 = vmatprep.subr.bf16.mxu0 0
        %3315 = vmatpush1.bf16.msra.mxu0 0
        %3316 = vmatprep.subr.bf16.mxu0 0
        %3317 = vmatpush1.bf16.msra.mxu0 0
        %3318 = vmatprep.subr.bf16.mxu0 0
        %3319 = vmatpush1.bf16.msra.mxu0 0
        %3320 = vmatprep.subr.bf16.mxu0 0
        %3321 = vmatpush1.bf16.msra.mxu0 0
        %3322 = vmatprep.subr.bf16.mxu0 0
        %3323 = vmatpush1.bf16.msra.mxu0 0
        %3324 = vmatprep.subr.bf16.mxu0 0
        %3325 = vmatpush1.bf16.msra.mxu0 0
        %3326 = vmatprep.subr.bf16.mxu0 0
        %3327 = vmatpush1.bf16.msra.mxu0 0
        %3328 = vmatprep.subr.bf16.mxu0 0
        %3329 = vmatpush1.bf16.msra.mxu0 0
        %3330 = vmatprep.subr.bf16.mxu0 0
        %3331 = vmatpush1.bf16.msra.mxu0 0
        %3332 = vmatprep.subr.bf16.mxu0 0
        %3333 = vmatpush1.bf16.msra.mxu0 0
        %3334 = vmatprep.subr.bf16.mxu0 0
        %3335 = vmatpush1.bf16.msra.mxu0 0
        %3336 = vmatprep.subr.bf16.mxu0 0
        %3337 = vmatpush1.bf16.msra.mxu0 0
        %3338 = vmatprep.subr.bf16.mxu0 0
        %3339 = vmatpush1.bf16.msra.mxu0 0
        %3340 = vmatprep.mubr.bf16.mxu0 0
        %3341 = vmatmul.mubr.bf16.gmra.mrb[0].mxu0 %v3306
        %v3342 = vpop.f32.mrb[0].mxu0
        %v3343 = vadd.f32 %v3292, %v3342
        %v3344 = vpop.f32.mrb[0].mxu0
        %v3345 = vpop.f32.mrb[0].mxu0
        %v3346 = vpop.f32.mrb[0].mxu0
        %3347 = vdwg.mxu0
        %v3348 = vmul.f32 %v3343, 0.5
        %v3349 = vmul.f32 %v3343, 0.70710677
        %v3350 = vand.u32 2147483647, %v3349
        %v3351 = vmul.f32 %v3350, 0.3275911
        %v3352 = vadd.f32 %v3351, 1.0
        %v3353 = vrcp.pop %v3352
        %v3354 = vmul.f32 1.0, %v3353
        %v3355 = vmul.f32 %v3354, 1.0614054
        %v3356 = vadd.f32 %v3355, -1.4531521
        %v3357 = vmul.f32 %v3356, %v3354
        %v3358 = vadd.f32 %v3357, 1.4214138
        %v3359 = vmul.f32 %v3358, %v3354
        %v3360 = vadd.f32 %v3359, -0.28449672
        %v3361 = vmul.f32 %v3360, %v3354
        %v3362 = vadd.f32 %v3361, 0.2548296
        %v3363 = vmul.f32 %v3362, %v3354
        %v3364 = vsub.f32 0.0, %v3350
        %v3365 = vmul.f32 %v3364, %v3350
        %v3366 = vmul.f32 %v3365, 1.442695
        %v3367 = vpow.pop %v3366
        %v3368 = vmul.f32 %v3363, %v3367
        %v3369 = vsub.f32 1.0, %v3368
        %vm3370 = vcmp.ge.f32.partialorder %v3349, 0.0
        %v3371 = vsub.f32 0.0, %v3369
        %v3372 = vsel %vm3370, %v3369, %v3371
        %v3373 = vadd.f32 %v3372, 1.0
        %v3374 = vmul.f32 %v3348, %v3373
        %v3375 = vpack.c.bf16 %v3374, %v3374
        %v3380 = vunpack.c.l.b16 %v1885
        %v3381 = vunpack.c.l.b16 %v1886
        %v3382 = vunpack.c.l.b16 %v1887
        %v3383 = vunpack.c.l.b16 %v1888
        %v3384 = vpack.c.b16 %v3381, %v3380
        %v3385 = vpack.c.b16 %v3383, %v3382
        %v3389 = vsel %vm318, %v3375, 0
        %3391 = vmatprep.subr.bf16.mxu0 0
        %3392 = vmatpush1.bf16.msra.mxu0 %v3384
        %3393 = vmatprep.subr.bf16.mxu0 0
        %3394 = vmatpush1.bf16.msra.mxu0 %v3385
        %3395 = vmatprep.subr.bf16.mxu0 0
        %3396 = vmatpush1.bf16.msra.mxu0 0
        %3397 = vmatprep.subr.bf16.mxu0 0
        %3398 = vmatpush1.bf16.msra.mxu0 0
        %3399 = vmatprep.subr.bf16.mxu0 0
        %3400 = vmatpush1.bf16.msra.mxu0 0
        %3401 = vmatprep.subr.bf16.mxu0 0
        %3402 = vmatpush1.bf16.msra.mxu0 0
        %3403 = vmatprep.subr.bf16.mxu0 0
        %3404 = vmatpush1.bf16.msra.mxu0 0
        %3405 = vmatprep.subr.bf16.mxu0 0
        %3406 = vmatpush1.bf16.msra.mxu0 0
        %3407 = vmatprep.subr.bf16.mxu0 0
        %3408 = vmatpush1.bf16.msra.mxu0 0
        %3409 = vmatprep.subr.bf16.mxu0 0
        %3410 = vmatpush1.bf16.msra.mxu0 0
        %3411 = vmatprep.subr.bf16.mxu0 0
        %3412 = vmatpush1.bf16.msra.mxu0 0
        %3413 = vmatprep.subr.bf16.mxu0 0
        %3414 = vmatpush1.bf16.msra.mxu0 0
        %3415 = vmatprep.subr.bf16.mxu0 0
        %3416 = vmatpush1.bf16.msra.mxu0 0
        %3417 = vmatprep.subr.bf16.mxu0 0
        %3418 = vmatpush1.bf16.msra.mxu0 0
        %3419 = vmatprep.subr.bf16.mxu0 0
        %3420 = vmatpush1.bf16.msra.mxu0 0
        %3421 = vmatprep.subr.bf16.mxu0 0
        %3422 = vmatpush1.bf16.msra.mxu0 0
        %3423 = vmatprep.mubr.bf16.mxu0 0
        %3424 = vmatmul.mubr.bf16.gmra.mrb[0].mxu0 %v3389
        %v3425 = vpop.f32.mrb[0].mxu0
        %v3426 = vadd.f32 0.0, %v3425
        %v3427 = vpop.f32.mrb[0].mxu0
        %v3428 = vpop.f32.mrb[0].mxu0
        %v3429 = vpop.f32.mrb[0].mxu0
        %3430 = vdwg.mxu0
        %v3431 = vadd.f32 %v3264, %v3426
        %v3432 = vlaneseq
        %v3433 = vshrl.u32 %v3432, 7
        %v3434 = vsub.s32 7, %v3433
        %v3435 = vrot.slane %v1869, %v3434
        %v3436 = vadd.f32 %v3431, %v3435
        %v3437 = vld [vmem:[#allocation5 + $0x10] sm:$0x3]
        %v3438 = vsel %vm318, %v3436, 0.0
        %3439 = vadd.xlane.f32.xlu0 %v3438
        %v3440 = vpop.xlane.xlu0 %3439
        %v3441 = vmul.f32 %v3440, %v322
        %v3442 = vsub.f32 %v3436, %v3441
        %v3443 = vmul.f32 %v3442, %v3442
        %v3444 = vsel %vm318, %v3443, 0.0
        %3445 = vadd.xlane.f32.xlu0 %v3444
        %v3446 = vpop.xlane.xlu0 %3445
        %v3447 = vmul.f32 %v3446, %v322
        %v3448 = vadd.f32 %v3447, 1e-06
        %v3449 = vrsqrt.pop %v3448
        %v3450 = vmul.f32 %v3442, %v3449
        %v3451 = vlaneseq
        %v3452 = vshrl.u32 %v3451, 7
        %v3453 = vsub.s32 0, %v3452
        %v3454 = vrot.slane %v3437, %v3453
        %v3455 = vmul.f32 %v3450, %v3454
        %v3456 = vlaneseq
        %v3457 = vshrl.u32 %v3456, 7
        %v3458 = vsub.s32 1, %v3457
        %v3459 = vrot.slane %v3437, %v3458
        %v3460 = vadd.f32 %v3455, %v3459
        %3461 = vst.msk [vmem:[%s284] sm:$0xff] %vm318, %v3460
        %s3462 = sand.u32 %s122, 1
        %s3463 = scalar_lea.sflag [#allocation4], %s3462
        %s3464 = sand.u32 %s122, 1
        %s3465 = smul.addr %s3464, 8
        %s3466 = scalar_lea.vmem [#allocation10], %s3465
        %p3467 = scmp.lt.s32.totalorder %s25, 1
        %s3468 = scalar_select %p3467, %s25, 1
        %s3469 = smul.addr %s3468, 2
        %s3470 = smul.addr %s3469, 8
        %s3471 = scalar_lea.vmem %s5, %s3470
        // Predicated region
        $region53: #{run_encoder.1} parent=35 // pred_check
          %p3472 = pneg %p132
        $region54: #{run_encoder.1} parent=35 // pred_check_branch
          %3474 = sbr.rel (%p3472) target = $region56
        $region55: #{run_encoder.1} parent=35 // pred_region
          %s3476 = ssub.s32 128, 128
          %3477 = vsyncadd %s3463, %s3476
          %s3478 = smul.addr %s25, 128
          %s3479 = scalar_lea.hbm %s4, %s3478
          %s3481 = sshll.u32 %s3466, 4
          %s3482 = int_to_ptr.vmem [resolvable:$true] %s3481
          %3484 = dma.vmem_to_hbm [thread:$0]  %s3482, 128, %s3479, %s3463
        $region56: #{run_encoder.1} parent=35 // pred_fallthru
          _
        // Predicated region
        $region57: #{run_encoder.1} parent=35 // pred_check
          %p3485 = pneg %p158
        $region58: #{run_encoder.1} parent=35 // pred_check_branch
          %3487 = sbr.rel (%p3485) target = $region60
        $region59: #{run_encoder.1} parent=35 // pred_region
          _
        $region60: #{run_encoder.1} parent=35 // pred_fallthru
          _
      $region36: #{run_encoder.1} parent=5 // pred_fallthru
        _
      %p3488 = scmp.le.s32.totalorder 2, %s20
      // Predicated region
      $region61: #{run_encoder.1} parent=5 // pred_check
        %p3489 = pneg %p3488
      $region62: #{run_encoder.1} parent=5 // pred_check_branch
        %3491 = sbr.rel (%p3489) target = $region64
      $region63: #{run_encoder.1} parent=5 // pred_region
        %s3492 = ssub.s32 %s20, 2
        // Predicated region
        $region65: #{run_encoder.1} parent=63 // pred_check
          %p3493 = pneg %p138
        $region66: #{run_encoder.1} parent=63 // pred_check_branch
          %3495 = sbr.rel (%p3493) target = $region68
        $region67: #{run_encoder.1} parent=63 // pred_region
          %s3496 = sand.u32 %s123, 1
          %s3497 = scalar_lea.sflag [#allocation4], %s3496
          %s3498 = sand.u32 %s123, 1
          %s3499 = smul.addr %s3498, 8
          %s3500 = scalar_lea.vmem [#allocation10], %s3499
          %3501 = dma.done %s3497, 128
        $region68: #{run_encoder.1} parent=63 // pred_fallthru
          _
        // Predicated region
        $region69: #{run_encoder.1} parent=63 // pred_check
          %p3502 = pneg %p164
        $region70: #{run_encoder.1} parent=63 // pred_check_branch
          %3504 = sbr.rel (%p3502) target = $region72
        $region71: #{run_encoder.1} parent=63 // pred_region
          %p3505 = scmp.lt.s32.totalorder %s26, 1
          %s3506 = scalar_select %p3505, %s26, 1
          %s3507 = smul.addr %s3506, 2
          %s3508 = smul.addr %s3507, 8
          %s3509 = scalar_lea.vmem %s5, %s3508
        $region72: #{run_encoder.1} parent=63 // pred_fallthru
          _
      $region64: #{run_encoder.1} parent=5 // pred_fallthru
        _
    $region6: #{run_encoder.1} parent=1 // loop_footer
      %s24 = sadd.s32 1, %s20
    $region7: #{run_encoder.1} parent=1 // loop_footer_branch
      %19 = sbr.rel target = $region3
    $region8: #{run_encoder.1} parent=1 // loop_exit
      _
    %3510 = vsyncpa [#allocation3], 1
    %s3511 = scalar_lea.sflag [#allocation3], 1
    %3512 = vsyncpa %s3511, 1
    %3513 = vsyncpa [#allocation6], 1
    %3514 = vsyncpa [#allocation9], 1
    %3515 = vsyncpa [#allocation4], 1
    %s3516 = scalar_lea.sflag [#allocation4], 1
    %3517 = vsyncpa %s3516, 1

</llo_original>
